<compile_context>
chip_gen: v7x
topology: tpu7x:2x2x1
jax: 0.10.0
libtpu: 0.0.40
codegen_flags: <defaults>
</compile_context>

<pallas_src>
import functools

import jax
import jax.numpy as jnp
import numpy as np
from jax.experimental import pallas as pl
from jax.experimental.pallas import tpu as pltpu


LANE = 128        # TPU lane width; all stored slabs are padded to this width.
NEG_BIG = 1e30    # additive mask magnitude for non-edges.


def _leaky_relu(x, slope=0.2):
    return jnp.where(x > 0, x, slope * x)


def _elu(x):
    return jnp.where(x > 0, x, jnp.exp(x) - 1.0)


# ---------------------------------------------------------------------------
# 1) Projection kernel:  proj[p, n, :] = h[n, :] @ [ W_p | W_p.al_p | W_p.ar_p | 0 ]
#    Columns 0..HD-1 hold z (all heads), HD..HD+H-1 hold el, HD+H..HD+2H-1 hold er.
# ---------------------------------------------------------------------------
def proj_kernel(h_ref, w_ref, out_ref):
    h = h_ref[...].astype(jnp.bfloat16)                       # bf16 MXU operand
    out_ref[0] = jnp.dot(h, w_ref[0],
                         preferred_element_type=jnp.float32).astype(out_ref.dtype)


def project(h, w_fused, *, tile_n):
    P, fin, _ = w_fused.shape
    n = h.shape[0]
    assert h.shape[1] == fin and n % tile_n == 0
    return pl.pallas_call(
        proj_kernel,
        out_shape=jax.ShapeDtypeStruct((P, n, LANE), jnp.bfloat16),
        grid=(P, n // tile_n),
        in_specs=[
            pl.BlockSpec((tile_n, fin), lambda p, i: (i, 0)),
            pl.BlockSpec((1, fin, LANE), lambda p, i: (p, 0, 0)),
        ],
        out_specs=pl.BlockSpec((1, tile_n, LANE), lambda p, i: (p, i, 0)),
        compiler_params=pltpu.CompilerParams(
            dimension_semantics=("parallel", "parallel")),
    )(h, w_fused)


# ---------------------------------------------------------------------------
# 2) GAT attention kernel: grid = (meta_path, dst_tile, src_tile), online softmax
#    over src tiles.  The SemanticAttention per-path score is accumulated in the
#    epilogue while the output tile is still in VMEM.
# ---------------------------------------------------------------------------
def gat_attn_kernel(adj_ref, pdst_ref, psrc_ref, bias_ref, w1_ref, b1_ref, w2_ref,
                    emb_ref, score_ref,
                    m_scr, l_scr, acc_scr, score_scr,
                    *, num_heads, head_dim):
    H, D = num_heads, head_dim
    HD = H * D
    el_off = HD
    er_off = HD + H
    tw = max(8, ((H + 7) // 8) * 8)          # aligned column width for the el transpose

    i = pl.program_id(1)                     # dst tile
    j = pl.program_id(2)                     # src tile (reduction axis, last)
    n_dst = pl.num_programs(1)
    n_src = pl.num_programs(2)

    # -- init per-dst-tile accumulators ------------------------------------
    @pl.when(j == 0)
    def _():
        m_scr[...] = jnp.full(m_scr.shape, -jnp.inf, jnp.float32)
        l_scr[...] = jnp.zeros(l_scr.shape, jnp.float32)
        acc_scr[...] = jnp.zeros(acc_scr.shape, jnp.float32)

    @pl.when(jnp.logical_and(i == 0, j == 0))
    def _():
        score_scr[...] = jnp.zeros(score_scr.shape, jnp.float32)

    # -- shared per-tile quantities (computed once for ALL heads) ----------
    adj = adj_ref[0].astype(jnp.float32)                      # (Td, Ts) 0/1
    mask_bias = (adj - 1.0) * NEG_BIG                         # 0 on edges, -1e30 off-edge
    er = pdst_ref[0][:, er_off:er_off + H].astype(jnp.float32)            # (Td, H)
    el_t = psrc_ref[0][:, el_off:el_off + tw].astype(jnp.float32).T       # (tw, Ts)

    # -- online-softmax update, heads unrolled (mask/el/er shared) ---------
    for h in range(H):
        e = _leaky_relu(er[:, h:h + 1] + el_t[h:h + 1, :]) + mask_bias    # (Td, Ts)
        m_prev = m_scr[:, h:h + 1]
        m_cur = jnp.maximum(m_prev, jnp.max(e, axis=1, keepdims=True))
        rescale = jnp.exp(m_prev - m_cur)
        prob = jnp.exp(e - m_cur)                                         # fp32 softmax math
        l_scr[:, h:h + 1] = (rescale * l_scr[:, h:h + 1]
                             + jnp.sum(prob, axis=1, keepdims=True))
        z_h = psrc_ref[0][:, h * D:(h + 1) * D]                           # (Ts, D) bf16
        acc_scr[:, h * D:(h + 1) * D] = (
            rescale * acc_scr[:, h * D:(h + 1) * D]
            + jnp.dot(prob.astype(jnp.bfloat16), z_h,
                      preferred_element_type=jnp.float32))
        m_scr[:, h:h + 1] = m_cur

    # -- finalize: normalize, bias, ELU, lane-dense store; fused semantic score
    @pl.when(j == n_src - 1)
    def _():
        td = acc_scr.shape[0]
        outs = [acc_scr[:, h * D:(h + 1) * D]
                * pl.reciprocal(l_scr[:, h:h + 1], approx=True) for h in range(H)]
        outs.append(jnp.zeros((td, LANE - HD), jnp.float32))
        pre = jnp.concatenate(outs, axis=-1) + bias_ref[0]                # (Td, LANE)
        out = _elu(pre)
        emb_ref[0] = out.astype(emb_ref.dtype)

        # fused SemanticAttention score partial: sum_n tanh(out @ W1 + b1) . w2
        t = jnp.tanh(jnp.dot(out.astype(jnp.bfloat16), w1_ref[...],
                             preferred_element_type=jnp.float32) + b1_ref[...])
        part = jnp.sum(t * w2_ref[...], axis=0, keepdims=True)           # (1, LANE)
        score_scr[...] = score_scr[...] + part

        @pl.when(i == n_dst - 1)
        def _():
            score_ref[0] = score_scr[...]


def gat_attention(proj, adj, bias, w1, b1, w2, *, num_heads, head_dim,
                  tile_dst, tile_src):
    P, n, _ = adj.shape
    assert n % tile_dst == 0 and n % tile_src == 0
    HD = num_heads * head_dim
    kernel = functools.partial(gat_attn_kernel, num_heads=num_heads, head_dim=head_dim)
    return pl.pallas_call(
        kernel,
        out_shape=(jax.ShapeDtypeStruct((P, n, LANE), jnp.float32),   # per-path embeddings
                   jax.ShapeDtypeStruct((P, 1, LANE), jnp.float32)),  # per-path score partials
        grid=(P, n // tile_dst, n // tile_src),
        in_specs=[
            pl.BlockSpec((1, tile_dst, tile_src), lambda p, i, j: (p, i, j)),  # adj tile (bf16)
            pl.BlockSpec((1, tile_dst, LANE), lambda p, i, j: (p, i, 0)),      # proj dst rows (er)
            pl.BlockSpec((1, tile_src, LANE), lambda p, i, j: (p, j, 0)),      # proj src rows (el, z)
            pl.BlockSpec((1, 1, LANE), lambda p, i, j: (p, 0, 0)),             # GAT output bias
            pl.BlockSpec((LANE, LANE), lambda p, i, j: (0, 0)),                # semantic W1 (padded)
            pl.BlockSpec((1, LANE), lambda p, i, j: (0, 0)),                   # semantic b1
            pl.BlockSpec((1, LANE), lambda p, i, j: (0, 0)),                   # semantic w2 row
        ],
        out_specs=(
            pl.BlockSpec((1, tile_dst, LANE), lambda p, i, j: (p, i, 0)),      # resident over src
            pl.BlockSpec((1, 1, LANE), lambda p, i, j: (p, 0, 0)),             # resident over dst+src
        ),
        scratch_shapes=[
            pltpu.VMEM((tile_dst, num_heads), jnp.float32),   # running max
            pltpu.VMEM((tile_dst, num_heads), jnp.float32),   # running denom
            pltpu.VMEM((tile_dst, HD), jnp.float32),          # running weighted sum
            pltpu.VMEM((1, LANE), jnp.float32),               # fused semantic-score accumulator
        ],
        compiler_params=pltpu.CompilerParams(
            dimension_semantics=("parallel", "arbitrary", "arbitrary"),
            vmem_limit_bytes=32 * 1024 * 1024),   # re-derive tiles / limit per generation
    )(adj, proj, proj, bias, w1, b1, w2)


# ---------------------------------------------------------------------------
# 3) Path-weighted combine: out[n] = sum_p beta[p] * emb[p, n], gridded over node
#    tiles; beta (P values) comes in through SMEM.
# ---------------------------------------------------------------------------
def combine_kernel(beta_ref, emb_ref, out_ref, *, num_paths):
    acc = beta_ref[0] * emb_ref[0]
    for p in range(1, num_paths):
        acc = acc + beta_ref[p] * emb_ref[p]
    out_ref[...] = acc


def semantic_combine(emb, beta, *, tile_n):
    P, n, _ = emb.shape
    assert n % tile_n == 0
    kernel = functools.partial(combine_kernel, num_paths=P)
    return pl.pallas_call(
        kernel,
        out_shape=jax.ShapeDtypeStruct((n, LANE), jnp.float32),
        grid=(n // tile_n,),
        in_specs=[
            pl.BlockSpec(memory_space=pltpu.MemorySpace.SMEM),          # beta (P,) in SMEM
            pl.BlockSpec((P, tile_n, LANE), lambda i: (0, i, 0)),
        ],
        out_specs=pl.BlockSpec((tile_n, LANE), lambda i: (i, 0)),
        compiler_params=pltpu.CompilerParams(dimension_semantics=("parallel",)),
    )(beta, emb)


# ---------------------------------------------------------------------------
# HANLayer / HAN forward
# ---------------------------------------------------------------------------
def han_layer_forward(h, adj, layer, *, num_heads, head_dim, tile_n):
    n = h.shape[0]
    proj = project(h, layer["w_fused"], tile_n=tile_n)
    emb, score = gat_attention(
        proj, adj, layer["bias_pad"], layer["sem_w1_pad"], layer["sem_b1"],
        layer["sem_w2_row"], num_heads=num_heads, head_dim=head_dim,
        tile_dst=tile_n, tile_src=tile_n)
    # per-path semantic score = mean_n tanh(emb @ W1 + b1) . w2 (lane partials from the kernel)
    w_path = jnp.sum(score[:, 0, :], axis=-1) / n                  # (P,)
    beta = jax.nn.softmax(w_path)                                  # P scalars -> leave to XLA
    return semantic_combine(emb, beta, tile_n=tile_n)              # (N, LANE), cols >= HD are zero


def han_forward(features, adjs, params, *, head_cfg, tile_n):
    h = features[0]
    for layer, (H, D) in zip(params["layers"], head_cfg):
        h = han_layer_forward(h, adjs, layer, num_heads=H, head_dim=D, tile_n=tile_n)
    # final predictor: one small matmul, left to XLA (review: no dedicated pallas_call)
    logits = h @ params["pred_w_pad"] + params["pred_b"]
    return (logits, 1, 2, 3, 4)


# ---------------------------------------------------------------------------
# Parameter init (raw, fp32) and kernel-side preparation (fused / padded / bf16).
# ---------------------------------------------------------------------------
def init_han_params(key, num_paths, in_dim, hid_dim, num_heads_list, num_classes,
                    sem_hidden=LANE):
    assert sem_hidden == LANE, "semantic hidden size is kept lane-dense (torch default 128)"
    layers = []
    in_size = in_dim
    for li, H in enumerate(num_heads_list):
        D = hid_dim
        k = jax.random.fold_in(key, li)
        ks = jax.random.split(k, 6)
        layers.append(dict(
            W=0.1 * jax.random.normal(ks[0], (num_paths, in_size, H * D), jnp.float32),
            al=0.1 * jax.random.normal(ks[1], (num_paths, H, D), jnp.float32),
            ar=0.1 * jax.random.normal(ks[2], (num_paths, H, D), jnp.float32),
            b=0.01 * jax.random.normal(ks[3], (num_paths, H * D), jnp.float32),
            sem_W1=0.1 * jax.random.normal(ks[4], (H * D, sem_hidden), jnp.float32),
            sem_b1=jnp.zeros((sem_hidden,), jnp.float32),
            sem_w2=0.1 * jax.random.normal(ks[5], (sem_hidden,), jnp.float32),
            num_heads=H, head_dim=D,
        ))
        in_size = H * D
    kp = jax.random.fold_in(key, 1000)
    return dict(layers=layers,
                pred_W=0.1 * jax.random.normal(kp, (in_size, num_classes), jnp.float32),
                pred_b=jnp.zeros((num_classes,), jnp.float32))


def prepare_kernel_params(raw, in_dim):
    layers = []
    in_pad = in_dim                       # slab width actually fed to the layer
    for lp in raw["layers"]:
        P, in_size, HD = lp["W"].shape
        H, D = lp["num_heads"], lp["head_dim"]
        assert HD + 2 * H <= LANE and lp["sem_W1"].shape[1] == LANE
        # fold attn_l / attn_r into the projection:  el = h @ (W.al),  er = h @ (W.ar)
        w_r = lp["W"].reshape(P, in_size, H, D)
        hp = jax.lax.Precision.HIGHEST
        wal = jnp.einsum("pfhd,phd->pfh", w_r, lp["al"], precision=hp)
        war = jnp.einsum("pfhd,phd->pfh", w_r, lp["ar"], precision=hp)
        fused = jnp.concatenate(
            [lp["W"], wal, war,
             jnp.zeros((P, in_size, LANE - HD - 2 * H), jnp.float32)], axis=-1)
        if in_pad > in_size:              # zero rows for the lane-padded input slab
            fused = jnp.concatenate(
                [fused, jnp.zeros((P, in_pad - in_size, LANE), jnp.float32)], axis=1)
        bias_pad = jnp.concatenate(
            [lp["b"], jnp.zeros((P, LANE - HD), jnp.float32)], axis=-1)[:, None, :]
        w1_pad = jnp.concatenate(
            [lp["sem_W1"], jnp.zeros((LANE - HD, LANE), jnp.float32)], axis=0)
        layers.append(dict(
            w_fused=fused.astype(jnp.bfloat16),        # bf16 MXU operand
            bias_pad=bias_pad,                         # (P, 1, LANE) f32
            sem_w1_pad=w1_pad.astype(jnp.bfloat16),    # (LANE, LANE) bf16
            sem_b1=lp["sem_b1"][None, :],              # (1, LANE) f32
            sem_w2_row=lp["sem_w2"][None, :],          # (1, LANE) f32
        ))
        in_pad = LANE
    C = raw["pred_W"].shape[1]
    pred_w_pad = jnp.concatenate(
        [raw["pred_W"], jnp.zeros((LANE - raw["pred_W"].shape[0], C), jnp.float32)], axis=0)
    params = dict(layers=layers, pred_w_pad=pred_w_pad, pred_b=raw["pred_b"][None, :])
    head_cfg = tuple((lp["num_heads"], lp["head_dim"]) for lp in raw["layers"])
    return params, head_cfg


# ---------------------------------------------------------------------------
# Pure-JAX fp32 reference (for a loose sanity check).
# ---------------------------------------------------------------------------
def reference_forward(feats, adjs, raw):
    h = feats
    for lp in raw["layers"]:
        P, _, HD = lp["W"].shape
        H, D = lp["num_heads"], lp["head_dim"]
        embs = []
        for p in range(P):
            z = h @ lp["W"][p]
            heads = []
            for hd in range(H):
                z_h = z[:, hd * D:(hd + 1) * D]
                el = z_h @ lp["al"][p, hd]
                er = z_h @ lp["ar"][p, hd]
                e = jnp.where(adjs[p] > 0,
                              jax.nn.leaky_relu(er[:, None] + el[None, :], 0.2),
                              -NEG_BIG)
                a = jax.nn.softmax(e, axis=1)
                heads.append(a @ z_h)
            out = jnp.concatenate(heads, axis=-1) + lp["b"][p][None, :]
            embs.append(jax.nn.elu(out))
        emb = jnp.stack(embs, axis=0)                                   # (P, N, HD)
        w = jnp.mean(jnp.tanh(emb @ lp["sem_W1"] + lp["sem_b1"]) @ lp["sem_w2"], axis=1)
        beta = jax.nn.softmax(w)
        h = jnp.einsum("p,pnf->nf", beta, emb)
    return h @ raw["pred_W"] + raw["pred_b"][None, :]


if __name__ == "__main__":
    key = jax.random.PRNGKey(0)
    N = 256                 # nodes -> 2 dst x 2 src tiles per path (exercises online softmax)
    P = 3                   # meta-paths
    in_dim = 64
    hid_dim = 8
    num_heads = [2, 2]
    num_classes = 4
    TILE = 128

    k_adj, k_feat, k_par = jax.random.split(key, 3)

    # dense 0/1 adjacency adj[p, dst, src]; self-loops guarantee in-degree >= 1
    rand_adj = (jax.random.uniform(k_adj, (P, N, N)) > 0.9).astype(jnp.float32)
    adjs_f32 = jnp.maximum(rand_adj, jnp.eye(N, dtype=jnp.float32)[None])
    adjs = adjs_f32.astype(jnp.bfloat16)        # exact for 0/1; halves adjacency HBM traffic

    feats0 = jax.random.normal(k_feat, (N, in_dim), jnp.float32)

    raw = init_han_params(k_par, P, in_dim, hid_dim, num_heads, num_classes)
    params, head_cfg = prepare_kernel_params(raw, in_dim)

    fwd = jax.jit(functools.partial(han_forward, head_cfg=head_cfg, tile_n=TILE))
    out = fwd([feats0], adjs, params)
    logits = jax.block_until_ready(out[0])

    assert logits.shape == (N, num_classes)
    assert tuple(int(v) for v in out[1:]) == (1, 2, 3, 4)
    assert bool(jnp.all(jnp.isfinite(logits)))

    # loose sanity check vs pure-JAX fp32 reference (kernels feed the MXU in bf16)
    ref = reference_forward(feats0, adjs_f32, raw)
    np.testing.assert_allclose(np.asarray(logits), np.asarray(ref), rtol=3e-2, atol=3e-2)

    print("KERNEL_OK")
</pallas_src>

<mosaic_0001>
module attributes {stable_mosaic.version = 11 : i64} {
  func.func @proj_kernel(%arg0: i32, %arg1: i32, %arg2: memref<128x64xf32, #tpu.memory_space<vmem>>, %arg3: memref<1x64x128xbf16, #tpu.memory_space<vmem>>, %arg4: memref<1x128x128xbf16, #tpu.memory_space<vmem>>) attributes {dimension_semantics = [#tpu.dimension_semantics<parallel>, #tpu.dimension_semantics<parallel>], iteration_bounds = array<i64: 3, 2>, scalar_prefetch = 0 : i64, scratch_operands = 0 : i64, tpu.core_type = #tpu.core_type<tc>, window_params = [{transform_indices = @transform_0, window_bounds = array<i64: 128, 64>}, {transform_indices = @transform_1, window_bounds = array<i64: 1, 64, 128>}, {transform_indices = @transform_2, window_bounds = array<i64: 1, 128, 128>}]} {
    %c0 = arith.constant 0 : index
    %c0_0 = arith.constant 0 : index
    %0 = vector.load %arg2[%c0, %c0_0] : memref<128x64xf32, #tpu.memory_space<vmem>>, vector<128x64xf32>
    %1 = arith.truncf %0 : vector<128x64xf32> to vector<128x64xbf16>
    %c0_1 = arith.constant 0 : index
    %c0_2 = arith.constant 0 : index
    %c0_3 = arith.constant 0 : index
    %2 = vector.load %arg3[%c0_1, %c0_2, %c0_3] : memref<1x64x128xbf16, #tpu.memory_space<vmem>>, vector<1x64x128xbf16>
    %3 = vector.shape_cast %2 : vector<1x64x128xbf16> to vector<64x128xbf16>
    %cst = arith.constant dense<0.000000e+00> : vector<128x128xf32>
    %4 = tpu.matmul %1, %3, %cst {dimension_numbers = #tpu.dot_dimension_numbers<[1], [0], [0], [1], [0, 0, 1, 1], [], []>} : vector<128x64xbf16>, vector<64x128xbf16>, vector<128x128xf32> -> vector<128x128xf32>
    %5 = arith.truncf %4 : vector<128x128xf32> to vector<128x128xbf16>
    %c0_4 = arith.constant 0 : index
    %c0_5 = arith.constant 0 : index
    %c0_6 = arith.constant 0 : index
    %6 = vector.load %arg4[%c0_4, %c0_5, %c0_6] : memref<1x128x128xbf16, #tpu.memory_space<vmem>>, vector<1x128x128xbf16>
    %7 = vector.shape_cast %6 : vector<1x128x128xbf16> to vector<128x128xbf16>
    %8 = vector.shape_cast %5 : vector<128x128xbf16> to vector<1x128x128xbf16>
    tpu.vector_store %arg4[%c0_4, %c0_5, %c0_6], %8 {strides = array<i32>} : memref<1x128x128xbf16, #tpu.memory_space<vmem>>, vector<1x128x128xbf16>,
    return
  }
  func.func @transform_0(%arg0: i32, %arg1: i32) -> (i32, i32) {
    %c0_i32 = arith.constant 0 : i32
    %c0_i32_0 = arith.constant 0 : i32
    return %arg1, %c0_i32 : i32, i32
  }
  func.func @transform_1(%arg0: i32, %arg1: i32) -> (i32, i32, i32) {
    %c0_i32 = arith.constant 0 : i32
    %c0_i32_0 = arith.constant 0 : i32
    %c0_i32_1 = arith.constant 0 : i32
    return %arg0, %c0_i32, %c0_i32_0 : i32, i32, i32
  }
  func.func @transform_2(%arg0: i32, %arg1: i32) -> (i32, i32, i32) {
    %c0_i32 = arith.constant 0 : i32
    %c0_i32_0 = arith.constant 0 : i32
    return %arg0, %arg1, %c0_i32 : i32, i32, i32
  }
}

module attributes {stable_mosaic.version = 11 : i64} {
  func.func @gat_attn_kernel(%arg0: i32, %arg1: i32, %arg2: i32, %arg3: memref<1x128x128xbf16, #tpu.memory_space<vmem>>, %arg4: memref<1x128x128xbf16, #tpu.memory_space<vmem>>, %arg5: memref<1x128x128xbf16, #tpu.memory_space<vmem>>, %arg6: memref<1x1x128xf32, #tpu.memory_space<vmem>>, %arg7: memref<128x128xbf16, #tpu.memory_space<vmem>>, %arg8: memref<1x128xf32, #tpu.memory_space<vmem>>, %arg9: memref<1x128xf32, #tpu.memory_space<vmem>>, %arg10: memref<1x128x128xf32, #tpu.memory_space<vmem>>, %arg11: memref<1x1x128xf32, #tpu.memory_space<vmem>>, %arg12: memref<128x2xf32, #tpu.memory_space<vmem>>, %arg13: memref<128x2xf32, #tpu.memory_space<vmem>>, %arg14: memref<128x16xf32, #tpu.memory_space<vmem>>, %arg15: memref<1x128xf32, #tpu.memory_space<vmem>>) attributes {dimension_semantics = [#tpu.dimension_semantics<parallel>, #tpu.dimension_semantics<arbitrary>, #tpu.dimension_semantics<arbitrary>], iteration_bounds = array<i64: 3, 2, 2>, scalar_prefetch = 0 : i64, scratch_operands = 4 : i64, tpu.core_type = #tpu.core_type<tc>, window_params = [{transform_indices = @transform_0, window_bounds = array<i64: 1, 128, 128>}, {transform_indices = @transform_1, window_bounds = array<i64: 1, 128, 128>}, {transform_indices = @transform_2, window_bounds = array<i64: 1, 128, 128>}, {transform_indices = @transform_3, window_bounds = array<i64: 1, 1, 128>}, {pipeline_mode = #tpu.pipeline_mode<synchronous>, transform_indices = @transform_4, window_bounds = array<i64: 128, 128>}, {pipeline_mode = #tpu.pipeline_mode<synchronous>, transform_indices = @transform_5, window_bounds = array<i64: 1, 128>}, {pipeline_mode = #tpu.pipeline_mode<synchronous>, transform_indices = @transform_6, window_bounds = array<i64: 1, 128>}, {transform_indices = @transform_7, window_bounds = array<i64: 1, 128, 128>}, {transform_indices = @transform_8, window_bounds = array<i64: 1, 1, 128>}]} {
    %c0_i32 = arith.constant 0 : i32
    %0 = arith.cmpi eq, %arg2, %c0_i32 : i32
    %1 = arith.extui %0 : i1 to i32
    %c0_i32_0 = arith.constant 0 : i32
    %2 = arith.cmpi ne, %1, %c0_i32_0 : i32
    scf.if %2 {
      %cst_52 = arith.constant 0xFF800000 : f32
      %101 = vector.broadcast %cst_52 : f32 to vector<128x2xf32>
      %c0_53 = arith.constant 0 : index
      %c0_54 = arith.constant 0 : index
      %102 = vector.load %arg12[%c0_53, %c0_54] : memref<128x2xf32, #tpu.memory_space<vmem>>, vector<128x2xf32>
      tpu.vector_store %arg12[%c0_53, %c0_54], %101 {strides = array<i32>} : memref<128x2xf32, #tpu.memory_space<vmem>>, vector<128x2xf32>,
      %cst_55 = arith.constant 0.000000e+00 : f32
      %103 = vector.broadcast %cst_55 : f32 to vector<128x2xf32>
      %c0_56 = arith.constant 0 : index
      %c0_57 = arith.constant 0 : index
      %104 = vector.load %arg13[%c0_56, %c0_57] : memref<128x2xf32, #tpu.memory_space<vmem>>, vector<128x2xf32>
      tpu.vector_store %arg13[%c0_56, %c0_57], %103 {strides = array<i32>} : memref<128x2xf32, #tpu.memory_space<vmem>>, vector<128x2xf32>,
      %cst_58 = arith.constant 0.000000e+00 : f32
      %105 = vector.broadcast %cst_58 : f32 to vector<128x16xf32>
      %c0_59 = arith.constant 0 : index
      %c0_60 = arith.constant 0 : index
      %106 = vector.load %arg14[%c0_59, %c0_60] : memref<128x16xf32, #tpu.memory_space<vmem>>, vector<128x16xf32>
      tpu.vector_store %arg14[%c0_59, %c0_60], %105 {strides = array<i32>} : memref<128x16xf32, #tpu.memory_space<vmem>>, vector<128x16xf32>,
    } else {
    }
    %c0_i32_1 = arith.constant 0 : i32
    %3 = arith.cmpi eq, %arg1, %c0_i32_1 : i32
    %c0_i32_2 = arith.constant 0 : i32
    %4 = arith.cmpi eq, %arg2, %c0_i32_2 : i32
    %5 = arith.andi %3, %4 : i1
    %6 = arith.extui %5 : i1 to i32
    %c0_i32_3 = arith.constant 0 : i32
    %7 = arith.cmpi ne, %6, %c0_i32_3 : i32
    scf.if %7 {
      %cst_52 = arith.constant 0.000000e+00 : f32
      %101 = vector.broadcast %cst_52 : f32 to vector<1x128xf32>
      %c0_53 = arith.constant 0 : index
      %c0_54 = arith.constant 0 : index
      %102 = vector.load %arg15[%c0_53, %c0_54] : memref<1x128xf32, #tpu.memory_space<vmem>>, vector<1x128xf32>
      tpu.vector_store %arg15[%c0_53, %c0_54], %101 {strides = array<i32>} : memref<1x128xf32, #tpu.memory_space<vmem>>, vector<1x128xf32>,
    } else {
    }
    %c0 = arith.constant 0 : index
    %c0_4 = arith.constant 0 : index
    %c0_5 = arith.constant 0 : index
    %8 = vector.load %arg3[%c0, %c0_4, %c0_5] : memref<1x128x128xbf16, #tpu.memory_space<vmem>>, vector<1x128x128xbf16>
    %9 = vector.shape_cast %8 : vector<1x128x128xbf16> to vector<128x128xbf16>
    %10 = arith.extf %9 : vector<128x128xbf16> to vector<128x128xf32>
    %cst = arith.constant 1.000000e+00 : f32
    %11 = vector.broadcast %cst : f32 to vector<128x128xf32>
    %12 = arith.subf %10, %11 : vector<128x128xf32>
    %cst_6 = arith.constant 1.000000e+30 : f32
    %13 = vector.broadcast %cst_6 : f32 to vector<128x128xf32>
    %14 = arith.mulf %12, %13 : vector<128x128xf32>
    %c0_7 = arith.constant 0 : index
    %c0_8 = arith.constant 0 : index
    %c0_9 = arith.constant 0 : index
    %15 = vector.load %arg4[%c0_7, %c0_8, %c0_9] : memref<1x128x128xbf16, #tpu.memory_space<vmem>>, vector<1x128x128xbf16>
    %16 = vector.shape_cast %15 : vector<1x128x128xbf16> to vector<128x128xbf16>
    %17 = vector.extract_strided_slice %16 {offsets = [0, 18], sizes = [128, 2], strides = [1, 1]} : vector<128x128xbf16> to vector<128x2xbf16>
    %18 = arith.extf %17 : vector<128x2xbf16> to vector<128x2xf32>
    %c0_10 = arith.constant 0 : index
    %c0_11 = arith.constant 0 : index
    %c0_12 = arith.constant 0 : index
    %19 = vector.load %arg5[%c0_10, %c0_11, %c0_12] : memref<1x128x128xbf16, #tpu.memory_space<vmem>>, vector<1x128x128xbf16>
    %20 = vector.shape_cast %19 : vector<1x128x128xbf16> to vector<128x128xbf16>
    %21 = vector.extract_strided_slice %20 {offsets = [0, 16], sizes = [128, 8], strides = [1, 1]} : vector<128x128xbf16> to vector<128x8xbf16>
    %22 = arith.extf %21 : vector<128x8xbf16> to vector<128x8xf32>
    %23 = tpu.transpose %22, [1, 0] : vector<128x8xf32> -> vector<8x128xf32>
    %24 = vector.extract_strided_slice %18 {offsets = [0, 0], sizes = [128, 1], strides = [1, 1]} : vector<128x2xf32> to vector<128x1xf32>
    %25 = vector.extract_strided_slice %23 {offsets = [0, 0], sizes = [1, 128], strides = [1, 1]} : vector<8x128xf32> to vector<1x128xf32>
    %26 = vector.broadcast %24 : vector<128x1xf32> to vector<128x128xf32>
    %27 = vector.broadcast %25 : vector<1x128xf32> to vector<128x128xf32>
    %28 = arith.addf %26, %27 : vector<128x128xf32>
    %cst_13 = arith.constant 0.000000e+00 : f32
    %29 = vector.broadcast %cst_13 : f32 to vector<128x128xf32>
    %30 = arith.cmpf ogt, %28, %29 : vector<128x128xf32>
    %cst_14 = arith.constant 2.000000e-01 : f32
    %31 = vector.broadcast %cst_14 : f32 to vector<128x128xf32>
    %32 = arith.mulf %31, %28 : vector<128x128xf32>
    %33 = arith.select %30, %28, %32 : vector<128x128xi1>, vector<128x128xf32>
    %34 = arith.addf %33, %14 : vector<128x128xf32>
    %c0_15 = arith.constant 0 : index
    %c0_16 = arith.constant 0 : index
    %35 = vector.load %arg12[%c0_15, %c0_16] : memref<128x2xf32, #tpu.memory_space<vmem>>, vector<128x1xf32>
    %cst_17 = arith.constant dense<0xFF800000> : vector<128xf32>
    %36 = vector.multi_reduction <maximumf>, %34, %cst_17 [1] : vector<128x128xf32> to vector<128xf32>
    %37 = vector.shape_cast %36 : vector<128xf32> to vector<128x1xf32>
    %38 = arith.maximumf %35, %37 : vector<128x1xf32>
    %39 = arith.subf %35, %38 : vector<128x1xf32>
    %40 = math.exp %39 : vector<128x1xf32>
    %41 = vector.broadcast %38 : vector<128x1xf32> to vector<128x128xf32>
    %42 = arith.subf %34, %41 : vector<128x128xf32>
    %43 = math.exp %42 : vector<128x128xf32>
    %c0_18 = arith.constant 0 : index
    %c0_19 = arith.constant 0 : index
    %44 = vector.load %arg13[%c0_18, %c0_19] : memref<128x2xf32, #tpu.memory_space<vmem>>, vector<128x1xf32>
    %45 = arith.mulf %40, %44 : vector<128x1xf32>
    %cst_20 = arith.constant dense<0.000000e+00> : vector<128xf32>
    %46 = vector.multi_reduction <add>, %43, %cst_20 [1] : vector<128x128xf32> to vector<128xf32>
    %47 = vector.shape_cast %46 : vector<128xf32> to vector<128x1xf32>
    %48 = arith.addf %45, %47 : vector<128x1xf32>
    %c0_21 = arith.constant 0 : index
    %c0_22 = arith.constant 0 : index
    %49 = vector.load %arg13[%c0_21, %c0_22] : memref<128x2xf32, #tpu.memory_space<vmem>>, vector<128x1xf32>
    tpu.vector_store %arg13[%c0_21, %c0_22], %48 {strides = array<i32>} : memref<128x2xf32, #tpu.memory_space<vmem>>, vector<128x1xf32>,
    %c0_23 = arith.constant 0 : index
    %c0_24 = arith.constant 0 : index
    %c0_25 = arith.constant 0 : index
    %50 = vector.load %arg5[%c0_23, %c0_24, %c0_25] : memref<1x128x128xbf16, #tpu.memory_space<vmem>>, vector<1x128x128xbf16>
    %51 = vector.shape_cast %50 : vector<1x128x128xbf16> to vector<128x128xbf16>
    %52 = vector.extract_strided_slice %51 {offsets = [0, 0], sizes = [128, 8], strides = [1, 1]} : vector<128x128xbf16> to vector<128x8xbf16>
    %c0_26 = arith.constant 0 : index
    %c0_27 = arith.constant 0 : index
    %53 = vector.load %arg14[%c0_26, %c0_27] : memref<128x16xf32, #tpu.memory_space<vmem>>, vector<128x8xf32>
    %54 = vector.broadcast %40 : vector<128x1xf32> to vector<128x8xf32>
    %55 = arith.mulf %54, %53 : vector<128x8xf32>
    %56 = arith.truncf %43 : vector<128x128xf32> to vector<128x128xbf16>
    %cst_28 = arith.constant dense<0.000000e+00> : vector<128x8xf32>
    %57 = tpu.matmul %56, %52, %cst_28 {dimension_numbers = #tpu.dot_dimension_numbers<[1], [0], [0], [1], [0, 0, 1, 1], [], []>} : vector<128x128xbf16>, vector<128x8xbf16>, vector<128x8xf32> -> vector<128x8xf32>
    %58 = arith.addf %55, %57 : vector<128x8xf32>
    %c0_29 = arith.constant 0 : index
    %c0_30 = arith.constant 0 : index
    %59 = vector.load %arg14[%c0_29, %c0_30] : memref<128x16xf32, #tpu.memory_space<vmem>>, vector<128x8xf32>
    tpu.vector_store %arg14[%c0_29, %c0_30], %58 {strides = array<i32>} : memref<128x16xf32, #tpu.memory_space<vmem>>, vector<128x8xf32>,
    %c0_31 = arith.constant 0 : index
    %c0_32 = arith.constant 0 : index
    %60 = vector.load %arg12[%c0_31, %c0_32] : memref<128x2xf32, #tpu.memory_space<vmem>>, vector<128x1xf32>
    tpu.vector_store %arg12[%c0_31, %c0_32], %38 {strides = array<i32>} : memref<128x2xf32, #tpu.memory_space<vmem>>, vector<128x1xf32>,
    %61 = vector.extract_strided_slice %18 {offsets = [0, 1], sizes = [128, 1], strides = [1, 1]} : vector<128x2xf32> to vector<128x1xf32>
    %62 = vector.extract_strided_slice %23 {offsets = [1, 0], sizes = [1, 128], strides = [1, 1]} : vector<8x128xf32> to vector<1x128xf32>
    %63 = vector.broadcast %61 : vector<128x1xf32> to vector<128x128xf32>
    %64 = vector.broadcast %62 : vector<1x128xf32> to vector<128x128xf32>
    %65 = arith.addf %63, %64 : vector<128x128xf32>
    %cst_33 = arith.constant 0.000000e+00 : f32
    %66 = vector.broadcast %cst_33 : f32 to vector<128x128xf32>
    %67 = arith.cmpf ogt, %65, %66 : vector<128x128xf32>
    %cst_34 = arith.constant 2.000000e-01 : f32
    %68 = vector.broadcast %cst_34 : f32 to vector<128x128xf32>
    %69 = arith.mulf %68, %65 : vector<128x128xf32>
    %70 = arith.select %67, %65, %69 : vector<128x128xi1>, vector<128x128xf32>
    %71 = arith.addf %70, %14 : vector<128x128xf32>
    %c0_35 = arith.constant 0 : index
    %c1 = arith.constant 1 : index
    %72 = vector.load %arg12[%c0_35, %c1] : memref<128x2xf32, #tpu.memory_space<vmem>>, vector<128x1xf32>
    %cst_36 = arith.constant dense<0xFF800000> : vector<128xf32>
    %73 = vector.multi_reduction <maximumf>, %71, %cst_36 [1] : vector<128x128xf32> to vector<128xf32>
    %74 = vector.shape_cast %73 : vector<128xf32> to vector<128x1xf32>
    %75 = arith.maximumf %72, %74 : vector<128x1xf32>
    %76 = arith.subf %72, %75 : vector<128x1xf32>
    %77 = math.exp %76 : vector<128x1xf32>
    %78 = vector.broadcast %75 : vector<128x1xf32> to vector<128x128xf32>
    %79 = arith.subf %71, %78 : vector<128x128xf32>
    %80 = math.exp %79 : vector<128x128xf32>
    %c0_37 = arith.constant 0 : index
    %c1_38 = arith.constant 1 : index
    %81 = vector.load %arg13[%c0_37, %c1_38] : memref<128x2xf32, #tpu.memory_space<vmem>>, vector<128x1xf32>
    %82 = arith.mulf %77, %81 : vector<128x1xf32>
    %cst_39 = arith.constant dense<0.000000e+00> : vector<128xf32>
    %83 = vector.multi_reduction <add>, %80, %cst_39 [1] : vector<128x128xf32> to vector<128xf32>
    %84 = vector.shape_cast %83 : vector<128xf32> to vector<128x1xf32>
    %85 = arith.addf %82, %84 : vector<128x1xf32>
    %c0_40 = arith.constant 0 : index
    %c1_41 = arith.constant 1 : index
    %86 = vector.load %arg13[%c0_40, %c1_41] : memref<128x2xf32, #tpu.memory_space<vmem>>, vector<128x1xf32>
    tpu.vector_store %arg13[%c0_40, %c1_41], %85 {strides = array<i32>} : memref<128x2xf32, #tpu.memory_space<vmem>>, vector<128x1xf32>,
    %c0_42 = arith.constant 0 : index
    %c0_43 = arith.constant 0 : index
    %c0_44 = arith.constant 0 : index
    %87 = vector.load %arg5[%c0_42, %c0_43, %c0_44] : memref<1x128x128xbf16, #tpu.memory_space<vmem>>, vector<1x128x128xbf16>
    %88 = vector.shape_cast %87 : vector<1x128x128xbf16> to vector<128x128xbf16>
    %89 = vector.extract_strided_slice %88 {offsets = [0, 8], sizes = [128, 8], strides = [1, 1]} : vector<128x128xbf16> to vector<128x8xbf16>
    %c0_45 = arith.constant 0 : index
    %c8 = arith.constant 8 : index
    %90 = vector.load %arg14[%c0_45, %c8] : memref<128x16xf32, #tpu.memory_space<vmem>>, vector<128x8xf32>
    %91 = vector.broadcast %77 : vector<128x1xf32> to vector<128x8xf32>
    %92 = arith.mulf %91, %90 : vector<128x8xf32>
    %93 = arith.truncf %80 : vector<128x128xf32> to vector<128x128xbf16>
    %cst_46 = arith.constant dense<0.000000e+00> : vector<128x8xf32>
    %94 = tpu.matmul %93, %89, %cst_46 {dimension_numbers = #tpu.dot_dimension_numbers<[1], [0], [0], [1], [0, 0, 1, 1], [], []>} : vector<128x128xbf16>, vector<128x8xbf16>, vector<128x8xf32> -> vector<128x8xf32>
    %95 = arith.addf %92, %94 : vector<128x8xf32>
    %c0_47 = arith.constant 0 : index
    %c8_48 = arith.constant 8 : index
    %96 = vector.load %arg14[%c0_47, %c8_48] : memref<128x16xf32, #tpu.memory_space<vmem>>, vector<128x8xf32>
    tpu.vector_store %arg14[%c0_47, %c8_48], %95 {strides = array<i32>} : memref<128x16xf32, #tpu.memory_space<vmem>>, vector<128x8xf32>,
    %c0_49 = arith.constant 0 : index
    %c1_50 = arith.constant 1 : index
    %97 = vector.load %arg12[%c0_49, %c1_50] : memref<128x2xf32, #tpu.memory_space<vmem>>, vector<128x1xf32>
    tpu.vector_store %arg12[%c0_49, %c1_50], %75 {strides = array<i32>} : memref<128x2xf32, #tpu.memory_space<vmem>>, vector<128x1xf32>,
    %c1_i32 = arith.constant 1 : i32
    %98 = arith.cmpi eq, %arg2, %c1_i32 : i32
    %99 = arith.extui %98 : i1 to i32
    %c0_i32_51 = arith.constant 0 : i32
    %100 = arith.cmpi ne, %99, %c0_i32_51 : i32
    scf.if %100 {
      %c0_52 = arith.constant 0 : index
      %c0_53 = arith.constant 0 : index
      %101 = vector.load %arg14[%c0_52, %c0_53] : memref<128x16xf32, #tpu.memory_space<vmem>>, vector<128x8xf32>
      %c0_54 = arith.constant 0 : index
      %c0_55 = arith.constant 0 : index
      %102 = vector.load %arg13[%c0_54, %c0_55] : memref<128x2xf32, #tpu.memory_space<vmem>>, vector<128x1xf32>
      %103 = tpu.reciprocal %102 {approx = true} : vector<128x1xf32> -> vector<128x1xf32>
      %104 = vector.broadcast %103 : vector<128x1xf32> to vector<128x8xf32>
      %105 = arith.mulf %101, %104 : vector<128x8xf32>
      %c0_56 = arith.constant 0 : index
      %c8_57 = arith.constant 8 : index
      %106 = vector.load %arg14[%c0_56, %c8_57] : memref<128x16xf32, #tpu.memory_space<vmem>>, vector<128x8xf32>
      %c0_58 = arith.constant 0 : index
      %c1_59 = arith.constant 1 : index
      %107 = vector.load %arg13[%c0_58, %c1_59] : memref<128x2xf32, #tpu.memory_space<vmem>>, vector<128x1xf32>
      %108 = tpu.reciprocal %107 {approx = true} : vector<128x1xf32> -> vector<128x1xf32>
      %109 = vector.broadcast %108 : vector<128x1xf32> to vector<128x8xf32>
      %110 = arith.mulf %106, %109 : vector<128x8xf32>
      %cst_60 = arith.constant 0.000000e+00 : f32
      %111 = vector.broadcast %cst_60 : f32 to vector<128x112xf32>
      %112 = tpu.concatenate %105, %110, %111 in 1 : vector<128x8xf32>, vector<128x8xf32>, vector<128x112xf32> -> vector<128x128xf32>
      %c0_61 = arith.constant 0 : index
      %c0_62 = arith.constant 0 : index
      %c0_63 = arith.constant 0 : index
      %113 = vector.load %arg6[%c0_61, %c0_62, %c0_63] : memref<1x1x128xf32, #tpu.memory_space<vmem>>, vector<1x1x128xf32>
      %114 = vector.shape_cast %113 : vector<1x1x128xf32> to vector<1x128xf32>
      %115 = vector.broadcast %114 : vector<1x128xf32> to vector<128x128xf32>
      %116 = arith.addf %112, %115 : vector<128x128xf32>
      %cst_64 = arith.constant 0.000000e+00 : f32
      %117 = vector.broadcast %cst_64 : f32 to vector<128x128xf32>
      %118 = arith.cmpf ogt, %116, %117 : vector<128x128xf32>
      %119 = math.exp %116 : vector<128x128xf32>
      %cst_65 = arith.constant 1.000000e+00 : f32
      %120 = vector.broadcast %cst_65 : f32 to vector<128x128xf32>
      %121 = arith.subf %119, %120 : vector<128x128xf32>
      %122 = arith.select %118, %116, %121 : vector<128x128xi1>, vector<128x128xf32>
      %c0_66 = arith.constant 0 : index
      %c0_67 = arith.constant 0 : index
      %c0_68 = arith.constant 0 : index
      %123 = vector.load %arg10[%c0_66, %c0_67, %c0_68] : memref<1x128x128xf32, #tpu.memory_space<vmem>>, vector<1x128x128xf32>
      %124 = vector.shape_cast %123 : vector<1x128x128xf32> to vector<128x128xf32>
      %125 = vector.shape_cast %122 : vector<128x128xf32> to vector<1x128x128xf32>
      tpu.vector_store %arg10[%c0_66, %c0_67, %c0_68], %125 {strides = array<i32>} : memref<1x128x128xf32, #tpu.memory_space<vmem>>, vector<1x128x128xf32>,
      %126 = arith.truncf %122 : vector<128x128xf32> to vector<128x128xbf16>
      %c0_69 = arith.constant 0 : index
      %c0_70 = arith.constant 0 : index
      %127 = vector.load %arg7[%c0_69, %c0_70] : memref<128x128xbf16, #tpu.memory_space<vmem>>, vector<128x128xbf16>
      %cst_71 = arith.constant dense<0.000000e+00> : vector<128x128xf32>
      %128 = tpu.matmul %126, %127, %cst_71 {dimension_numbers = #tpu.dot_dimension_numbers<[1], [0], [0], [1], [0, 0, 1, 1], [], []>} : vector<128x128xbf16>, vector<128x128xbf16>, vector<128x128xf32> -> vector<128x128xf32>
      %c0_72 = arith.constant 0 : index
      %c0_73 = arith.constant 0 : index
      %129 = vector.load %arg8[%c0_72, %c0_73] : memref<1x128xf32, #tpu.memory_space<vmem>>, vector<1x128xf32>
      %130 = vector.broadcast %129 : vector<1x128xf32> to vector<128x128xf32>
      %131 = arith.addf %128, %130 : vector<128x128xf32>
      %132 = math.tanh %131 : vector<128x128xf32>
      %c0_74 = arith.constant 0 : index
      %c0_75 = arith.constant 0 : index
      %133 = vector.load %arg9[%c0_74, %c0_75] : memref<1x128xf32, #tpu.memory_space<vmem>>, vector<1x128xf32>
      %134 = vector.broadcast %133 : vector<1x128xf32> to vector<128x128xf32>
      %135 = arith.mulf %132, %134 : vector<128x128xf32>
      %cst_76 = arith.constant dense<0.000000e+00> : vector<128xf32>
      %136 = vector.multi_reduction <add>, %135, %cst_76 [0] : vector<128x128xf32> to vector<128xf32>
      %137 = vector.shape_cast %136 : vector<128xf32> to vector<1x128xf32>
      %c0_77 = arith.constant 0 : index
      %c0_78 = arith.constant 0 : index
      %138 = vector.load %arg15[%c0_77, %c0_78] : memref<1x128xf32, #tpu.memory_space<vmem>>, vector<1x128xf32>
      %139 = arith.addf %138, %137 : vector<1x128xf32>
      %c0_79 = arith.constant 0 : index
      %c0_80 = arith.constant 0 : index
      %140 = vector.load %arg15[%c0_79, %c0_80] : memref<1x128xf32, #tpu.memory_space<vmem>>, vector<1x128xf32>
      tpu.vector_store %arg15[%c0_79, %c0_80], %139 {strides = array<i32>} : memref<1x128xf32, #tpu.memory_space<vmem>>, vector<1x128xf32>,
      %c1_i32_81 = arith.constant 1 : i32
      %141 = arith.cmpi eq, %arg1, %c1_i32_81 : i32
      %142 = arith.extui %141 : i1 to i32
      %c0_i32_82 = arith.constant 0 : i32
      %143 = arith.cmpi ne, %142, %c0_i32_82 : i32
      scf.if %143 {
        %c0_83 = arith.constant 0 : index
        %c0_84 = arith.constant 0 : index
        %144 = vector.load %arg15[%c0_83, %c0_84] : memref<1x128xf32, #tpu.memory_space<vmem>>, vector<1x128xf32>
        %c0_85 = arith.constant 0 : index
        %c0_86 = arith.constant 0 : index
        %c0_87 = arith.constant 0 : index
        %145 = vector.load %arg11[%c0_85, %c0_86, %c0_87] : memref<1x1x128xf32, #tpu.memory_space<vmem>>, vector<1x1x128xf32>
        %146 = vector.shape_cast %145 : vector<1x1x128xf32> to vector<1x128xf32>
        %147 = vector.shape_cast %144 : vector<1x128xf32> to vector<1x1x128xf32>
        tpu.vector_store %arg11[%c0_85, %c0_86, %c0_87], %147 {strides = array<i32>} : memref<1x1x128xf32, #tpu.memory_space<vmem>>, vector<1x1x128xf32>,
      } else {
      }
    } else {
    }
    return
  }
  func.func @transform_0(%arg0: i32, %arg1: i32, %arg2: i32) -> (i32, i32, i32) {
    %c0_i32 = arith.constant 0 : i32
    return %arg0, %arg1, %arg2 : i32, i32, i32
  }
  func.func @transform_1(%arg0: i32, %arg1: i32, %arg2: i32) -> (i32, i32, i32) {
    %c0_i32 = arith.constant 0 : i32
    %c0_i32_0 = arith.constant 0 : i32
    return %arg0, %arg1, %c0_i32 : i32, i32, i32
  }
  func.func @transform_2(%arg0: i32, %arg1: i32, %arg2: i32) -> (i32, i32, i32) {
    %c0_i32 = arith.constant 0 : i32
    %c0_i32_0 = arith.constant 0 : i32
    return %arg0, %arg2, %c0_i32 : i32, i32, i32
  }
  func.func @transform_3(%arg0: i32, %arg1: i32, %arg2: i32) -> (i32, i32, i32) {
    %c0_i32 = arith.constant 0 : i32
    %c0_i32_0 = arith.constant 0 : i32
    %c0_i32_1 = arith.constant 0 : i32
    return %arg0, %c0_i32, %c0_i32_0 : i32, i32, i32
  }
  func.func @transform_4(%arg0: i32, %arg1: i32, %arg2: i32) -> (i32, i32) {
    %c0_i32 = arith.constant 0 : i32
    %c0_i32_0 = arith.constant 0 : i32
    %c0_i32_1 = arith.constant 0 : i32
    return %c0_i32, %c0_i32_0 : i32, i32
  }
  func.func @transform_5(%arg0: i32, %arg1: i32, %arg2: i32) -> (i32, i32) {
    %c0_i32 = arith.constant 0 : i32
    %c0_i32_0 = arith.constant 0 : i32
    %c0_i32_1 = arith.constant 0 : i32
    return %c0_i32, %c0_i32_0 : i32, i32
  }
  func.func @transform_6(%arg0: i32, %arg1: i32, %arg2: i32) -> (i32, i32) {
    %c0_i32 = arith.constant 0 : i32
    %c0_i32_0 = arith.constant 0 : i32
    %c0_i32_1 = arith.constant 0 : i32
    return %c0_i32, %c0_i32_0 : i32, i32
  }
  func.func @transform_7(%arg0: i32, %arg1: i32, %arg2: i32) -> (i32, i32, i32) {
    %c0_i32 = arith.constant 0 : i32
    %c0_i32_0 = arith.constant 0 : i32
    return %arg0, %arg1, %c0_i32 : i32, i32, i32
  }
  func.func @transform_8(%arg0: i32, %arg1: i32, %arg2: i32) -> (i32, i32, i32) {
    %c0_i32 = arith.constant 0 : i32
    %c0_i32_0 = arith.constant 0 : i32
    %c0_i32_1 = arith.constant 0 : i32
    return %arg0, %c0_i32, %c0_i32_0 : i32, i32, i32
  }
}

module attributes {stable_mosaic.version = 11 : i64} {
  func.func @combine_kernel(%arg0: i32, %arg1: memref<3xf32, #tpu.memory_space<smem>>, %arg2: memref<3x128x128xf32, #tpu.memory_space<vmem>>, %arg3: memref<128x128xf32, #tpu.memory_space<vmem>>) attributes {dimension_semantics = [#tpu.dimension_semantics<parallel>], iteration_bounds = array<i64: 2>, scalar_prefetch = 0 : i64, scratch_operands = 0 : i64, tpu.core_type = #tpu.core_type<tc>, window_params = [{transform_indices = @transform_0, window_bounds = array<i64: 3>}, {transform_indices = @transform_1, window_bounds = array<i64: 3, 128, 128>}, {transform_indices = @transform_2, window_bounds = array<i64: 128, 128>}]} {
    %c0 = arith.constant 0 : index
    %0 = memref.load %arg1[%c0] : memref<3xf32, #tpu.memory_space<smem>>
    %c0_0 = arith.constant 0 : index
    %c0_1 = arith.constant 0 : index
    %c0_2 = arith.constant 0 : index
    %1 = vector.load %arg2[%c0_0, %c0_1, %c0_2] : memref<3x128x128xf32, #tpu.memory_space<vmem>>, vector<1x128x128xf32>
    %2 = vector.shape_cast %1 : vector<1x128x128xf32> to vector<128x128xf32>
    %3 = vector.broadcast %0 : f32 to vector<128x128xf32>
    %4 = arith.mulf %3, %2 : vector<128x128xf32>
    %c1 = arith.constant 1 : index
    %5 = memref.load %arg1[%c1] : memref<3xf32, #tpu.memory_space<smem>>
    %c1_3 = arith.constant 1 : index
    %c0_4 = arith.constant 0 : index
    %c0_5 = arith.constant 0 : index
    %6 = vector.load %arg2[%c1_3, %c0_4, %c0_5] : memref<3x128x128xf32, #tpu.memory_space<vmem>>, vector<1x128x128xf32>
    %7 = vector.shape_cast %6 : vector<1x128x128xf32> to vector<128x128xf32>
    %8 = vector.broadcast %5 : f32 to vector<128x128xf32>
    %9 = arith.mulf %8, %7 : vector<128x128xf32>
    %10 = arith.addf %4, %9 : vector<128x128xf32>
    %c2 = arith.constant 2 : index
    %11 = memref.load %arg1[%c2] : memref<3xf32, #tpu.memory_space<smem>>
    %c2_6 = arith.constant 2 : index
    %c0_7 = arith.constant 0 : index
    %c0_8 = arith.constant 0 : index
    %12 = vector.load %arg2[%c2_6, %c0_7, %c0_8] : memref<3x128x128xf32, #tpu.memory_space<vmem>>, vector<1x128x128xf32>
    %13 = vector.shape_cast %12 : vector<1x128x128xf32> to vector<128x128xf32>
    %14 = vector.broadcast %11 : f32 to vector<128x128xf32>
    %15 = arith.mulf %14, %13 : vector<128x128xf32>
    %16 = arith.addf %10, %15 : vector<128x128xf32>
    %c0_9 = arith.constant 0 : index
    %c0_10 = arith.constant 0 : index
    %17 = vector.load %arg3[%c0_9, %c0_10] : memref<128x128xf32, #tpu.memory_space<vmem>>, vector<128x128xf32>
    tpu.vector_store %arg3[%c0_9, %c0_10], %16 {strides = array<i32>} : memref<128x128xf32, #tpu.memory_space<vmem>>, vector<128x128xf32>,
    return
  }
  func.func @transform_0(%arg0: i32) -> i32 {
    %c0_i32 = arith.constant 0 : i32
    %c0_i32_0 = arith.constant 0 : i32
    return %c0_i32 : i32
  }
  func.func @transform_1(%arg0: i32) -> (i32, i32, i32) {
    %c0_i32 = arith.constant 0 : i32
    %c0_i32_0 = arith.constant 0 : i32
    %c0_i32_1 = arith.constant 0 : i32
    return %c0_i32, %arg0, %c0_i32_0 : i32, i32, i32
  }
  func.func @transform_2(%arg0: i32) -> (i32, i32) {
    %c0_i32 = arith.constant 0 : i32
    %c0_i32_0 = arith.constant 0 : i32
    return %arg0, %c0_i32 : i32, i32
  }
}

module attributes {stable_mosaic.version = 11 : i64} {
  func.func @proj_kernel(%arg0: i32, %arg1: i32, %arg2: memref<128x128xf32, #tpu.memory_space<vmem>>, %arg3: memref<1x128x128xbf16, #tpu.memory_space<vmem>>, %arg4: memref<1x128x128xbf16, #tpu.memory_space<vmem>>) attributes {dimension_semantics = [#tpu.dimension_semantics<parallel>, #tpu.dimension_semantics<parallel>], iteration_bounds = array<i64: 3, 2>, scalar_prefetch = 0 : i64, scratch_operands = 0 : i64, tpu.core_type = #tpu.core_type<tc>, window_params = [{transform_indices = @transform_0, window_bounds = array<i64: 128, 128>}, {transform_indices = @transform_1, window_bounds = array<i64: 1, 128, 128>}, {transform_indices = @transform_2, window_bounds = array<i64: 1, 128, 128>}]} {
    %c0 = arith.constant 0 : index
    %c0_0 = arith.constant 0 : index
    %0 = vector.load %arg2[%c0, %c0_0] : memref<128x128xf32, #tpu.memory_space<vmem>>, vector<128x128xf32>
    %1 = arith.truncf %0 : vector<128x128xf32> to vector<128x128xbf16>
    %c0_1 = arith.constant 0 : index
    %c0_2 = arith.constant 0 : index
    %c0_3 = arith.constant 0 : index
    %2 = vector.load %arg3[%c0_1, %c0_2, %c0_3] : memref<1x128x128xbf16, #tpu.memory_space<vmem>>, vector<1x128x128xbf16>
    %3 = vector.shape_cast %2 : vector<1x128x128xbf16> to vector<128x128xbf16>
    %cst = arith.constant dense<0.000000e+00> : vector<128x128xf32>
    %4 = tpu.matmul %1, %3, %cst {dimension_numbers = #tpu.dot_dimension_numbers<[1], [0], [0], [1], [0, 0, 1, 1], [], []>} : vector<128x128xbf16>, vector<128x128xbf16>, vector<128x128xf32> -> vector<128x128xf32>
    %5 = arith.truncf %4 : vector<128x128xf32> to vector<128x128xbf16>
    %c0_4 = arith.constant 0 : index
    %c0_5 = arith.constant 0 : index
    %c0_6 = arith.constant 0 : index
    %6 = vector.load %arg4[%c0_4, %c0_5, %c0_6] : memref<1x128x128xbf16, #tpu.memory_space<vmem>>, vector<1x128x128xbf16>
    %7 = vector.shape_cast %6 : vector<1x128x128xbf16> to vector<128x128xbf16>
    %8 = vector.shape_cast %5 : vector<128x128xbf16> to vector<1x128x128xbf16>
    tpu.vector_store %arg4[%c0_4, %c0_5, %c0_6], %8 {strides = array<i32>} : memref<1x128x128xbf16, #tpu.memory_space<vmem>>, vector<1x128x128xbf16>,
    return
  }
  func.func @transform_0(%arg0: i32, %arg1: i32) -> (i32, i32) {
    %c0_i32 = arith.constant 0 : i32
    %c0_i32_0 = arith.constant 0 : i32
    return %arg1, %c0_i32 : i32, i32
  }
  func.func @transform_1(%arg0: i32, %arg1: i32) -> (i32, i32, i32) {
    %c0_i32 = arith.constant 0 : i32
    %c0_i32_0 = arith.constant 0 : i32
    %c0_i32_1 = arith.constant 0 : i32
    return %arg0, %c0_i32, %c0_i32_0 : i32, i32, i32
  }
  func.func @transform_2(%arg0: i32, %arg1: i32) -> (i32, i32, i32) {
    %c0_i32 = arith.constant 0 : i32
    %c0_i32_0 = arith.constant 0 : i32
    return %arg0, %arg1, %c0_i32 : i32, i32, i32
  }
}

</mosaic_0001>

<llo_original>
// kernel: han_forward.6
$region0: #{han_forward.6}
  #allocation0 [shape = 'u32[]', space=smem, size = 0x4, offset = 0x4, fixed_abs, tag = 'smem constant byte address 0x4 - core index']
  #allocation1 [shape = 'u32[144,128]{1,0:T(1,128)}', space=vmem, size = 0x12000, scoped, tag = 'internal scratch']
  %s0 = inlined_call_operand.vmem [shape: f32[256,64], index: 0, kind: input, shape index: {}]
  %s1 = inlined_call_operand.vmem [shape: bf16[3,64,128], index: 1, kind: input, shape index: {}]
  %s2 = inlined_call_operand.vmem [shape: bf16[3,256,128], index: 2, kind: output, shape index: {}]
  %s3 = sld [smem:[#allocation0]]
  $region41: #{han_forward.6} parent=0
    _
  %s5 = ssub.s32 1, %s3
  %s6 = scalar_select 0, %s5, %s3
  loop: start=0, step=1, limit=8
  $region2: #{han_forward.6} parent=0 // loop_pre_header
    _
  $region3: #{han_forward.6} parent=0 // loop_header
    %s8 = sphi 0, %s12
    %p9 = scmp.ge.s32.totalorder %s8, 8
    %s15 = sphi 0, %s27
    %s16 = sphi 0, %s23
    %s17 = sphi 0, %s15
    %s18 = sphi 0, %s16
    %s19 = sphi 0, %s17
    %s20 = sphi 0, %s18
    %s30 = sphi 0, %s32
    %s33 = sphi 0, %s30
    %s34 = sphi 0, %s33
    %s50 = sphi 0, %s34
    %s56 = sphi 0, %s58
    %s59 = sphi 0, %s56
    %s60 = sphi 0, %s59
    %s76 = sphi 0, %s60
    %s84 = sphi 0, %s86
    %s87 = sphi 0, %s84
    %s88 = sphi 0, %s87
    %s104 = sphi 0, %s88
  $region4: #{han_forward.6} parent=0 // loop_header_branch
    %11 = sbr.rel (%p9) target = $region8
  $region5: #{han_forward.6} parent=0 // loop_body
    %s13 = ssub.s32 %s8, 1
    %s14 = ssub.s32 %s8, 2
    %s21 = sadd.s32 1, %s16
    %p22 = scmp.ge.s32.totalorder %s21, 2
    %s23 = scalar_select %p22, 0, %s21
    %s24 = sadd.s32 1, %s15
    %s25 = scalar_select %p22, %s24, %s15
    %p26 = scmp.ge.s32.totalorder %s25, 3
    %s27 = scalar_select %p26, 0, %s25
    %s28 = ssub.s32 %s16, %s23
    %p29 = scmp.eq.s32.totalorder %s28, 0
    %s31 = sadd.s32 %s30, 1
    %s32 = scalar_select %p29, %s30, %s31
    %p35 = pneg %p29
    %p36 = scmp.eq.s32.totalorder %s8, 5
    %p37 = por %p35, %p36
    %p38 = scmp.ne.s32.totalorder %s30, %s33
    %p39 = scmp.eq.s32.totalorder %s8, 0
    %p40 = por %p38, %p39
    %p41 = scmp.ne.s32.totalorder %s30, %s33
    %p42 = scmp.eq.s32.totalorder %s13, 5
    %p43 = por %p41, %p42
    %p44 = scmp.ne.s32.totalorder %s33, %s34
    %p45 = scmp.eq.s32.totalorder %s13, 0
    %p46 = por %p44, %p45
    %p47 = scmp.ne.s32.totalorder %s33, %s34
    %p48 = scmp.eq.s32.totalorder %s14, 5
    %p49 = por %p47, %p48
    %p51 = scmp.ne.s32.totalorder %s34, %s50
    %p52 = scmp.eq.s32.totalorder %s14, 0
    %p53 = por %p51, %p52
    %s54 = ssub.s32 %s15, %s27
    %p55 = scmp.eq.s32.totalorder %s54, 0
    %s57 = sadd.s32 %s56, 1
    %s58 = scalar_select %p55, %s56, %s57
    %p61 = pneg %p55
    %p62 = scmp.eq.s32.totalorder %s8, 5
    %p63 = por %p61, %p62
    %p64 = scmp.ne.s32.totalorder %s56, %s59
    %p65 = scmp.eq.s32.totalorder %s8, 0
    %p66 = por %p64, %p65
    %p67 = scmp.ne.s32.totalorder %s56, %s59
    %p68 = scmp.eq.s32.totalorder %s13, 5
    %p69 = por %p67, %p68
    %p70 = scmp.ne.s32.totalorder %s59, %s60
    %p71 = scmp.eq.s32.totalorder %s13, 0
    %p72 = por %p70, %p71
    %p73 = scmp.ne.s32.totalorder %s59, %s60
    %p74 = scmp.eq.s32.totalorder %s14, 5
    %p75 = por %p73, %p74
    %p77 = scmp.ne.s32.totalorder %s60, %s76
    %p78 = scmp.eq.s32.totalorder %s14, 0
    %p79 = por %p77, %p78
    %s80 = ssub.s32 %s15, %s27
    %s81 = ssub.s32 %s16, %s23
    %s82 = sor.u32 %s80, %s81
    %p83 = scmp.eq.s32.totalorder %s82, 0
    %s85 = sadd.s32 %s84, 1
    %s86 = scalar_select %p83, %s84, %s85
    %p89 = pneg %p83
    %p90 = scmp.eq.s32.totalorder %s8, 5
    %p91 = por %p89, %p90
    %p92 = scmp.ne.s32.totalorder %s84, %s87
    %p93 = scmp.eq.s32.totalorder %s8, 0
    %p94 = por %p92, %p93
    %p95 = scmp.ne.s32.totalorder %s84, %s87
    %p96 = scmp.eq.s32.totalorder %s13, 5
    %p97 = por %p95, %p96
    %p98 = scmp.ne.s32.totalorder %s87, %s88
    %p99 = scmp.eq.s32.totalorder %s13, 0
    %p100 = por %p98, %p99
    %p101 = scmp.ne.s32.totalorder %s87, %s88
    %p102 = scmp.eq.s32.totalorder %s14, 5
    %p103 = por %p101, %p102
    %p105 = scmp.ne.s32.totalorder %s88, %s104
    %p106 = scmp.eq.s32.totalorder %s14, 0
    %p107 = por %p105, %p106
    %p108 = scmp.le.s32.totalorder 1, %s8
    %p109 = scmp.lt.s32.totalorder %s8, 7
    %p110 = pnand %p108, %p109
    %p111 = pneg %p110
    // Predicated region
    $region9: #{han_forward.6} parent=5 // pred_check
      _
    $region10: #{han_forward.6} parent=5 // pred_check_branch
      %113 = sbr.rel (%p110) target = $region12
    $region11: #{han_forward.6} parent=5 // pred_region
      %s114 = ssub.s32 %s8, 1
    $region12: #{han_forward.6} parent=5 // pred_fallthru
      _
    %p115 = scmp.lt.s32.totalorder %s8, 6
    // Predicated region
    $region13: #{han_forward.6} parent=5 // pred_check
      %p116 = pneg %p115
    $region14: #{han_forward.6} parent=5 // pred_check_branch
      %118 = sbr.rel (%p116) target = $region16
    $region15: #{han_forward.6} parent=5 // pred_region
      // Predicated region
      $region17: #{han_forward.6} parent=15 // pred_check
        %p119 = pneg %p40
      $region18: #{han_forward.6} parent=15 // pred_check_branch
        %121 = sbr.rel (%p119) target = $region20
      $region19: #{han_forward.6} parent=15 // pred_region
        %s122 = smul.u32 16, %s16
        %p123 = scmp.lt.s32.totalorder %s122, 31
        %s124 = scalar_select %p123, %s122, 31
        %s125 = smul.addr %s124, 8
        %s126 = scalar_lea.vmem %s0, %s125
        %s127 = smul.u32 16, %s16
      $region20: #{han_forward.6} parent=15 // pred_fallthru
        _
      // Predicated region
      $region21: #{han_forward.6} parent=15 // pred_check
        %p128 = pneg %p66
      $region22: #{han_forward.6} parent=15 // pred_check_branch
        %130 = sbr.rel (%p128) target = $region24
      $region23: #{han_forward.6} parent=15 // pred_region
        %p131 = scmp.lt.s32.totalorder %s15, 2
        %s132 = scalar_select %p131, %s15, 2
        %s133 = smul.addr %s132, 8
        %s134 = smul.addr %s133, 4
        %s135 = scalar_lea.vmem %s1, %s134
      $region24: #{han_forward.6} parent=15 // pred_fallthru
        _
    $region16: #{han_forward.6} parent=5 // pred_fallthru
      _
    %p136 = scmp.le.s32.totalorder 1, %s8
    %p137 = scmp.lt.s32.totalorder %s8, 7
    %p138 = pnand %p136, %p137
    %p139 = pneg %p138
    // Predicated region
    $region25: #{han_forward.6} parent=5 // pred_check
      _
    $region26: #{han_forward.6} parent=5 // pred_check_branch
      %141 = sbr.rel (%p138) target = $region28
    $region27: #{han_forward.6} parent=5 // pred_region
      %s142 = ssub.s32 %s8, 1
      %s143 = smul.u32 16, %s18
      %p144 = scmp.lt.s32.totalorder %s143, 31
      %s145 = scalar_select %p144, %s143, 31
      %s146 = smul.addr %s145, 8
      %s147 = scalar_lea.vmem %s0, %s146
      %p148 = pneg %p46
      %p149 = pneg %p43
      %p150 = scmp.lt.s32.totalorder %s17, 2
      %s151 = scalar_select %p150, %s17, 2
      %s152 = smul.addr %s151, 8
      %s153 = smul.addr %s152, 4
      %s154 = scalar_lea.vmem %s1, %s153
      %p155 = pneg %p72
      %p156 = pneg %p69
      %p157 = pneg %p100
      %p158 = pneg %p97
      %s159 = smul.u32 16, %s18
      %p160 = scmp.lt.s32.totalorder %s17, 2
      %s161 = scalar_select %p160, %s17, 2
      %p162 = scmp.lt.s32.totalorder %s159, 31
      %s163 = scalar_select %p162, %s159, 31
      %s164 = smul.addr %s161, 32
      %s165 = sadd.s32 %s163, %s164
      %s166 = smul.addr %s165, 4
      %s167 = scalar_lea.vmem %s2, %s166
      %s168 = smul.u32 16, %s18
      %p169 = scmp.lt.s32.totalorder %s168, 31
      %s170 = scalar_select %p169, %s168, 31
      %s171 = smul.addr %s170, 8
      %s172 = scalar_lea.vmem %s0, %s171
      %s173 = smul.u32 16, %s18
      %p174 = scmp.lt.s32.totalorder %s17, 2
      %s175 = scalar_select %p174, %s17, 2
      %s176 = smul.addr %s175, 8
      %s177 = smul.addr %s176, 4
      %s178 = scalar_lea.vmem %s1, %s177
      %s179 = smul.u32 16, %s18
      %p180 = scmp.lt.s32.totalorder %s17, 2
      %s181 = scalar_select %p180, %s17, 2
      %p182 = scmp.lt.s32.totalorder %s179, 31
      %s183 = scalar_select %p182, %s179, 31
      %s184 = smul.addr %s181, 32
      %s185 = sadd.s32 %s183, %s184
      %s186 = smul.addr %s185, 4
      %s187 = scalar_lea.vmem %s2, %s186
      %s188 = smul.u32 16, %s18
      %v190 = vld [vmem:[%s172] sm:$0xff]
      %v191 = vld [vmem:[%s172 + $0x8] sm:$0xff]
      %v192 = vld [vmem:[%s172 + $0x10] sm:$0xff]
      %v193 = vld [vmem:[%s172 + $0x18] sm:$0xff]
      %v194 = vld [vmem:[%s172 + $0x20] sm:$0xff]
      %v195 = vld [vmem:[%s172 + $0x28] sm:$0xff]
      %v196 = vld [vmem:[%s172 + $0x30] sm:$0xff]
      %v197 = vld [vmem:[%s172 + $0x38] sm:$0xff]
      %v198 = vld [vmem:[%s172 + $0x40] sm:$0xff]
      %v199 = vld [vmem:[%s172 + $0x48] sm:$0xff]
      %v200 = vld [vmem:[%s172 + $0x50] sm:$0xff]
      %v201 = vld [vmem:[%s172 + $0x58] sm:$0xff]
      %v202 = vld [vmem:[%s172 + $0x60] sm:$0xff]
      %v203 = vld [vmem:[%s172 + $0x68] sm:$0xff]
      %v204 = vld [vmem:[%s172 + $0x70] sm:$0xff]
      %v205 = vld [vmem:[%s172 + $0x78] sm:$0xff]
      %v206 = vpack.c.bf16 %v191, %v190
      %v207 = vpack.c.bf16 %v193, %v192
      %v208 = vpack.c.bf16 %v195, %v194
      %v209 = vpack.c.bf16 %v197, %v196
      %v210 = vpack.c.bf16 %v199, %v198
      %v211 = vpack.c.bf16 %v201, %v200
      %v212 = vpack.c.bf16 %v203, %v202
      %v213 = vpack.c.bf16 %v205, %v204
      %v214 = vld [vmem:[%s178] sm:$0xf]
      %v215 = vld [vmem:[%s178 + $0x4] sm:$0xf]
      %v216 = vld [vmem:[%s178 + $0x8] sm:$0xf]
      %v217 = vld [vmem:[%s178 + $0xc] sm:$0xf]
      %v218 = vld [vmem:[%s178 + $0x10] sm:$0xf]
      %v219 = vld [vmem:[%s178 + $0x14] sm:$0xf]
      %v220 = vld [vmem:[%s178 + $0x18] sm:$0xf]
      %v221 = vld [vmem:[%s178 + $0x1c] sm:$0xf]
      %v230 = vunpack.c.l.b16 %v214
      %v231 = vunpack.c.l.b16 %v215
      %v232 = vunpack.c.l.b16 %v216
      %v233 = vunpack.c.l.b16 %v217
      %v234 = vunpack.c.l.b16 %v218
      %v235 = vunpack.c.l.b16 %v219
      %v236 = vunpack.c.l.b16 %v220
      %v237 = vunpack.c.l.b16 %v221
      %v238 = vpack.c.b16 %v231, %v230
      %v239 = vpack.c.b16 %v233, %v232
      %v240 = vpack.c.b16 %v235, %v234
      %v241 = vpack.c.b16 %v237, %v236
      %vm246 = vcmask 523264
      %v248 = vsel %vm246, %v206, 0
      %v251 = vsel %vm246, %v207, 0
      %v254 = vsel %vm246, %v208, 0
      %v257 = vsel %vm246, %v209, 0
      %v260 = vsel %vm246, %v210, 0
      %v263 = vsel %vm246, %v211, 0
      %v266 = vsel %vm246, %v212, 0
      %v269 = vsel %vm246, %v213, 0
      %271 = vmatprep.subr.bf16.mxu0 0
      %272 = vmatpush1.bf16.msra.mxu0 %v238
      %273 = vmatprep.subr.bf16.mxu0 0
      %274 = vmatpush1.bf16.msra.mxu0 %v239
      %275 = vmatprep.subr.bf16.mxu0 0
      %276 = vmatpush1.bf16.msra.mxu0 %v240
      %277 = vmatprep.subr.bf16.mxu0 0
      %278 = vmatpush1.bf16.msra.mxu0 %v241
      %279 = vmatprep.subr.bf16.mxu0 0
      %280 = vmatpush1.bf16.msra.mxu0 0
      %281 = vmatprep.subr.bf16.mxu0 0
      %282 = vmatpush1.bf16.msra.mxu0 0
      %283 = vmatprep.subr.bf16.mxu0 0
      %284 = vmatpush1.bf16.msra.mxu0 0
      %285 = vmatprep.subr.bf16.mxu0 0
      %286 = vmatpush1.bf16.msra.mxu0 0
      %287 = vmatprep.subr.bf16.mxu0 0
      %288 = vmatpush1.bf16.msra.mxu0 0
      %289 = vmatprep.subr.bf16.mxu0 0
      %290 = vmatpush1.bf16.msra.mxu0 0
      %291 = vmatprep.subr.bf16.mxu0 0
      %292 = vmatpush1.bf16.msra.mxu0 0
      %293 = vmatprep.subr.bf16.mxu0 0
      %294 = vmatpush1.bf16.msra.mxu0 0
      %295 = vmatprep.subr.bf16.mxu0 0
      %296 = vmatpush1.bf16.msra.mxu0 0
      %297 = vmatprep.subr.bf16.mxu0 0
      %298 = vmatpush1.bf16.msra.mxu0 0
      %299 = vmatprep.subr.bf16.mxu0 0
      %300 = vmatpush1.bf16.msra.mxu0 0
      %301 = vmatprep.subr.bf16.mxu0 0
      %302 = vmatpush1.bf16.msra.mxu0 0
      %303 = vmatprep.mubr.bf16.mxu0 0
      %304 = vmatmul.mubr.bf16.gmra.mrb[0].mxu0 %v248
      %v305 = vpop.f32.mrb[0].mxu0
      %v306 = vadd.f32 0.0, %v305
      %v307 = vpop.f32.mrb[0].mxu0
      %v308 = vpop.f32.mrb[0].mxu0
      %v309 = vadd.f32 0.0, %v308
      %v310 = vpop.f32.mrb[0].mxu0
      %311 = vmatprep.mubr.bf16.mxu0 0
      %312 = vmatmul.mubr.bf16.gmra.mrb[0].mxu0 %v251
      %v313 = vpop.f32.mrb[0].mxu0
      %v314 = vadd.f32 0.0, %v313
      %v315 = vpop.f32.mrb[0].mxu0
      %v316 = vpop.f32.mrb[0].mxu0
      %v317 = vadd.f32 0.0, %v316
      %v318 = vpop.f32.mrb[0].mxu0
      %319 = vmatprep.mubr.bf16.mxu0 0
      %320 = vmatmul.mubr.bf16.gmra.mrb[0].mxu0 %v254
      %v321 = vpop.f32.mrb[0].mxu0
      %v322 = vadd.f32 0.0, %v321
      %v323 = vpop.f32.mrb[0].mxu0
      %v324 = vpop.f32.mrb[0].mxu0
      %v325 = vadd.f32 0.0, %v324
      %v326 = vpop.f32.mrb[0].mxu0
      %327 = vmatprep.mubr.bf16.mxu0 0
      %328 = vmatmul.mubr.bf16.gmra.mrb[0].mxu0 %v257
      %v329 = vpop.f32.mrb[0].mxu0
      %v330 = vadd.f32 0.0, %v329
      %v331 = vpop.f32.mrb[0].mxu0
      %v332 = vpop.f32.mrb[0].mxu0
      %v333 = vadd.f32 0.0, %v332
      %v334 = vpop.f32.mrb[0].mxu0
      %335 = vmatprep.mubr.bf16.mxu0 0
      %336 = vmatmul.mubr.bf16.gmra.mrb[0].mxu0 %v260
      %v337 = vpop.f32.mrb[0].mxu0
      %v338 = vadd.f32 0.0, %v337
      %v339 = vpop.f32.mrb[0].mxu0
      %v340 = vpop.f32.mrb[0].mxu0
      %v341 = vadd.f32 0.0, %v340
      %v342 = vpop.f32.mrb[0].mxu0
      %343 = vmatprep.mubr.bf16.mxu0 0
      %344 = vmatmul.mubr.bf16.gmra.mrb[0].mxu0 %v263
      %v345 = vpop.f32.mrb[0].mxu0
      %v346 = vadd.f32 0.0, %v345
      %v347 = vpop.f32.mrb[0].mxu0
      %v348 = vpop.f32.mrb[0].mxu0
      %v349 = vadd.f32 0.0, %v348
      %v350 = vpop.f32.mrb[0].mxu0
      %351 = vmatprep.mubr.bf16.mxu0 0
      %352 = vmatmul.mubr.bf16.gmra.mrb[0].mxu0 %v266
      %v353 = vpop.f32.mrb[0].mxu0
      %v354 = vadd.f32 0.0, %v353
      %v355 = vpop.f32.mrb[0].mxu0
      %v356 = vpop.f32.mrb[0].mxu0
      %v357 = vadd.f32 0.0, %v356
      %v358 = vpop.f32.mrb[0].mxu0
      %359 = vmatprep.mubr.bf16.mxu0 0
      %360 = vmatmul.mubr.bf16.gmra.mrb[0].mxu0 %v269
      %v361 = vpop.f32.mrb[0].mxu0
      %v362 = vadd.f32 0.0, %v361
      %v363 = vpop.f32.mrb[0].mxu0
      %v364 = vpop.f32.mrb[0].mxu0
      %v365 = vadd.f32 0.0, %v364
      %v366 = vpop.f32.mrb[0].mxu0
      %367 = vdwg.mxu0
      %v368 = vpack.c.bf16 %v309, %v306
      %v369 = vpack.c.bf16 %v317, %v314
      %v370 = vpack.c.bf16 %v325, %v322
      %v371 = vpack.c.bf16 %v333, %v330
      %v372 = vpack.c.bf16 %v341, %v338
      %v373 = vpack.c.bf16 %v349, %v346
      %v374 = vpack.c.bf16 %v357, %v354
      %v375 = vpack.c.bf16 %v365, %v362
      %v384 = vunpack.c.l.b16 %v368
      %v385 = vunpack.c.h.b16 %v368
      %v386 = vunpack.c.l.b16 %v369
      %v387 = vunpack.c.h.b16 %v369
      %v388 = vunpack.c.l.b16 %v370
      %v389 = vunpack.c.h.b16 %v370
      %v390 = vunpack.c.l.b16 %v371
      %v391 = vunpack.c.h.b16 %v371
      %v392 = vunpack.c.l.b16 %v372
      %v393 = vunpack.c.h.b16 %v372
      %v394 = vunpack.c.l.b16 %v373
      %v395 = vunpack.c.h.b16 %v373
      %v396 = vunpack.c.l.b16 %v374
      %v397 = vunpack.c.h.b16 %v374
      %v398 = vunpack.c.l.b16 %v375
      %v399 = vunpack.c.h.b16 %v375
      %v400 = vpack.c.b16 %v384, %v384
      %v401 = vpack.c.b16 %v385, %v385
      %v402 = vpack.c.b16 %v386, %v386
      %v403 = vpack.c.b16 %v387, %v387
      %v404 = vpack.c.b16 %v388, %v388
      %v405 = vpack.c.b16 %v389, %v389
      %v406 = vpack.c.b16 %v390, %v390
      %v407 = vpack.c.b16 %v391, %v391
      %v408 = vpack.c.b16 %v392, %v392
      %v409 = vpack.c.b16 %v393, %v393
      %v410 = vpack.c.b16 %v394, %v394
      %v411 = vpack.c.b16 %v395, %v395
      %v412 = vpack.c.b16 %v396, %v396
      %v413 = vpack.c.b16 %v397, %v397
      %v414 = vpack.c.b16 %v398, %v398
      %v415 = vpack.c.b16 %v399, %v399
      %432 = vst [vmem:[%s187] sm:$0xf] %v400
      %433 = vst [vmem:[%s187 + $0x4] sm:$0xf] %v401
      %434 = vst [vmem:[%s187 + $0x8] sm:$0xf] %v402
      %435 = vst [vmem:[%s187 + $0xc] sm:$0xf] %v403
      %436 = vst [vmem:[%s187 + $0x10] sm:$0xf] %v404
      %437 = vst [vmem:[%s187 + $0x14] sm:$0xf] %v405
      %438 = vst [vmem:[%s187 + $0x18] sm:$0xf] %v406
      %439 = vst [vmem:[%s187 + $0x1c] sm:$0xf] %v407
      %440 = vst [vmem:[%s187 + $0x20] sm:$0xf] %v408
      %441 = vst [vmem:[%s187 + $0x24] sm:$0xf] %v409
      %442 = vst [vmem:[%s187 + $0x28] sm:$0xf] %v410
      %443 = vst [vmem:[%s187 + $0x2c] sm:$0xf] %v411
      %444 = vst [vmem:[%s187 + $0x30] sm:$0xf] %v412
      %445 = vst [vmem:[%s187 + $0x34] sm:$0xf] %v413
      %446 = vst [vmem:[%s187 + $0x38] sm:$0xf] %v414
      %447 = vst [vmem:[%s187 + $0x3c] sm:$0xf] %v415
      %s448 = smul.u32 16, %s18
      %p449 = scmp.lt.s32.totalorder %s17, 2
      %s450 = scalar_select %p449, %s17, 2
      %p451 = scmp.lt.s32.totalorder %s448, 31
      %s452 = scalar_select %p451, %s448, 31
      %s453 = smul.addr %s450, 32
      %s454 = sadd.s32 %s452, %s453
      %s455 = smul.addr %s454, 4
      %s456 = scalar_lea.vmem %s2, %s455
      // Predicated region
      $region29: #{han_forward.6} parent=27 // pred_check
        %p457 = pneg %p97
      $region30: #{han_forward.6} parent=27 // pred_check_branch
        %459 = sbr.rel (%p457) target = $region32
      $region31: #{han_forward.6} parent=27 // pred_region
        %s460 = smul.u32 16, %s18
      $region32: #{han_forward.6} parent=27 // pred_fallthru
        _
    $region28: #{han_forward.6} parent=5 // pred_fallthru
      _
    %p461 = scmp.le.s32.totalorder 2, %s8
    // Predicated region
    $region33: #{han_forward.6} parent=5 // pred_check
      %p462 = pneg %p461
    $region34: #{han_forward.6} parent=5 // pred_check_branch
      %464 = sbr.rel (%p462) target = $region36
    $region35: #{han_forward.6} parent=5 // pred_region
      %s465 = ssub.s32 %s8, 2
      // Predicated region
      $region37: #{han_forward.6} parent=35 // pred_check
        %p466 = pneg %p103
      $region38: #{han_forward.6} parent=35 // pred_check_branch
        %468 = sbr.rel (%p466) target = $region40
      $region39: #{han_forward.6} parent=35 // pred_region
        %s469 = smul.u32 16, %s20
        %p470 = scmp.lt.s32.totalorder %s19, 2
        %s471 = scalar_select %p470, %s19, 2
        %p472 = scmp.lt.s32.totalorder %s469, 31
        %s473 = scalar_select %p472, %s469, 31
        %s474 = smul.addr %s471, 32
        %s475 = sadd.s32 %s473, %s474
        %s476 = smul.addr %s475, 4
        %s477 = scalar_lea.vmem %s2, %s476
      $region40: #{han_forward.6} parent=35 // pred_fallthru
        _
    $region36: #{han_forward.6} parent=5 // pred_fallthru
      _
  $region6: #{han_forward.6} parent=0 // loop_footer
    %s12 = sadd.s32 1, %s8
  $region7: #{han_forward.6} parent=0 // loop_footer_branch
    %7 = sbr.rel target = $region3
  $region8: #{han_forward.6} parent=0 // loop_exit
    _

// kernel: han_forward.8
$region0: #{han_forward.8}
  #allocation0 [shape = 'u32[]', space=smem, size = 0x4, offset = 0x4, fixed_abs, tag = 'smem constant byte address 0x4 - core index']
  #allocation1 [shape = 'u32[144,128]{1,0:T(1,128)}', space=vmem, size = 0x12000, scoped, tag = 'internal scratch']
  %s0 = inlined_call_operand.vmem [shape: f32[3], index: 0, kind: input, shape index: {}]
  %s1 = inlined_call_operand.vmem [shape: f32[3,256,128], index: 1, kind: input, shape index: {}]
  %s2 = inlined_call_operand.vmem [shape: f32[256,128], index: 2, kind: output, shape index: {}]
  %s3 = sld [smem:[#allocation0]]
  $region83: #{han_forward.8} parent=0
    _
  %s5 = ssub.s32 1, %s3
  %s6 = scalar_select 0, %s5, %s3
  $region1: #{han_forward.8} parent=0
    #allocation2 [shape = 'u8[512]{0}', space=smem, size = 0x200, scoped, tag = 'input window, operand 0, single buffered']
    #allocation3 [shape = 's32[2]{0}', space=sflag, size = 0x8, scoped, tag = 'scoped memory for han_forward.8']
    #allocation4 [shape = 'u8[393216]{0}', space=vmem, size = 0x60000, scoped, tag = 'input window, operand 1']
    %7 = vsyncpa [#allocation3], 0
    loop: start=0, step=1, limit=4
    $region2: #{han_forward.8} parent=1 // loop_pre_header
      _
    $region3: #{han_forward.8} parent=1 // loop_header
      %s9 = sphi 0, %s13
      %p10 = scmp.ge.s32.totalorder %s9, 4
      %s17 = sphi 0, %s17
      %s19 = sphi 0, %s17
      %s20 = sphi 0, %s19
      %s34 = sphi 0, %s20
      %s40 = sphi 0, %s42
      %s43 = sphi 0, %s40
      %s44 = sphi 0, %s43
      %s60 = sphi 0, %s44
      %s66 = sphi 0, %s68
      %s69 = sphi 0, %s66
      %s70 = sphi 0, %s69
      %s86 = sphi 0, %s70
    $region4: #{han_forward.8} parent=1 // loop_header_branch
      %12 = sbr.rel (%p10) target = $region8
    $region5: #{han_forward.8} parent=1 // loop_body
      %s14 = ssub.s32 %s9, 1
      %s15 = ssub.s32 %s9, 2
      %s16 = sadd.s32 %s9, 1
      %s18 = sadd.s32 %s17, 1
      %p21 = scmp.eq.s32.totalorder %s9, 1
      %p22 = scmp.ne.s32.totalorder %s17, %s19
      %p23 = scmp.eq.s32.totalorder %s9, 0
      %p24 = por %p22, %p23
      %p25 = scmp.ne.s32.totalorder %s17, %s19
      %p26 = scmp.eq.s32.totalorder %s14, 1
      %p27 = por %p25, %p26
      %p28 = scmp.ne.s32.totalorder %s19, %s20
      %p29 = scmp.eq.s32.totalorder %s14, 0
      %p30 = por %p28, %p29
      %p31 = scmp.ne.s32.totalorder %s19, %s20
      %p32 = scmp.eq.s32.totalorder %s15, 1
      %p33 = por %p31, %p32
      %p35 = scmp.ne.s32.totalorder %s20, %s34
      %p36 = scmp.eq.s32.totalorder %s15, 0
      %p37 = por %p35, %p36
      %s38 = ssub.s32 %s9, %s16
      %p39 = scmp.eq.s32.totalorder %s38, 0
      %s41 = sadd.s32 %s40, 1
      %s42 = scalar_select %p39, %s40, %s41
      %p45 = pneg %p39
      %p46 = scmp.eq.s32.totalorder %s9, 1
      %p47 = por %p45, %p46
      %p48 = scmp.ne.s32.totalorder %s40, %s43
      %p49 = scmp.eq.s32.totalorder %s9, 0
      %p50 = por %p48, %p49
      %p51 = scmp.ne.s32.totalorder %s40, %s43
      %p52 = scmp.eq.s32.totalorder %s14, 1
      %p53 = por %p51, %p52
      %p54 = scmp.ne.s32.totalorder %s43, %s44
      %p55 = scmp.eq.s32.totalorder %s14, 0
      %p56 = por %p54, %p55
      %p57 = scmp.ne.s32.totalorder %s43, %s44
      %p58 = scmp.eq.s32.totalorder %s15, 1
      %p59 = por %p57, %p58
      %p61 = scmp.ne.s32.totalorder %s44, %s60
      %p62 = scmp.eq.s32.totalorder %s15, 0
      %p63 = por %p61, %p62
      %s64 = ssub.s32 %s9, %s16
      %p65 = scmp.eq.s32.totalorder %s64, 0
      %s67 = sadd.s32 %s66, 1
      %s68 = scalar_select %p65, %s66, %s67
      %p71 = pneg %p65
      %p72 = scmp.eq.s32.totalorder %s9, 1
      %p73 = por %p71, %p72
      %p74 = scmp.ne.s32.totalorder %s66, %s69
      %p75 = scmp.eq.s32.totalorder %s9, 0
      %p76 = por %p74, %p75
      %p77 = scmp.ne.s32.totalorder %s66, %s69
      %p78 = scmp.eq.s32.totalorder %s14, 1
      %p79 = por %p77, %p78
      %p80 = scmp.ne.s32.totalorder %s69, %s70
      %p81 = scmp.eq.s32.totalorder %s14, 0
      %p82 = por %p80, %p81
      %p83 = scmp.ne.s32.totalorder %s69, %s70
      %p84 = scmp.eq.s32.totalorder %s15, 1
      %p85 = por %p83, %p84
      %p87 = scmp.ne.s32.totalorder %s70, %s86
      %p88 = scmp.eq.s32.totalorder %s15, 0
      %p89 = por %p87, %p88
      %p90 = scmp.le.s32.totalorder 1, %s9
      %p91 = scmp.lt.s32.totalorder %s9, 3
      %p92 = pnand %p90, %p91
      %p93 = pneg %p92
      // Predicated region
      $region9: #{han_forward.8} parent=5 // pred_check
        _
      $region10: #{han_forward.8} parent=5 // pred_check_branch
        %95 = sbr.rel (%p92) target = $region12
      $region11: #{han_forward.8} parent=5 // pred_region
        %s96 = ssub.s32 %s9, 1
        // Predicated region
        $region13: #{han_forward.8} parent=11 // pred_check
          %p97 = pneg %p30
        $region14: #{han_forward.8} parent=11 // pred_check_branch
          %99 = sbr.rel (%p97) target = $region16
        $region15: #{han_forward.8} parent=11 // pred_region
          %s101 = ssub.s32 16, 16
          %102 = vsyncadd [#allocation3], %s101
          %s104 = sshll.u32 %s0, 4
          %s105 = int_to_ptr.vmem [resolvable:$true] %s104
          %107 = dma.vmem_to_smem %s105, 16, [#allocation2], [#allocation3]
        $region16: #{han_forward.8} parent=11 // pred_fallthru
          _
      $region12: #{han_forward.8} parent=5 // pred_fallthru
        _
      %p108 = scmp.lt.s32.totalorder %s9, 2
      // Predicated region
      $region17: #{han_forward.8} parent=5 // pred_check
        %p109 = pneg %p108
      $region18: #{han_forward.8} parent=5 // pred_check_branch
        %111 = sbr.rel (%p109) target = $region20
      $region19: #{han_forward.8} parent=5 // pred_region
        // Predicated region
        $region21: #{han_forward.8} parent=19 // pred_check
          %p112 = pneg %p50
        $region22: #{han_forward.8} parent=19 // pred_check_branch
          %114 = sbr.rel (%p112) target = $region24
        $region23: #{han_forward.8} parent=19 // pred_region
          %s115 = sand.u32 %s40, 1
          %s116 = sand.u32 %s40, 1
          %s117 = smul.addr %s116, 384
          %s118 = scalar_lea.vmem [#allocation4], %s117
          %s119 = smul.u32 16, %s9
          %s120 = smul.addr %s119, 8
          %s121 = scalar_lea.vmem %s1, %s120
          // Predicated region
          $region25: #{han_forward.8} parent=23 // pred_check
            _
          $region26: #{han_forward.8} parent=23 // pred_check_branch
            %123 = sbr.rel (0) target = $region28
          $region27: #{han_forward.8} parent=23 // pred_region
            // Predicated region
            $region29: #{han_forward.8} parent=27 // pred_check
              _
            $region30: #{han_forward.8} parent=27 // pred_check_branch
              %125 = sbr.rel (0) target = $region32
            $region31: #{han_forward.8} parent=27 // pred_region
              // Predicated region
              $region44: #{han_forward.8} parent=31 // pred_check
                _
              $region45: #{han_forward.8} parent=31 // pred_check_branch
                %234 = sbr.rel (0) target = $region47
              $region46: #{han_forward.8} parent=31 // pred_region
                loop: start=0, step=1, limit=1
                $region48: #{han_forward.8} parent=46 // loop_pre_header
                  _
                $region49: #{han_forward.8} parent=46 // loop_header
                  %s236 = sphi 0, %s240
                  %p237 = scmp.ge.s32.totalorder %s236, 1
                  %s241 = sphi %s121, %s121
                  %s242 = sphi %s118, %s118
                $region50: #{han_forward.8} parent=46 // loop_header_branch
                  %239 = sbr.rel (%p237) target = $region54
                $region51: #{han_forward.8} parent=46 // loop_body
                  %v243 = vld [vmem:[%s241] sm:$0xff]
                  %244 = vst [vmem:[%s242] sm:$0xff] %v243
                  %v245 = vld [vmem:[%s241 + $0x8] sm:$0xff]
                  %246 = vst [vmem:[%s242 + $0x8] sm:$0xff] %v245
                  %v247 = vld [vmem:[%s241 + $0x10] sm:$0xff]
                  %248 = vst [vmem:[%s242 + $0x10] sm:$0xff] %v247
                  %v249 = vld [vmem:[%s241 + $0x18] sm:$0xff]
                  %250 = vst [vmem:[%s242 + $0x18] sm:$0xff] %v249
                  %v251 = vld [vmem:[%s241 + $0x20] sm:$0xff]
                  %252 = vst [vmem:[%s242 + $0x20] sm:$0xff] %v251
                  %v253 = vld [vmem:[%s241 + $0x28] sm:$0xff]
                  %254 = vst [vmem:[%s242 + $0x28] sm:$0xff] %v253
                  %v255 = vld [vmem:[%s241 + $0x30] sm:$0xff]
                  %256 = vst [vmem:[%s242 + $0x30] sm:$0xff] %v255
                  %v257 = vld [vmem:[%s241 + $0x38] sm:$0xff]
                  %258 = vst [vmem:[%s242 + $0x38] sm:$0xff] %v257
                  %v259 = vld [vmem:[%s241 + $0x40] sm:$0xff]
                  %260 = vst [vmem:[%s242 + $0x40] sm:$0xff] %v259
                  %v261 = vld [vmem:[%s241 + $0x48] sm:$0xff]
                  %262 = vst [vmem:[%s242 + $0x48] sm:$0xff] %v261
                  %v263 = vld [vmem:[%s241 + $0x50] sm:$0xff]
                  %264 = vst [vmem:[%s242 + $0x50] sm:$0xff] %v263
                  %v265 = vld [vmem:[%s241 + $0x58] sm:$0xff]
                  %266 = vst [vmem:[%s242 + $0x58] sm:$0xff] %v265
                  %v267 = vld [vmem:[%s241 + $0x60] sm:$0xff]
                  %268 = vst [vmem:[%s242 + $0x60] sm:$0xff] %v267
                  %v269 = vld [vmem:[%s241 + $0x68] sm:$0xff]
                  %270 = vst [vmem:[%s242 + $0x68] sm:$0xff] %v269
                  %v271 = vld [vmem:[%s241 + $0x70] sm:$0xff]
                  %272 = vst [vmem:[%s242 + $0x70] sm:$0xff] %v271
                  %v273 = vld [vmem:[%s241 + $0x78] sm:$0xff]
                  %274 = vst [vmem:[%s242 + $0x78] sm:$0xff] %v273
                  %v275 = vld [vmem:[%s241 + $0x100] sm:$0xff]
                  %276 = vst [vmem:[%s242 + $0x80] sm:$0xff] %v275
                  %v277 = vld [vmem:[%s241 + $0x108] sm:$0xff]
                  %278 = vst [vmem:[%s242 + $0x88] sm:$0xff] %v277
                  %v279 = vld [vmem:[%s241 + $0x110] sm:$0xff]
                  %280 = vst [vmem:[%s242 + $0x90] sm:$0xff] %v279
                  %v281 = vld [vmem:[%s241 + $0x118] sm:$0xff]
                  %282 = vst [vmem:[%s242 + $0x98] sm:$0xff] %v281
                  %v283 = vld [vmem:[%s241 + $0x120] sm:$0xff]
                  %284 = vst [vmem:[%s242 + $0xa0] sm:$0xff] %v283
                  %v285 = vld [vmem:[%s241 + $0x128] sm:$0xff]
                  %286 = vst [vmem:[%s242 + $0xa8] sm:$0xff] %v285
                  %v287 = vld [vmem:[%s241 + $0x130] sm:$0xff]
                  %288 = vst [vmem:[%s242 + $0xb0] sm:$0xff] %v287
                  %v289 = vld [vmem:[%s241 + $0x138] sm:$0xff]
                  %290 = vst [vmem:[%s242 + $0xb8] sm:$0xff] %v289
                  %v291 = vld [vmem:[%s241 + $0x140] sm:$0xff]
                  %292 = vst [vmem:[%s242 + $0xc0] sm:$0xff] %v291
                  %v293 = vld [vmem:[%s241 + $0x148] sm:$0xff]
                  %294 = vst [vmem:[%s242 + $0xc8] sm:$0xff] %v293
                  %v295 = vld [vmem:[%s241 + $0x150] sm:$0xff]
                  %296 = vst [vmem:[%s242 + $0xd0] sm:$0xff] %v295
                  %v297 = vld [vmem:[%s241 + $0x158] sm:$0xff]
                  %298 = vst [vmem:[%s242 + $0xd8] sm:$0xff] %v297
                  %v299 = vld [vmem:[%s241 + $0x160] sm:$0xff]
                  %300 = vst [vmem:[%s242 + $0xe0] sm:$0xff] %v299
                  %v301 = vld [vmem:[%s241 + $0x168] sm:$0xff]
                  %302 = vst [vmem:[%s242 + $0xe8] sm:$0xff] %v301
                  %v303 = vld [vmem:[%s241 + $0x170] sm:$0xff]
                  %304 = vst [vmem:[%s242 + $0xf0] sm:$0xff] %v303
                  %v305 = vld [vmem:[%s241 + $0x178] sm:$0xff]
                  %306 = vst [vmem:[%s242 + $0xf8] sm:$0xff] %v305
                  %v307 = vld [vmem:[%s241 + $0x200] sm:$0xff]
                  %308 = vst [vmem:[%s242 + $0x100] sm:$0xff] %v307
                  %v309 = vld [vmem:[%s241 + $0x208] sm:$0xff]
                  %310 = vst [vmem:[%s242 + $0x108] sm:$0xff] %v309
                  %v311 = vld [vmem:[%s241 + $0x210] sm:$0xff]
                  %312 = vst [vmem:[%s242 + $0x110] sm:$0xff] %v311
                  %v313 = vld [vmem:[%s241 + $0x218] sm:$0xff]
                  %314 = vst [vmem:[%s242 + $0x118] sm:$0xff] %v313
                  %v315 = vld [vmem:[%s241 + $0x220] sm:$0xff]
                  %316 = vst [vmem:[%s242 + $0x120] sm:$0xff] %v315
                  %v317 = vld [vmem:[%s241 + $0x228] sm:$0xff]
                  %318 = vst [vmem:[%s242 + $0x128] sm:$0xff] %v317
                  %v319 = vld [vmem:[%s241 + $0x230] sm:$0xff]
                  %320 = vst [vmem:[%s242 + $0x130] sm:$0xff] %v319
                  %v321 = vld [vmem:[%s241 + $0x238] sm:$0xff]
                  %322 = vst [vmem:[%s242 + $0x138] sm:$0xff] %v321
                  %v323 = vld [vmem:[%s241 + $0x240] sm:$0xff]
                  %324 = vst [vmem:[%s242 + $0x140] sm:$0xff] %v323
                  %v325 = vld [vmem:[%s241 + $0x248] sm:$0xff]
                  %326 = vst [vmem:[%s242 + $0x148] sm:$0xff] %v325
                  %v327 = vld [vmem:[%s241 + $0x250] sm:$0xff]
                  %328 = vst [vmem:[%s242 + $0x150] sm:$0xff] %v327
                  %v329 = vld [vmem:[%s241 + $0x258] sm:$0xff]
                  %330 = vst [vmem:[%s242 + $0x158] sm:$0xff] %v329
                  %v331 = vld [vmem:[%s241 + $0x260] sm:$0xff]
                  %332 = vst [vmem:[%s242 + $0x160] sm:$0xff] %v331
                  %v333 = vld [vmem:[%s241 + $0x268] sm:$0xff]
                  %334 = vst [vmem:[%s242 + $0x168] sm:$0xff] %v333
                  %v335 = vld [vmem:[%s241 + $0x270] sm:$0xff]
                  %336 = vst [vmem:[%s242 + $0x170] sm:$0xff] %v335
                  %v337 = vld [vmem:[%s241 + $0x278] sm:$0xff]
                  %338 = vst [vmem:[%s242 + $0x178] sm:$0xff] %v337
                $region52: #{han_forward.8} parent=46 // loop_footer
                  %s240 = sadd.s32 1, %s236
                $region53: #{han_forward.8} parent=46 // loop_footer_branch
                  %235 = sbr.rel target = $region49
                $region54: #{han_forward.8} parent=46 // loop_exit
                  _
              $region47: #{han_forward.8} parent=31 // pred_fallthru
                _
              // Predicated region
              $region55: #{han_forward.8} parent=31 // pred_check
                _
              $region56: #{han_forward.8} parent=31 // pred_check_branch
                %340 = sbr.rel target = $region58
              $region57: #{han_forward.8} parent=31 // pred_region
                _
              $region58: #{han_forward.8} parent=31 // pred_fallthru
                _
            $region32: #{han_forward.8} parent=27 // pred_fallthru
              _
            // Predicated region
            $region33: #{han_forward.8} parent=27 // pred_check
              _
            $region34: #{han_forward.8} parent=27 // pred_check_branch
              %127 = sbr.rel target = $region36
            $region35: #{han_forward.8} parent=27 // pred_region
              loop: start=0, step=1, limit=1
              $region37: #{han_forward.8} parent=35 // loop_pre_header
                _
              $region38: #{han_forward.8} parent=35 // loop_header
                %s130 = sphi 0, %s134
                %p131 = scmp.ge.s32.totalorder %s130, 1
                %s135 = sphi %s121, %s121
                %s136 = sphi %s118, %s118
              $region39: #{han_forward.8} parent=35 // loop_header_branch
                %133 = sbr.rel (%p131) target = $region43
              $region40: #{han_forward.8} parent=35 // loop_body
                %v137 = vld [vmem:[%s135] sm:$0xff]
                %138 = vst [vmem:[%s136] sm:$0xff] %v137
                %v139 = vld [vmem:[%s135 + $0x8] sm:$0xff]
                %140 = vst [vmem:[%s136 + $0x8] sm:$0xff] %v139
                %v141 = vld [vmem:[%s135 + $0x10] sm:$0xff]
                %142 = vst [vmem:[%s136 + $0x10] sm:$0xff] %v141
                %v143 = vld [vmem:[%s135 + $0x18] sm:$0xff]
                %144 = vst [vmem:[%s136 + $0x18] sm:$0xff] %v143
                %v145 = vld [vmem:[%s135 + $0x20] sm:$0xff]
                %146 = vst [vmem:[%s136 + $0x20] sm:$0xff] %v145
                %v147 = vld [vmem:[%s135 + $0x28] sm:$0xff]
                %148 = vst [vmem:[%s136 + $0x28] sm:$0xff] %v147
                %v149 = vld [vmem:[%s135 + $0x30] sm:$0xff]
                %150 = vst [vmem:[%s136 + $0x30] sm:$0xff] %v149
                %v151 = vld [vmem:[%s135 + $0x38] sm:$0xff]
                %152 = vst [vmem:[%s136 + $0x38] sm:$0xff] %v151
                %v153 = vld [vmem:[%s135 + $0x40] sm:$0xff]
                %154 = vst [vmem:[%s136 + $0x40] sm:$0xff] %v153
                %v155 = vld [vmem:[%s135 + $0x48] sm:$0xff]
                %156 = vst [vmem:[%s136 + $0x48] sm:$0xff] %v155
                %v157 = vld [vmem:[%s135 + $0x50] sm:$0xff]
                %158 = vst [vmem:[%s136 + $0x50] sm:$0xff] %v157
                %v159 = vld [vmem:[%s135 + $0x58] sm:$0xff]
                %160 = vst [vmem:[%s136 + $0x58] sm:$0xff] %v159
                %v161 = vld [vmem:[%s135 + $0x60] sm:$0xff]
                %162 = vst [vmem:[%s136 + $0x60] sm:$0xff] %v161
                %v163 = vld [vmem:[%s135 + $0x68] sm:$0xff]
                %164 = vst [vmem:[%s136 + $0x68] sm:$0xff] %v163
                %v165 = vld [vmem:[%s135 + $0x70] sm:$0xff]
                %166 = vst [vmem:[%s136 + $0x70] sm:$0xff] %v165
                %v167 = vld [vmem:[%s135 + $0x78] sm:$0xff]
                %168 = vst [vmem:[%s136 + $0x78] sm:$0xff] %v167
                %v169 = vld [vmem:[%s135 + $0x100] sm:$0xff]
                %170 = vst [vmem:[%s136 + $0x80] sm:$0xff] %v169
                %v171 = vld [vmem:[%s135 + $0x108] sm:$0xff]
                %172 = vst [vmem:[%s136 + $0x88] sm:$0xff] %v171
                %v173 = vld [vmem:[%s135 + $0x110] sm:$0xff]
                %174 = vst [vmem:[%s136 + $0x90] sm:$0xff] %v173
                %v175 = vld [vmem:[%s135 + $0x118] sm:$0xff]
                %176 = vst [vmem:[%s136 + $0x98] sm:$0xff] %v175
                %v177 = vld [vmem:[%s135 + $0x120] sm:$0xff]
                %178 = vst [vmem:[%s136 + $0xa0] sm:$0xff] %v177
                %v179 = vld [vmem:[%s135 + $0x128] sm:$0xff]
                %180 = vst [vmem:[%s136 + $0xa8] sm:$0xff] %v179
                %v181 = vld [vmem:[%s135 + $0x130] sm:$0xff]
                %182 = vst [vmem:[%s136 + $0xb0] sm:$0xff] %v181
                %v183 = vld [vmem:[%s135 + $0x138] sm:$0xff]
                %184 = vst [vmem:[%s136 + $0xb8] sm:$0xff] %v183
                %v185 = vld [vmem:[%s135 + $0x140] sm:$0xff]
                %186 = vst [vmem:[%s136 + $0xc0] sm:$0xff] %v185
                %v187 = vld [vmem:[%s135 + $0x148] sm:$0xff]
                %188 = vst [vmem:[%s136 + $0xc8] sm:$0xff] %v187
                %v189 = vld [vmem:[%s135 + $0x150] sm:$0xff]
                %190 = vst [vmem:[%s136 + $0xd0] sm:$0xff] %v189
                %v191 = vld [vmem:[%s135 + $0x158] sm:$0xff]
                %192 = vst [vmem:[%s136 + $0xd8] sm:$0xff] %v191
                %v193 = vld [vmem:[%s135 + $0x160] sm:$0xff]
                %194 = vst [vmem:[%s136 + $0xe0] sm:$0xff] %v193
                %v195 = vld [vmem:[%s135 + $0x168] sm:$0xff]
                %196 = vst [vmem:[%s136 + $0xe8] sm:$0xff] %v195
                %v197 = vld [vmem:[%s135 + $0x170] sm:$0xff]
                %198 = vst [vmem:[%s136 + $0xf0] sm:$0xff] %v197
                %v199 = vld [vmem:[%s135 + $0x178] sm:$0xff]
                %200 = vst [vmem:[%s136 + $0xf8] sm:$0xff] %v199
                %v201 = vld [vmem:[%s135 + $0x200] sm:$0xff]
                %202 = vst [vmem:[%s136 + $0x100] sm:$0xff] %v201
                %v203 = vld [vmem:[%s135 + $0x208] sm:$0xff]
                %204 = vst [vmem:[%s136 + $0x108] sm:$0xff] %v203
                %v205 = vld [vmem:[%s135 + $0x210] sm:$0xff]
                %206 = vst [vmem:[%s136 + $0x110] sm:$0xff] %v205
                %v207 = vld [vmem:[%s135 + $0x218] sm:$0xff]
                %208 = vst [vmem:[%s136 + $0x118] sm:$0xff] %v207
                %v209 = vld [vmem:[%s135 + $0x220] sm:$0xff]
                %210 = vst [vmem:[%s136 + $0x120] sm:$0xff] %v209
                %v211 = vld [vmem:[%s135 + $0x228] sm:$0xff]
                %212 = vst [vmem:[%s136 + $0x128] sm:$0xff] %v211
                %v213 = vld [vmem:[%s135 + $0x230] sm:$0xff]
                %214 = vst [vmem:[%s136 + $0x130] sm:$0xff] %v213
                %v215 = vld [vmem:[%s135 + $0x238] sm:$0xff]
                %216 = vst [vmem:[%s136 + $0x138] sm:$0xff] %v215
                %v217 = vld [vmem:[%s135 + $0x240] sm:$0xff]
                %218 = vst [vmem:[%s136 + $0x140] sm:$0xff] %v217
                %v219 = vld [vmem:[%s135 + $0x248] sm:$0xff]
                %220 = vst [vmem:[%s136 + $0x148] sm:$0xff] %v219
                %v221 = vld [vmem:[%s135 + $0x250] sm:$0xff]
                %222 = vst [vmem:[%s136 + $0x150] sm:$0xff] %v221
                %v223 = vld [vmem:[%s135 + $0x258] sm:$0xff]
                %224 = vst [vmem:[%s136 + $0x158] sm:$0xff] %v223
                %v225 = vld [vmem:[%s135 + $0x260] sm:$0xff]
                %226 = vst [vmem:[%s136 + $0x160] sm:$0xff] %v225
                %v227 = vld [vmem:[%s135 + $0x268] sm:$0xff]
                %228 = vst [vmem:[%s136 + $0x168] sm:$0xff] %v227
                %v229 = vld [vmem:[%s135 + $0x270] sm:$0xff]
                %230 = vst [vmem:[%s136 + $0x170] sm:$0xff] %v229
                %v231 = vld [vmem:[%s135 + $0x278] sm:$0xff]
                %232 = vst [vmem:[%s136 + $0x178] sm:$0xff] %v231
              $region41: #{han_forward.8} parent=35 // loop_footer
                %s134 = sadd.s32 1, %s130
              $region42: #{han_forward.8} parent=35 // loop_footer_branch
                %129 = sbr.rel target = $region38
              $region43: #{han_forward.8} parent=35 // loop_exit
                _
            $region36: #{han_forward.8} parent=27 // pred_fallthru
              _
          $region28: #{han_forward.8} parent=23 // pred_fallthru
            _
          %341 = vnop
        $region24: #{han_forward.8} parent=19 // pred_fallthru
          _
      $region20: #{han_forward.8} parent=5 // pred_fallthru
        _
      %p342 = scmp.le.s32.totalorder 1, %s9
      %p343 = scmp.lt.s32.totalorder %s9, 3
      %p344 = pnand %p342, %p343
      %p345 = pneg %p344
      // Predicated region
      $region59: #{han_forward.8} parent=5 // pred_check
        _
      $region60: #{han_forward.8} parent=5 // pred_check_branch
        %347 = sbr.rel (%p344) target = $region62
      $region61: #{han_forward.8} parent=5 // pred_region
        %s348 = ssub.s32 %s9, 1
        // Predicated region
        $region63: #{han_forward.8} parent=61 // pred_check
          %p349 = pneg %p30
        $region64: #{han_forward.8} parent=61 // pred_check_branch
          %351 = sbr.rel (%p349) target = $region66
        $region65: #{han_forward.8} parent=61 // pred_region
          %352 = dma.done [#allocation3], 16
        $region66: #{han_forward.8} parent=61 // pred_fallthru
          _
        %s353 = sand.u32 %s43, 1
        %s354 = sand.u32 %s43, 1
        %s355 = smul.addr %s354, 384
        %s356 = scalar_lea.vmem [#allocation4], %s355
        // Predicated region
        $region67: #{han_forward.8} parent=61 // pred_check
          %p357 = pneg %p56
        $region68: #{han_forward.8} parent=61 // pred_check_branch
          %359 = sbr.rel (%p357) target = $region70
        $region69: #{han_forward.8} parent=61 // pred_region
          _
        $region70: #{han_forward.8} parent=61 // pred_fallthru
          _
        %360 = sfence
        %p361 = pneg %p30
        %p362 = pneg %p27
        %s363 = sand.u32 %s43, 1
        %s364 = sand.u32 %s43, 1
        %s365 = smul.addr %s364, 384
        %s366 = scalar_lea.vmem [#allocation4], %s365
        %p367 = pneg %p56
        %p368 = pneg %p53
        %p369 = pneg %p82
        %p370 = pneg %p79
        %s371 = smul.u32 16, %s14
        %p372 = scmp.lt.s32.totalorder %s371, 31
        %s373 = scalar_select %p372, %s371, 31
        %s374 = smul.addr %s373, 8
        %s375 = scalar_lea.vmem %s2, %s374
        %s376 = smul.u32 16, %s14
        %s377 = smul.u32 16, %s14
        %p378 = scmp.lt.s32.totalorder %s377, 31
        %s379 = scalar_select %p378, %s377, 31
        %s380 = smul.addr %s379, 8
        %s381 = scalar_lea.vmem %s2, %s380
        %s382 = smul.u32 16, %s14
        %s383 = sld [smem:[#allocation2]]
        %v384 = vld [vmem:[%s356] sm:$0xff]
        %v385 = vld [vmem:[%s356 + $0x8] sm:$0xff]
        %v386 = vld [vmem:[%s356 + $0x10] sm:$0xff]
        %v387 = vld [vmem:[%s356 + $0x18] sm:$0xff]
        %v388 = vld [vmem:[%s356 + $0x20] sm:$0xff]
        %v389 = vld [vmem:[%s356 + $0x28] sm:$0xff]
        %v390 = vld [vmem:[%s356 + $0x30] sm:$0xff]
        %v391 = vld [vmem:[%s356 + $0x38] sm:$0xff]
        %v392 = vld [vmem:[%s356 + $0x40] sm:$0xff]
        %v393 = vld [vmem:[%s356 + $0x48] sm:$0xff]
        %v394 = vld [vmem:[%s356 + $0x50] sm:$0xff]
        %v395 = vld [vmem:[%s356 + $0x58] sm:$0xff]
        %v396 = vld [vmem:[%s356 + $0x60] sm:$0xff]
        %v397 = vld [vmem:[%s356 + $0x68] sm:$0xff]
        %v398 = vld [vmem:[%s356 + $0x70] sm:$0xff]
        %v399 = vld [vmem:[%s356 + $0x78] sm:$0xff]
        %v400 = vstv %s383
        %v401 = vmul.f32 %v400, %v384
        %v402 = vmul.f32 %v400, %v385
        %v403 = vmul.f32 %v400, %v386
        %v404 = vmul.f32 %v400, %v387
        %v405 = vmul.f32 %v400, %v388
        %v406 = vmul.f32 %v400, %v389
        %v407 = vmul.f32 %v400, %v390
        %v408 = vmul.f32 %v400, %v391
        %v409 = vmul.f32 %v400, %v392
        %v410 = vmul.f32 %v400, %v393
        %v411 = vmul.f32 %v400, %v394
        %v412 = vmul.f32 %v400, %v395
        %v413 = vmul.f32 %v400, %v396
        %v414 = vmul.f32 %v400, %v397
        %v415 = vmul.f32 %v400, %v398
        %v416 = vmul.f32 %v400, %v399
        %s417 = sld [smem:[#allocation2 + $0x1]]
        %s418 = scalar_lea.vmem %s356, 128 [#allocation4]
        %v419 = vld [vmem:[%s418] sm:$0xff]
        %v420 = vld [vmem:[%s418 + $0x8] sm:$0xff]
        %v421 = vld [vmem:[%s418 + $0x10] sm:$0xff]
        %v422 = vld [vmem:[%s418 + $0x18] sm:$0xff]
        %v423 = vld [vmem:[%s418 + $0x20] sm:$0xff]
        %v424 = vld [vmem:[%s418 + $0x28] sm:$0xff]
        %v425 = vld [vmem:[%s418 + $0x30] sm:$0xff]
        %v426 = vld [vmem:[%s418 + $0x38] sm:$0xff]
        %v427 = vld [vmem:[%s418 + $0x40] sm:$0xff]
        %v428 = vld [vmem:[%s418 + $0x48] sm:$0xff]
        %v429 = vld [vmem:[%s418 + $0x50] sm:$0xff]
        %v430 = vld [vmem:[%s418 + $0x58] sm:$0xff]
        %v431 = vld [vmem:[%s418 + $0x60] sm:$0xff]
        %v432 = vld [vmem:[%s418 + $0x68] sm:$0xff]
        %v433 = vld [vmem:[%s418 + $0x70] sm:$0xff]
        %v434 = vld [vmem:[%s418 + $0x78] sm:$0xff]
        %v435 = vstv %s417
        %v436 = vmul.f32 %v435, %v419
        %v437 = vmul.f32 %v435, %v420
        %v438 = vmul.f32 %v435, %v421
        %v439 = vmul.f32 %v435, %v422
        %v440 = vmul.f32 %v435, %v423
        %v441 = vmul.f32 %v435, %v424
        %v442 = vmul.f32 %v435, %v425
        %v443 = vmul.f32 %v435, %v426
        %v444 = vmul.f32 %v435, %v427
        %v445 = vmul.f32 %v435, %v428
        %v446 = vmul.f32 %v435, %v429
        %v447 = vmul.f32 %v435, %v430
        %v448 = vmul.f32 %v435, %v431
        %v449 = vmul.f32 %v435, %v432
        %v450 = vmul.f32 %v435, %v433
        %v451 = vmul.f32 %v435, %v434
        %v452 = vadd.f32 %v401, %v436
        %v453 = vadd.f32 %v402, %v437
        %v454 = vadd.f32 %v403, %v438
        %v455 = vadd.f32 %v404, %v439
        %v456 = vadd.f32 %v405, %v440
        %v457 = vadd.f32 %v406, %v441
        %v458 = vadd.f32 %v407, %v442
        %v459 = vadd.f32 %v408, %v443
        %v460 = vadd.f32 %v409, %v444
        %v461 = vadd.f32 %v410, %v445
        %v462 = vadd.f32 %v411, %v446
        %v463 = vadd.f32 %v412, %v447
        %v464 = vadd.f32 %v413, %v448
        %v465 = vadd.f32 %v414, %v449
        %v466 = vadd.f32 %v415, %v450
        %v467 = vadd.f32 %v416, %v451
        %s468 = sld [smem:[#allocation2 + $0x2]]
        %s469 = scalar_lea.vmem %s356, 256 [#allocation4]
        %v470 = vld [vmem:[%s469] sm:$0xff]
        %v471 = vld [vmem:[%s469 + $0x8] sm:$0xff]
        %v472 = vld [vmem:[%s469 + $0x10] sm:$0xff]
        %v473 = vld [vmem:[%s469 + $0x18] sm:$0xff]
        %v474 = vld [vmem:[%s469 + $0x20] sm:$0xff]
        %v475 = vld [vmem:[%s469 + $0x28] sm:$0xff]
        %v476 = vld [vmem:[%s469 + $0x30] sm:$0xff]
        %v477 = vld [vmem:[%s469 + $0x38] sm:$0xff]
        %v478 = vld [vmem:[%s469 + $0x40] sm:$0xff]
        %v479 = vld [vmem:[%s469 + $0x48] sm:$0xff]
        %v480 = vld [vmem:[%s469 + $0x50] sm:$0xff]
        %v481 = vld [vmem:[%s469 + $0x58] sm:$0xff]
        %v482 = vld [vmem:[%s469 + $0x60] sm:$0xff]
        %v483 = vld [vmem:[%s469 + $0x68] sm:$0xff]
        %v484 = vld [vmem:[%s469 + $0x70] sm:$0xff]
        %v485 = vld [vmem:[%s469 + $0x78] sm:$0xff]
        %v486 = vstv %s468
        %v487 = vmul.f32 %v486, %v470
        %v488 = vmul.f32 %v486, %v471
        %v489 = vmul.f32 %v486, %v472
        %v490 = vmul.f32 %v486, %v473
        %v491 = vmul.f32 %v486, %v474
        %v492 = vmul.f32 %v486, %v475
        %v493 = vmul.f32 %v486, %v476
        %v494 = vmul.f32 %v486, %v477
        %v495 = vmul.f32 %v486, %v478
        %v496 = vmul.f32 %v486, %v479
        %v497 = vmul.f32 %v486, %v480
        %v498 = vmul.f32 %v486, %v481
        %v499 = vmul.f32 %v486, %v482
        %v500 = vmul.f32 %v486, %v483
        %v501 = vmul.f32 %v486, %v484
        %v502 = vmul.f32 %v486, %v485
        %v503 = vadd.f32 %v452, %v487
        %v504 = vadd.f32 %v453, %v488
        %v505 = vadd.f32 %v454, %v489
        %v506 = vadd.f32 %v455, %v490
        %v507 = vadd.f32 %v456, %v491
        %v508 = vadd.f32 %v457, %v492
        %v509 = vadd.f32 %v458, %v493
        %v510 = vadd.f32 %v459, %v494
        %v511 = vadd.f32 %v460, %v495
        %v512 = vadd.f32 %v461, %v496
        %v513 = vadd.f32 %v462, %v497
        %v514 = vadd.f32 %v463, %v498
        %v515 = vadd.f32 %v464, %v499
        %v516 = vadd.f32 %v465, %v500
        %v517 = vadd.f32 %v466, %v501
        %v518 = vadd.f32 %v467, %v502
        %519 = vst [vmem:[%s381] sm:$0xff] %v503
        %520 = vst [vmem:[%s381 + $0x8] sm:$0xff] %v504
        %521 = vst [vmem:[%s381 + $0x10] sm:$0xff] %v505
        %522 = vst [vmem:[%s381 + $0x18] sm:$0xff] %v506
        %523 = vst [vmem:[%s381 + $0x20] sm:$0xff] %v507
        %524 = vst [vmem:[%s381 + $0x28] sm:$0xff] %v508
        %525 = vst [vmem:[%s381 + $0x30] sm:$0xff] %v509
        %526 = vst [vmem:[%s381 + $0x38] sm:$0xff] %v510
        %527 = vst [vmem:[%s381 + $0x40] sm:$0xff] %v511
        %528 = vst [vmem:[%s381 + $0x48] sm:$0xff] %v512
        %529 = vst [vmem:[%s381 + $0x50] sm:$0xff] %v513
        %530 = vst [vmem:[%s381 + $0x58] sm:$0xff] %v514
        %531 = vst [vmem:[%s381 + $0x60] sm:$0xff] %v515
        %532 = vst [vmem:[%s381 + $0x68] sm:$0xff] %v516
        %533 = vst [vmem:[%s381 + $0x70] sm:$0xff] %v517
        %534 = vst [vmem:[%s381 + $0x78] sm:$0xff] %v518
        %s535 = smul.u32 16, %s14
        %p536 = scmp.lt.s32.totalorder %s535, 31
        %s537 = scalar_select %p536, %s535, 31
        %s538 = smul.addr %s537, 8
        %s539 = scalar_lea.vmem %s2, %s538
        // Predicated region
        $region71: #{han_forward.8} parent=61 // pred_check
          %p540 = pneg %p79
        $region72: #{han_forward.8} parent=61 // pred_check_branch
          %542 = sbr.rel (%p540) target = $region74
        $region73: #{han_forward.8} parent=61 // pred_region
          %s543 = smul.u32 16, %s14
        $region74: #{han_forward.8} parent=61 // pred_fallthru
          _
      $region62: #{han_forward.8} parent=5 // pred_fallthru
        _
      %p544 = scmp.le.s32.totalorder 2, %s9
      // Predicated region
      $region75: #{han_forward.8} parent=5 // pred_check
        %p545 = pneg %p544
      $region76: #{han_forward.8} parent=5 // pred_check_branch
        %547 = sbr.rel (%p545) target = $region78
      $region77: #{han_forward.8} parent=5 // pred_region
        %s548 = ssub.s32 %s9, 2
        // Predicated region
        $region79: #{han_forward.8} parent=77 // pred_check
          %p549 = pneg %p85
        $region80: #{han_forward.8} parent=77 // pred_check_branch
          %551 = sbr.rel (%p549) target = $region82
        $region81: #{han_forward.8} parent=77 // pred_region
          %s552 = smul.u32 16, %s15
          %p553 = scmp.lt.s32.totalorder %s552, 31
          %s554 = scalar_select %p553, %s552, 31
          %s555 = smul.addr %s554, 8
          %s556 = scalar_lea.vmem %s2, %s555
        $region82: #{han_forward.8} parent=77 // pred_fallthru
          _
      $region78: #{han_forward.8} parent=5 // pred_fallthru
        _
    $region6: #{han_forward.8} parent=1 // loop_footer
      %s13 = sadd.s32 1, %s9
    $region7: #{han_forward.8} parent=1 // loop_footer_branch
      %8 = sbr.rel target = $region3
    $region8: #{han_forward.8} parent=1 // loop_exit
      _
    %557 = vsyncpa [#allocation3], 1
    %s558 = scalar_lea.sflag [#allocation3], 1
    %559 = vsyncpa %s558, 1

// kernel: han_forward.9
$region0: #{han_forward.9}
  #allocation0 [shape = 'u32[]', space=smem, size = 0x4, offset = 0x4, fixed_abs, tag = 'smem constant byte address 0x4 - core index']
  #allocation1 [shape = 'u32[144,128]{1,0:T(1,128)}', space=vmem, size = 0x12000, scoped, tag = 'internal scratch']
  %s0 = inlined_call_operand.vmem [shape: f32[256,128], index: 0, kind: input, shape index: {}]
  %s1 = inlined_call_operand.vmem [shape: bf16[3,128,128], index: 1, kind: input, shape index: {}]
  %s2 = inlined_call_operand.vmem [shape: bf16[3,256,128], index: 2, kind: output, shape index: {}]
  %s3 = sld [smem:[#allocation0]]
  $region41: #{han_forward.9} parent=0
    _
  %s5 = ssub.s32 1, %s3
  %s6 = scalar_select 0, %s5, %s3
  loop: start=0, step=1, limit=8
  $region2: #{han_forward.9} parent=0 // loop_pre_header
    _
  $region3: #{han_forward.9} parent=0 // loop_header
    %s8 = sphi 0, %s12
    %p9 = scmp.ge.s32.totalorder %s8, 8
    %s15 = sphi 0, %s27
    %s16 = sphi 0, %s23
    %s17 = sphi 0, %s15
    %s18 = sphi 0, %s16
    %s19 = sphi 0, %s17
    %s20 = sphi 0, %s18
    %s30 = sphi 0, %s32
    %s33 = sphi 0, %s30
    %s34 = sphi 0, %s33
    %s50 = sphi 0, %s34
    %s56 = sphi 0, %s58
    %s59 = sphi 0, %s56
    %s60 = sphi 0, %s59
    %s76 = sphi 0, %s60
    %s84 = sphi 0, %s86
    %s87 = sphi 0, %s84
    %s88 = sphi 0, %s87
    %s104 = sphi 0, %s88
  $region4: #{han_forward.9} parent=0 // loop_header_branch
    %11 = sbr.rel (%p9) target = $region8
  $region5: #{han_forward.9} parent=0 // loop_body
    %s13 = ssub.s32 %s8, 1
    %s14 = ssub.s32 %s8, 2
    %s21 = sadd.s32 1, %s16
    %p22 = scmp.ge.s32.totalorder %s21, 2
    %s23 = scalar_select %p22, 0, %s21
    %s24 = sadd.s32 1, %s15
    %s25 = scalar_select %p22, %s24, %s15
    %p26 = scmp.ge.s32.totalorder %s25, 3
    %s27 = scalar_select %p26, 0, %s25
    %s28 = ssub.s32 %s16, %s23
    %p29 = scmp.eq.s32.totalorder %s28, 0
    %s31 = sadd.s32 %s30, 1
    %s32 = scalar_select %p29, %s30, %s31
    %p35 = pneg %p29
    %p36 = scmp.eq.s32.totalorder %s8, 5
    %p37 = por %p35, %p36
    %p38 = scmp.ne.s32.totalorder %s30, %s33
    %p39 = scmp.eq.s32.totalorder %s8, 0
    %p40 = por %p38, %p39
    %p41 = scmp.ne.s32.totalorder %s30, %s33
    %p42 = scmp.eq.s32.totalorder %s13, 5
    %p43 = por %p41, %p42
    %p44 = scmp.ne.s32.totalorder %s33, %s34
    %p45 = scmp.eq.s32.totalorder %s13, 0
    %p46 = por %p44, %p45
    %p47 = scmp.ne.s32.totalorder %s33, %s34
    %p48 = scmp.eq.s32.totalorder %s14, 5
    %p49 = por %p47, %p48
    %p51 = scmp.ne.s32.totalorder %s34, %s50
    %p52 = scmp.eq.s32.totalorder %s14, 0
    %p53 = por %p51, %p52
    %s54 = ssub.s32 %s15, %s27
    %p55 = scmp.eq.s32.totalorder %s54, 0
    %s57 = sadd.s32 %s56, 1
    %s58 = scalar_select %p55, %s56, %s57
    %p61 = pneg %p55
    %p62 = scmp.eq.s32.totalorder %s8, 5
    %p63 = por %p61, %p62
    %p64 = scmp.ne.s32.totalorder %s56, %s59
    %p65 = scmp.eq.s32.totalorder %s8, 0
    %p66 = por %p64, %p65
    %p67 = scmp.ne.s32.totalorder %s56, %s59
    %p68 = scmp.eq.s32.totalorder %s13, 5
    %p69 = por %p67, %p68
    %p70 = scmp.ne.s32.totalorder %s59, %s60
    %p71 = scmp.eq.s32.totalorder %s13, 0
    %p72 = por %p70, %p71
    %p73 = scmp.ne.s32.totalorder %s59, %s60
    %p74 = scmp.eq.s32.totalorder %s14, 5
    %p75 = por %p73, %p74
    %p77 = scmp.ne.s32.totalorder %s60, %s76
    %p78 = scmp.eq.s32.totalorder %s14, 0
    %p79 = por %p77, %p78
    %s80 = ssub.s32 %s15, %s27
    %s81 = ssub.s32 %s16, %s23
    %s82 = sor.u32 %s80, %s81
    %p83 = scmp.eq.s32.totalorder %s82, 0
    %s85 = sadd.s32 %s84, 1
    %s86 = scalar_select %p83, %s84, %s85
    %p89 = pneg %p83
    %p90 = scmp.eq.s32.totalorder %s8, 5
    %p91 = por %p89, %p90
    %p92 = scmp.ne.s32.totalorder %s84, %s87
    %p93 = scmp.eq.s32.totalorder %s8, 0
    %p94 = por %p92, %p93
    %p95 = scmp.ne.s32.totalorder %s84, %s87
    %p96 = scmp.eq.s32.totalorder %s13, 5
    %p97 = por %p95, %p96
    %p98 = scmp.ne.s32.totalorder %s87, %s88
    %p99 = scmp.eq.s32.totalorder %s13, 0
    %p100 = por %p98, %p99
    %p101 = scmp.ne.s32.totalorder %s87, %s88
    %p102 = scmp.eq.s32.totalorder %s14, 5
    %p103 = por %p101, %p102
    %p105 = scmp.ne.s32.totalorder %s88, %s104
    %p106 = scmp.eq.s32.totalorder %s14, 0
    %p107 = por %p105, %p106
    %p108 = scmp.le.s32.totalorder 1, %s8
    %p109 = scmp.lt.s32.totalorder %s8, 7
    %p110 = pnand %p108, %p109
    %p111 = pneg %p110
    // Predicated region
    $region9: #{han_forward.9} parent=5 // pred_check
      _
    $region10: #{han_forward.9} parent=5 // pred_check_branch
      %113 = sbr.rel (%p110) target = $region12
    $region11: #{han_forward.9} parent=5 // pred_region
      %s114 = ssub.s32 %s8, 1
    $region12: #{han_forward.9} parent=5 // pred_fallthru
      _
    %p115 = scmp.lt.s32.totalorder %s8, 6
    // Predicated region
    $region13: #{han_forward.9} parent=5 // pred_check
      %p116 = pneg %p115
    $region14: #{han_forward.9} parent=5 // pred_check_branch
      %118 = sbr.rel (%p116) target = $region16
    $region15: #{han_forward.9} parent=5 // pred_region
      // Predicated region
      $region17: #{han_forward.9} parent=15 // pred_check
        %p119 = pneg %p40
      $region18: #{han_forward.9} parent=15 // pred_check_branch
        %121 = sbr.rel (%p119) target = $region20
      $region19: #{han_forward.9} parent=15 // pred_region
        %s122 = smul.u32 16, %s16
        %p123 = scmp.lt.s32.totalorder %s122, 31
        %s124 = scalar_select %p123, %s122, 31
        %s125 = smul.addr %s124, 8
        %s126 = scalar_lea.vmem %s0, %s125
        %s127 = smul.u32 16, %s16
      $region20: #{han_forward.9} parent=15 // pred_fallthru
        _
      // Predicated region
      $region21: #{han_forward.9} parent=15 // pred_check
        %p128 = pneg %p66
      $region22: #{han_forward.9} parent=15 // pred_check_branch
        %130 = sbr.rel (%p128) target = $region24
      $region23: #{han_forward.9} parent=15 // pred_region
        %p131 = scmp.lt.s32.totalorder %s15, 2
        %s132 = scalar_select %p131, %s15, 2
        %s133 = smul.addr %s132, 16
        %s134 = smul.addr %s133, 4
        %s135 = scalar_lea.vmem %s1, %s134
      $region24: #{han_forward.9} parent=15 // pred_fallthru
        _
    $region16: #{han_forward.9} parent=5 // pred_fallthru
      _
    %p136 = scmp.le.s32.totalorder 1, %s8
    %p137 = scmp.lt.s32.totalorder %s8, 7
    %p138 = pnand %p136, %p137
    %p139 = pneg %p138
    // Predicated region
    $region25: #{han_forward.9} parent=5 // pred_check
      _
    $region26: #{han_forward.9} parent=5 // pred_check_branch
      %141 = sbr.rel (%p138) target = $region28
    $region27: #{han_forward.9} parent=5 // pred_region
      %s142 = ssub.s32 %s8, 1
      %s143 = smul.u32 16, %s18
      %p144 = scmp.lt.s32.totalorder %s143, 31
      %s145 = scalar_select %p144, %s143, 31
      %s146 = smul.addr %s145, 8
      %s147 = scalar_lea.vmem %s0, %s146
      %p148 = pneg %p46
      %p149 = pneg %p43
      %p150 = scmp.lt.s32.totalorder %s17, 2
      %s151 = scalar_select %p150, %s17, 2
      %s152 = smul.addr %s151, 16
      %s153 = smul.addr %s152, 4
      %s154 = scalar_lea.vmem %s1, %s153
      %p155 = pneg %p72
      %p156 = pneg %p69
      %p157 = pneg %p100
      %p158 = pneg %p97
      %s159 = smul.u32 16, %s18
      %p160 = scmp.lt.s32.totalorder %s17, 2
      %s161 = scalar_select %p160, %s17, 2
      %p162 = scmp.lt.s32.totalorder %s159, 31
      %s163 = scalar_select %p162, %s159, 31
      %s164 = smul.addr %s161, 32
      %s165 = sadd.s32 %s163, %s164
      %s166 = smul.addr %s165, 4
      %s167 = scalar_lea.vmem %s2, %s166
      %s168 = smul.u32 16, %s18
      %p169 = scmp.lt.s32.totalorder %s168, 31
      %s170 = scalar_select %p169, %s168, 31
      %s171 = smul.addr %s170, 8
      %s172 = scalar_lea.vmem %s0, %s171
      %s173 = smul.u32 16, %s18
      %p174 = scmp.lt.s32.totalorder %s17, 2
      %s175 = scalar_select %p174, %s17, 2
      %s176 = smul.addr %s175, 16
      %s177 = smul.addr %s176, 4
      %s178 = scalar_lea.vmem %s1, %s177
      %s179 = smul.u32 16, %s18
      %p180 = scmp.lt.s32.totalorder %s17, 2
      %s181 = scalar_select %p180, %s17, 2
      %p182 = scmp.lt.s32.totalorder %s179, 31
      %s183 = scalar_select %p182, %s179, 31
      %s184 = smul.addr %s181, 32
      %s185 = sadd.s32 %s183, %s184
      %s186 = smul.addr %s185, 4
      %s187 = scalar_lea.vmem %s2, %s186
      %s188 = smul.u32 16, %s18
      %v190 = vld [vmem:[%s172] sm:$0xff]
      %v191 = vld [vmem:[%s172 + $0x8] sm:$0xff]
      %v192 = vld [vmem:[%s172 + $0x10] sm:$0xff]
      %v193 = vld [vmem:[%s172 + $0x18] sm:$0xff]
      %v194 = vld [vmem:[%s172 + $0x20] sm:$0xff]
      %v195 = vld [vmem:[%s172 + $0x28] sm:$0xff]
      %v196 = vld [vmem:[%s172 + $0x30] sm:$0xff]
      %v197 = vld [vmem:[%s172 + $0x38] sm:$0xff]
      %v198 = vld [vmem:[%s172 + $0x40] sm:$0xff]
      %v199 = vld [vmem:[%s172 + $0x48] sm:$0xff]
      %v200 = vld [vmem:[%s172 + $0x50] sm:$0xff]
      %v201 = vld [vmem:[%s172 + $0x58] sm:$0xff]
      %v202 = vld [vmem:[%s172 + $0x60] sm:$0xff]
      %v203 = vld [vmem:[%s172 + $0x68] sm:$0xff]
      %v204 = vld [vmem:[%s172 + $0x70] sm:$0xff]
      %v205 = vld [vmem:[%s172 + $0x78] sm:$0xff]
      %v206 = vpack.c.bf16 %v191, %v190
      %v207 = vpack.c.bf16 %v193, %v192
      %v208 = vpack.c.bf16 %v195, %v194
      %v209 = vpack.c.bf16 %v197, %v196
      %v210 = vpack.c.bf16 %v199, %v198
      %v211 = vpack.c.bf16 %v201, %v200
      %v212 = vpack.c.bf16 %v203, %v202
      %v213 = vpack.c.bf16 %v205, %v204
      %v214 = vld [vmem:[%s178] sm:$0xf]
      %v215 = vld [vmem:[%s178 + $0x4] sm:$0xf]
      %v216 = vld [vmem:[%s178 + $0x8] sm:$0xf]
      %v217 = vld [vmem:[%s178 + $0xc] sm:$0xf]
      %v218 = vld [vmem:[%s178 + $0x10] sm:$0xf]
      %v219 = vld [vmem:[%s178 + $0x14] sm:$0xf]
      %v220 = vld [vmem:[%s178 + $0x18] sm:$0xf]
      %v221 = vld [vmem:[%s178 + $0x1c] sm:$0xf]
      %v222 = vld [vmem:[%s178 + $0x20] sm:$0xf]
      %v223 = vld [vmem:[%s178 + $0x24] sm:$0xf]
      %v224 = vld [vmem:[%s178 + $0x28] sm:$0xf]
      %v225 = vld [vmem:[%s178 + $0x2c] sm:$0xf]
      %v226 = vld [vmem:[%s178 + $0x30] sm:$0xf]
      %v227 = vld [vmem:[%s178 + $0x34] sm:$0xf]
      %v228 = vld [vmem:[%s178 + $0x38] sm:$0xf]
      %v229 = vld [vmem:[%s178 + $0x3c] sm:$0xf]
      %v246 = vunpack.c.l.b16 %v214
      %v247 = vunpack.c.l.b16 %v215
      %v248 = vunpack.c.l.b16 %v216
      %v249 = vunpack.c.l.b16 %v217
      %v250 = vunpack.c.l.b16 %v218
      %v251 = vunpack.c.l.b16 %v219
      %v252 = vunpack.c.l.b16 %v220
      %v253 = vunpack.c.l.b16 %v221
      %v254 = vunpack.c.l.b16 %v222
      %v255 = vunpack.c.l.b16 %v223
      %v256 = vunpack.c.l.b16 %v224
      %v257 = vunpack.c.l.b16 %v225
      %v258 = vunpack.c.l.b16 %v226
      %v259 = vunpack.c.l.b16 %v227
      %v260 = vunpack.c.l.b16 %v228
      %v261 = vunpack.c.l.b16 %v229
      %v262 = vpack.c.b16 %v247, %v246
      %v263 = vpack.c.b16 %v249, %v248
      %v264 = vpack.c.b16 %v251, %v250
      %v265 = vpack.c.b16 %v253, %v252
      %v266 = vpack.c.b16 %v255, %v254
      %v267 = vpack.c.b16 %v257, %v256
      %v268 = vpack.c.b16 %v259, %v258
      %v269 = vpack.c.b16 %v261, %v260
      %278 = vmatprep.subr.bf16.mxu0 0
      %279 = vmatpush1.bf16.msra.mxu0 %v262
      %280 = vmatprep.subr.bf16.mxu0 0
      %281 = vmatpush1.bf16.msra.mxu0 %v263
      %282 = vmatprep.subr.bf16.mxu0 0
      %283 = vmatpush1.bf16.msra.mxu0 %v264
      %284 = vmatprep.subr.bf16.mxu0 0
      %285 = vmatpush1.bf16.msra.mxu0 %v265
      %286 = vmatprep.subr.bf16.mxu0 0
      %287 = vmatpush1.bf16.msra.mxu0 %v266
      %288 = vmatprep.subr.bf16.mxu0 0
      %289 = vmatpush1.bf16.msra.mxu0 %v267
      %290 = vmatprep.subr.bf16.mxu0 0
      %291 = vmatpush1.bf16.msra.mxu0 %v268
      %292 = vmatprep.subr.bf16.mxu0 0
      %293 = vmatpush1.bf16.msra.mxu0 %v269
      %294 = vmatprep.subr.bf16.mxu0 0
      %295 = vmatpush1.bf16.msra.mxu0 0
      %296 = vmatprep.subr.bf16.mxu0 0
      %297 = vmatpush1.bf16.msra.mxu0 0
      %298 = vmatprep.subr.bf16.mxu0 0
      %299 = vmatpush1.bf16.msra.mxu0 0
      %300 = vmatprep.subr.bf16.mxu0 0
      %301 = vmatpush1.bf16.msra.mxu0 0
      %302 = vmatprep.subr.bf16.mxu0 0
      %303 = vmatpush1.bf16.msra.mxu0 0
      %304 = vmatprep.subr.bf16.mxu0 0
      %305 = vmatpush1.bf16.msra.mxu0 0
      %306 = vmatprep.subr.bf16.mxu0 0
      %307 = vmatpush1.bf16.msra.mxu0 0
      %308 = vmatprep.subr.bf16.mxu0 0
      %309 = vmatpush1.bf16.msra.mxu0 0
      %310 = vmatprep.mubr.bf16.mxu0 0
      %311 = vmatmul.mubr.bf16.gmra.mrb[0].mxu0 %v206
      %v312 = vpop.f32.mrb[0].mxu0
      %v313 = vadd.f32 0.0, %v312
      %v314 = vpop.f32.mrb[0].mxu0
      %v315 = vpop.f32.mrb[0].mxu0
      %v316 = vadd.f32 0.0, %v315
      %v317 = vpop.f32.mrb[0].mxu0
      %318 = vmatprep.mubr.bf16.mxu0 0
      %319 = vmatmul.mubr.bf16.gmra.mrb[0].mxu0 %v207
      %v320 = vpop.f32.mrb[0].mxu0
      %v321 = vadd.f32 0.0, %v320
      %v322 = vpop.f32.mrb[0].mxu0
      %v323 = vpop.f32.mrb[0].mxu0
      %v324 = vadd.f32 0.0, %v323
      %v325 = vpop.f32.mrb[0].mxu0
      %326 = vmatprep.mubr.bf16.mxu0 0
      %327 = vmatmul.mubr.bf16.gmra.mrb[0].mxu0 %v208
      %v328 = vpop.f32.mrb[0].mxu0
      %v329 = vadd.f32 0.0, %v328
      %v330 = vpop.f32.mrb[0].mxu0
      %v331 = vpop.f32.mrb[0].mxu0
      %v332 = vadd.f32 0.0, %v331
      %v333 = vpop.f32.mrb[0].mxu0
      %334 = vmatprep.mubr.bf16.mxu0 0
      %335 = vmatmul.mubr.bf16.gmra.mrb[0].mxu0 %v209
      %v336 = vpop.f32.mrb[0].mxu0
      %v337 = vadd.f32 0.0, %v336
      %v338 = vpop.f32.mrb[0].mxu0
      %v339 = vpop.f32.mrb[0].mxu0
      %v340 = vadd.f32 0.0, %v339
      %v341 = vpop.f32.mrb[0].mxu0
      %342 = vmatprep.mubr.bf16.mxu0 0
      %343 = vmatmul.mubr.bf16.gmra.mrb[0].mxu0 %v210
      %v344 = vpop.f32.mrb[0].mxu0
      %v345 = vadd.f32 0.0, %v344
      %v346 = vpop.f32.mrb[0].mxu0
      %v347 = vpop.f32.mrb[0].mxu0
      %v348 = vadd.f32 0.0, %v347
      %v349 = vpop.f32.mrb[0].mxu0
      %350 = vmatprep.mubr.bf16.mxu0 0
      %351 = vmatmul.mubr.bf16.gmra.mrb[0].mxu0 %v211
      %v352 = vpop.f32.mrb[0].mxu0
      %v353 = vadd.f32 0.0, %v352
      %v354 = vpop.f32.mrb[0].mxu0
      %v355 = vpop.f32.mrb[0].mxu0
      %v356 = vadd.f32 0.0, %v355
      %v357 = vpop.f32.mrb[0].mxu0
      %358 = vmatprep.mubr.bf16.mxu0 0
      %359 = vmatmul.mubr.bf16.gmra.mrb[0].mxu0 %v212
      %v360 = vpop.f32.mrb[0].mxu0
      %v361 = vadd.f32 0.0, %v360
      %v362 = vpop.f32.mrb[0].mxu0
      %v363 = vpop.f32.mrb[0].mxu0
      %v364 = vadd.f32 0.0, %v363
      %v365 = vpop.f32.mrb[0].mxu0
      %366 = vmatprep.mubr.bf16.mxu0 0
      %367 = vmatmul.mubr.bf16.gmra.mrb[0].mxu0 %v213
      %v368 = vpop.f32.mrb[0].mxu0
      %v369 = vadd.f32 0.0, %v368
      %v370 = vpop.f32.mrb[0].mxu0
      %v371 = vpop.f32.mrb[0].mxu0
      %v372 = vadd.f32 0.0, %v371
      %v373 = vpop.f32.mrb[0].mxu0
      %374 = vdwg.mxu0
      %v375 = vpack.c.bf16 %v316, %v313
      %v376 = vpack.c.bf16 %v324, %v321
      %v377 = vpack.c.bf16 %v332, %v329
      %v378 = vpack.c.bf16 %v340, %v337
      %v379 = vpack.c.bf16 %v348, %v345
      %v380 = vpack.c.bf16 %v356, %v353
      %v381 = vpack.c.bf16 %v364, %v361
      %v382 = vpack.c.bf16 %v372, %v369
      %v391 = vunpack.c.l.b16 %v375
      %v392 = vunpack.c.h.b16 %v375
      %v393 = vunpack.c.l.b16 %v376
      %v394 = vunpack.c.h.b16 %v376
      %v395 = vunpack.c.l.b16 %v377
      %v396 = vunpack.c.h.b16 %v377
      %v397 = vunpack.c.l.b16 %v378
      %v398 = vunpack.c.h.b16 %v378
      %v399 = vunpack.c.l.b16 %v379
      %v400 = vunpack.c.h.b16 %v379
      %v401 = vunpack.c.l.b16 %v380
      %v402 = vunpack.c.h.b16 %v380
      %v403 = vunpack.c.l.b16 %v381
      %v404 = vunpack.c.h.b16 %v381
      %v405 = vunpack.c.l.b16 %v382
      %v406 = vunpack.c.h.b16 %v382
      %v407 = vpack.c.b16 %v391, %v391
      %v408 = vpack.c.b16 %v392, %v392
      %v409 = vpack.c.b16 %v393, %v393
      %v410 = vpack.c.b16 %v394, %v394
      %v411 = vpack.c.b16 %v395, %v395
      %v412 = vpack.c.b16 %v396, %v396
      %v413 = vpack.c.b16 %v397, %v397
      %v414 = vpack.c.b16 %v398, %v398
      %v415 = vpack.c.b16 %v399, %v399
      %v416 = vpack.c.b16 %v400, %v400
      %v417 = vpack.c.b16 %v401, %v401
      %v418 = vpack.c.b16 %v402, %v402
      %v419 = vpack.c.b16 %v403, %v403
      %v420 = vpack.c.b16 %v404, %v404
      %v421 = vpack.c.b16 %v405, %v405
      %v422 = vpack.c.b16 %v406, %v406
      %439 = vst [vmem:[%s187] sm:$0xf] %v407
      %440 = vst [vmem:[%s187 + $0x4] sm:$0xf] %v408
      %441 = vst [vmem:[%s187 + $0x8] sm:$0xf] %v409
      %442 = vst [vmem:[%s187 + $0xc] sm:$0xf] %v410
      %443 = vst [vmem:[%s187 + $0x10] sm:$0xf] %v411
      %444 = vst [vmem:[%s187 + $0x14] sm:$0xf] %v412
      %445 = vst [vmem:[%s187 + $0x18] sm:$0xf] %v413
      %446 = vst [vmem:[%s187 + $0x1c] sm:$0xf] %v414
      %447 = vst [vmem:[%s187 + $0x20] sm:$0xf] %v415
      %448 = vst [vmem:[%s187 + $0x24] sm:$0xf] %v416
      %449 = vst [vmem:[%s187 + $0x28] sm:$0xf] %v417
      %450 = vst [vmem:[%s187 + $0x2c] sm:$0xf] %v418
      %451 = vst [vmem:[%s187 + $0x30] sm:$0xf] %v419
      %452 = vst [vmem:[%s187 + $0x34] sm:$0xf] %v420
      %453 = vst [vmem:[%s187 + $0x38] sm:$0xf] %v421
      %454 = vst [vmem:[%s187 + $0x3c] sm:$0xf] %v422
      %s455 = smul.u32 16, %s18
      %p456 = scmp.lt.s32.totalorder %s17, 2
      %s457 = scalar_select %p456, %s17, 2
      %p458 = scmp.lt.s32.totalorder %s455, 31
      %s459 = scalar_select %p458, %s455, 31
      %s460 = smul.addr %s457, 32
      %s461 = sadd.s32 %s459, %s460
      %s462 = smul.addr %s461, 4
      %s463 = scalar_lea.vmem %s2, %s462
      // Predicated region
      $region29: #{han_forward.9} parent=27 // pred_check
        %p464 = pneg %p97
      $region30: #{han_forward.9} parent=27 // pred_check_branch
        %466 = sbr.rel (%p464) target = $region32
      $region31: #{han_forward.9} parent=27 // pred_region
        %s467 = smul.u32 16, %s18
      $region32: #{han_forward.9} parent=27 // pred_fallthru
        _
    $region28: #{han_forward.9} parent=5 // pred_fallthru
      _
    %p468 = scmp.le.s32.totalorder 2, %s8
    // Predicated region
    $region33: #{han_forward.9} parent=5 // pred_check
      %p469 = pneg %p468
    $region34: #{han_forward.9} parent=5 // pred_check_branch
      %471 = sbr.rel (%p469) target = $region36
    $region35: #{han_forward.9} parent=5 // pred_region
      %s472 = ssub.s32 %s8, 2
      // Predicated region
      $region37: #{han_forward.9} parent=35 // pred_check
        %p473 = pneg %p103
      $region38: #{han_forward.9} parent=35 // pred_check_branch
        %475 = sbr.rel (%p473) target = $region40
      $region39: #{han_forward.9} parent=35 // pred_region
        %s476 = smul.u32 16, %s20
        %p477 = scmp.lt.s32.totalorder %s19, 2
        %s478 = scalar_select %p477, %s19, 2
        %p479 = scmp.lt.s32.totalorder %s476, 31
        %s480 = scalar_select %p479, %s476, 31
        %s481 = smul.addr %s478, 32
        %s482 = sadd.s32 %s480, %s481
        %s483 = smul.addr %s482, 4
        %s484 = scalar_lea.vmem %s2, %s483
      $region40: #{han_forward.9} parent=35 // pred_fallthru
        _
    $region36: #{han_forward.9} parent=5 // pred_fallthru
      _
  $region6: #{han_forward.9} parent=0 // loop_footer
    %s12 = sadd.s32 1, %s8
  $region7: #{han_forward.9} parent=0 // loop_footer_branch
    %7 = sbr.rel target = $region3
  $region8: #{han_forward.9} parent=0 // loop_exit
    _

// kernel: han_forward.7
$region0: #{han_forward.7}
  #allocation0 [shape = 'u32[]', space=smem, size = 0x4, offset = 0x4, fixed_abs, tag = 'smem constant byte address 0x4 - core index']
  #allocation1 [shape = 'u32[144,128]{1,0:T(1,128)}', space=vmem, size = 0x12000, scoped, tag = 'internal scratch']
  #allocation2 [shape = 'f32[128,2]{1,0:T(8,128)}', space=vmem, size = 0x10000, scoped, tag = 'scratch operand']
  #allocation3 [shape = 'f32[128,2]{1,0:T(8,128)}', space=vmem, size = 0x10000, scoped, tag = 'scratch operand']
  #allocation4 [shape = 'f32[128,16]{1,0:T(8,128)}', space=vmem, size = 0x10000, scoped, tag = 'scratch operand']
  #allocation5 [shape = 'f32[1,128]{1,0:T(1,128)}', space=vmem, size = 0x200, scoped, tag = 'scratch operand']
  %s0 = inlined_call_operand.vmem [shape: bf16[3,256,256], index: 0, kind: input, shape index: {}]
  %s1 = inlined_call_operand.vmem [shape: bf16[3,256,128], index: 1, kind: input, shape index: {}, may-alias: {1,2}]
  %s2 = inlined_call_operand.vmem [shape: bf16[3,256,128], index: 2, kind: input, shape index: {}, may-alias: {1,2}]
  %s3 = inlined_call_operand.vmem [shape: f32[3,1,128], index: 3, kind: input, shape index: {}]
  %s4 = inlined_call_operand.vmem [shape: bf16[128,128], index: 4, kind: input, shape index: {}]
  %s5 = inlined_call_operand.vmem [shape: f32[1,128], index: 5, kind: input, shape index: {}]
  %s6 = inlined_call_operand.vmem [shape: f32[1,128], index: 6, kind: input, shape index: {}]
  %s7 = inlined_call_operand.vmem [shape: f32[3,256,128], index: 7, kind: output, shape index: {0}]
  %s8 = inlined_call_operand.vmem [shape: f32[3,1,128], index: 8, kind: output, shape index: {1}]
  %9 = xla_tuple %s7, %s8
  %s10 = sld [smem:[#allocation0]]
  $region126: #{han_forward.7} parent=0
    _
  %s12 = ssub.s32 1, %s10
  %s13 = scalar_select 0, %s12, %s10
  $region1: #{han_forward.7} parent=0
    #allocation6 [shape = 'u8[65536]{0}', space=vmem, size = 0x10000, scoped, tag = 'input window, operand 0']
    loop: start=0, step=1, limit=14
    $region2: #{han_forward.7} parent=1 // loop_pre_header
      _
    $region3: #{han_forward.7} parent=1 // loop_header
      %s15 = sphi 0, %s19
      %p16 = scmp.ge.s32.totalorder %s15, 14
      %s22 = sphi 0, %s41
      %s23 = sphi 0, %s37
      %s24 = sphi 0, %s33
      %s25 = sphi 0, %s22
      %s26 = sphi 0, %s23
      %s27 = sphi 0, %s24
      %s28 = sphi 0, %s25
      %s29 = sphi 0, %s26
      %s30 = sphi 0, %s27
      %s48 = sphi 0, %s50
      %s51 = sphi 0, %s48
      %s52 = sphi 0, %s51
      %s68 = sphi 0, %s52
      %s76 = sphi 0, %s78
      %s79 = sphi 0, %s76
      %s80 = sphi 0, %s79
      %s96 = sphi 0, %s80
      %s104 = sphi 0, %s106
      %s107 = sphi 0, %s104
      %s108 = sphi 0, %s107
      %s124 = sphi 0, %s108
      %s130 = sphi 0, %s132
      %s133 = sphi 0, %s130
      %s134 = sphi 0, %s133
      %s150 = sphi 0, %s134
      %s154 = sphi 0, %s154
      %s156 = sphi 0, %s154
      %s157 = sphi 0, %s156
      %s171 = sphi 0, %s157
      %s175 = sphi 0, %s175
      %s177 = sphi 0, %s175
      %s178 = sphi 0, %s177
      %s192 = sphi 0, %s178
      %s196 = sphi 0, %s196
      %s198 = sphi 0, %s196
      %s199 = sphi 0, %s198
      %s213 = sphi 0, %s199
      %s221 = sphi 0, %s223
      %s224 = sphi 0, %s221
      %s225 = sphi 0, %s224
      %s241 = sphi 0, %s225
      %s247 = sphi 0, %s249
      %s250 = sphi 0, %s247
      %s251 = sphi 0, %s250
      %s267 = sphi 0, %s251
    $region4: #{han_forward.7} parent=1 // loop_header_branch
      %18 = sbr.rel (%p16) target = $region8
    $region5: #{han_forward.7} parent=1 // loop_body
      %s20 = ssub.s32 %s15, 1
      %s21 = ssub.s32 %s15, 2
      %s31 = sadd.s32 1, %s24
      %p32 = scmp.ge.s32.totalorder %s31, 2
      %s33 = scalar_select %p32, 0, %s31
      %s34 = sadd.s32 1, %s23
      %s35 = scalar_select %p32, %s34, %s23
      %p36 = scmp.ge.s32.totalorder %s35, 2
      %s37 = scalar_select %p36, 0, %s35
      %s38 = sadd.s32 1, %s22
      %s39 = scalar_select %p36, %s38, %s22
      %p40 = scmp.ge.s32.totalorder %s39, 3
      %s41 = scalar_select %p40, 0, %s39
      %s42 = ssub.s32 %s22, %s41
      %s43 = ssub.s32 %s23, %s37
      %s44 = sor.u32 %s42, %s43
      %s45 = ssub.s32 %s24, %s33
      %s46 = sor.u32 %s44, %s45
      %p47 = scmp.eq.s32.totalorder %s46, 0
      %s49 = sadd.s32 %s48, 1
      %s50 = scalar_select %p47, %s48, %s49
      %p53 = pneg %p47
      %p54 = scmp.eq.s32.totalorder %s15, 11
      %p55 = por %p53, %p54
      %p56 = scmp.ne.s32.totalorder %s48, %s51
      %p57 = scmp.eq.s32.totalorder %s15, 0
      %p58 = por %p56, %p57
      %p59 = scmp.ne.s32.totalorder %s48, %s51
      %p60 = scmp.eq.s32.totalorder %s20, 11
      %p61 = por %p59, %p60
      %p62 = scmp.ne.s32.totalorder %s51, %s52
      %p63 = scmp.eq.s32.totalorder %s20, 0
      %p64 = por %p62, %p63
      %p65 = scmp.ne.s32.totalorder %s51, %s52
      %p66 = scmp.eq.s32.totalorder %s21, 11
      %p67 = por %p65, %p66
      %p69 = scmp.ne.s32.totalorder %s52, %s68
      %p70 = scmp.eq.s32.totalorder %s21, 0
      %p71 = por %p69, %p70
      %s72 = ssub.s32 %s22, %s41
      %s73 = ssub.s32 %s23, %s37
      %s74 = sor.u32 %s72, %s73
      %p75 = scmp.eq.s32.totalorder %s74, 0
      %s77 = sadd.s32 %s76, 1
      %s78 = scalar_select %p75, %s76, %s77
      %p81 = pneg %p75
      %p82 = scmp.eq.s32.totalorder %s15, 11
      %p83 = por %p81, %p82
      %p84 = scmp.ne.s32.totalorder %s76, %s79
      %p85 = scmp.eq.s32.totalorder %s15, 0
      %p86 = por %p84, %p85
      %p87 = scmp.ne.s32.totalorder %s76, %s79
      %p88 = scmp.eq.s32.totalorder %s20, 11
      %p89 = por %p87, %p88
      %p90 = scmp.ne.s32.totalorder %s79, %s80
      %p91 = scmp.eq.s32.totalorder %s20, 0
      %p92 = por %p90, %p91
      %p93 = scmp.ne.s32.totalorder %s79, %s80
      %p94 = scmp.eq.s32.totalorder %s21, 11
      %p95 = por %p93, %p94
      %p97 = scmp.ne.s32.totalorder %s80, %s96
      %p98 = scmp.eq.s32.totalorder %s21, 0
      %p99 = por %p97, %p98
      %s100 = ssub.s32 %s22, %s41
      %s101 = ssub.s32 %s24, %s33
      %s102 = sor.u32 %s100, %s101
      %p103 = scmp.eq.s32.totalorder %s102, 0
      %s105 = sadd.s32 %s104, 1
      %s106 = scalar_select %p103, %s104, %s105
      %p109 = pneg %p103
      %p110 = scmp.eq.s32.totalorder %s15, 11
      %p111 = por %p109, %p110
      %p112 = scmp.ne.s32.totalorder %s104, %s107
      %p113 = scmp.eq.s32.totalorder %s15, 0
      %p114 = por %p112, %p113
      %p115 = scmp.ne.s32.totalorder %s104, %s107
      %p116 = scmp.eq.s32.totalorder %s20, 11
      %p117 = por %p115, %p116
      %p118 = scmp.ne.s32.totalorder %s107, %s108
      %p119 = scmp.eq.s32.totalorder %s20, 0
      %p120 = por %p118, %p119
      %p121 = scmp.ne.s32.totalorder %s107, %s108
      %p122 = scmp.eq.s32.totalorder %s21, 11
      %p123 = por %p121, %p122
      %p125 = scmp.ne.s32.totalorder %s108, %s124
      %p126 = scmp.eq.s32.totalorder %s21, 0
      %p127 = por %p125, %p126
      %s128 = ssub.s32 %s22, %s41
      %p129 = scmp.eq.s32.totalorder %s128, 0
      %s131 = sadd.s32 %s130, 1
      %s132 = scalar_select %p129, %s130, %s131
      %p135 = pneg %p129
      %p136 = scmp.eq.s32.totalorder %s15, 11
      %p137 = por %p135, %p136
      %p138 = scmp.ne.s32.totalorder %s130, %s133
      %p139 = scmp.eq.s32.totalorder %s15, 0
      %p140 = por %p138, %p139
      %p141 = scmp.ne.s32.totalorder %s130, %s133
      %p142 = scmp.eq.s32.totalorder %s20, 11
      %p143 = por %p141, %p142
      %p144 = scmp.ne.s32.totalorder %s133, %s134
      %p145 = scmp.eq.s32.totalorder %s20, 0
      %p146 = por %p144, %p145
      %p147 = scmp.ne.s32.totalorder %s133, %s134
      %p148 = scmp.eq.s32.totalorder %s21, 11
      %p149 = por %p147, %p148
      %p151 = scmp.ne.s32.totalorder %s134, %s150
      %p152 = scmp.eq.s32.totalorder %s21, 0
      %p153 = por %p151, %p152
      %s155 = sadd.s32 %s154, 1
      %p158 = scmp.eq.s32.totalorder %s15, 11
      %p159 = scmp.ne.s32.totalorder %s154, %s156
      %p160 = scmp.eq.s32.totalorder %s15, 0
      %p161 = por %p159, %p160
      %p162 = scmp.ne.s32.totalorder %s154, %s156
      %p163 = scmp.eq.s32.totalorder %s20, 11
      %p164 = por %p162, %p163
      %p165 = scmp.ne.s32.totalorder %s156, %s157
      %p166 = scmp.eq.s32.totalorder %s20, 0
      %p167 = por %p165, %p166
      %p168 = scmp.ne.s32.totalorder %s156, %s157
      %p169 = scmp.eq.s32.totalorder %s21, 11
      %p170 = por %p168, %p169
      %p172 = scmp.ne.s32.totalorder %s157, %s171
      %p173 = scmp.eq.s32.totalorder %s21, 0
      %p174 = por %p172, %p173
      %s176 = sadd.s32 %s175, 1
      %p179 = scmp.eq.s32.totalorder %s15, 11
      %p180 = scmp.ne.s32.totalorder %s175, %s177
      %p181 = scmp.eq.s32.totalorder %s15, 0
      %p182 = por %p180, %p181
      %p183 = scmp.ne.s32.totalorder %s175, %s177
      %p184 = scmp.eq.s32.totalorder %s20, 11
      %p185 = por %p183, %p184
      %p186 = scmp.ne.s32.totalorder %s177, %s178
      %p187 = scmp.eq.s32.totalorder %s20, 0
      %p188 = por %p186, %p187
      %p189 = scmp.ne.s32.totalorder %s177, %s178
      %p190 = scmp.eq.s32.totalorder %s21, 11
      %p191 = por %p189, %p190
      %p193 = scmp.ne.s32.totalorder %s178, %s192
      %p194 = scmp.eq.s32.totalorder %s21, 0
      %p195 = por %p193, %p194
      %s197 = sadd.s32 %s196, 1
      %p200 = scmp.eq.s32.totalorder %s15, 11
      %p201 = scmp.ne.s32.totalorder %s196, %s198
      %p202 = scmp.eq.s32.totalorder %s15, 0
      %p203 = por %p201, %p202
      %p204 = scmp.ne.s32.totalorder %s196, %s198
      %p205 = scmp.eq.s32.totalorder %s20, 11
      %p206 = por %p204, %p205
      %p207 = scmp.ne.s32.totalorder %s198, %s199
      %p208 = scmp.eq.s32.totalorder %s20, 0
      %p209 = por %p207, %p208
      %p210 = scmp.ne.s32.totalorder %s198, %s199
      %p211 = scmp.eq.s32.totalorder %s21, 11
      %p212 = por %p210, %p211
      %p214 = scmp.ne.s32.totalorder %s199, %s213
      %p215 = scmp.eq.s32.totalorder %s21, 0
      %p216 = por %p214, %p215
      %s217 = ssub.s32 %s22, %s41
      %s218 = ssub.s32 %s23, %s37
      %s219 = sor.u32 %s217, %s218
      %p220 = scmp.eq.s32.totalorder %s219, 0
      %s222 = sadd.s32 %s221, 1
      %s223 = scalar_select %p220, %s221, %s222
      %p226 = pneg %p220
      %p227 = scmp.eq.s32.totalorder %s15, 11
      %p228 = por %p226, %p227
      %p229 = scmp.ne.s32.totalorder %s221, %s224
      %p230 = scmp.eq.s32.totalorder %s15, 0
      %p231 = por %p229, %p230
      %p232 = scmp.ne.s32.totalorder %s221, %s224
      %p233 = scmp.eq.s32.totalorder %s20, 11
      %p234 = por %p232, %p233
      %p235 = scmp.ne.s32.totalorder %s224, %s225
      %p236 = scmp.eq.s32.totalorder %s20, 0
      %p237 = por %p235, %p236
      %p238 = scmp.ne.s32.totalorder %s224, %s225
      %p239 = scmp.eq.s32.totalorder %s21, 11
      %p240 = por %p238, %p239
      %p242 = scmp.ne.s32.totalorder %s225, %s241
      %p243 = scmp.eq.s32.totalorder %s21, 0
      %p244 = por %p242, %p243
      %s245 = ssub.s32 %s22, %s41
      %p246 = scmp.eq.s32.totalorder %s245, 0
      %s248 = sadd.s32 %s247, 1
      %s249 = scalar_select %p246, %s247, %s248
      %p252 = pneg %p246
      %p253 = scmp.eq.s32.totalorder %s15, 11
      %p254 = por %p252, %p253
      %p255 = scmp.ne.s32.totalorder %s247, %s250
      %p256 = scmp.eq.s32.totalorder %s15, 0
      %p257 = por %p255, %p256
      %p258 = scmp.ne.s32.totalorder %s247, %s250
      %p259 = scmp.eq.s32.totalorder %s20, 11
      %p260 = por %p258, %p259
      %p261 = scmp.ne.s32.totalorder %s250, %s251
      %p262 = scmp.eq.s32.totalorder %s20, 0
      %p263 = por %p261, %p262
      %p264 = scmp.ne.s32.totalorder %s250, %s251
      %p265 = scmp.eq.s32.totalorder %s21, 11
      %p266 = por %p264, %p265
      %p268 = scmp.ne.s32.totalorder %s251, %s267
      %p269 = scmp.eq.s32.totalorder %s21, 0
      %p270 = por %p268, %p269
      %p271 = scmp.le.s32.totalorder 1, %s15
      %p272 = scmp.lt.s32.totalorder %s15, 13
      %p273 = pnand %p271, %p272
      %p274 = pneg %p273
      // Predicated region
      $region9: #{han_forward.7} parent=5 // pred_check
        _
      $region10: #{han_forward.7} parent=5 // pred_check_branch
        %276 = sbr.rel (%p273) target = $region12
      $region11: #{han_forward.7} parent=5 // pred_region
        %s277 = ssub.s32 %s15, 1
        // Predicated region
        $region13: #{han_forward.7} parent=11 // pred_check
          %p278 = pneg %p167
        $region14: #{han_forward.7} parent=11 // pred_check_branch
          %280 = sbr.rel (%p278) target = $region16
        $region15: #{han_forward.7} parent=11 // pred_region
          _
        $region16: #{han_forward.7} parent=11 // pred_fallthru
          _
        // Predicated region
        $region17: #{han_forward.7} parent=11 // pred_check
          %p281 = pneg %p188
        $region18: #{han_forward.7} parent=11 // pred_check_branch
          %283 = sbr.rel (%p281) target = $region20
        $region19: #{han_forward.7} parent=11 // pred_region
          _
        $region20: #{han_forward.7} parent=11 // pred_fallthru
          _
        // Predicated region
        $region21: #{han_forward.7} parent=11 // pred_check
          %p284 = pneg %p209
        $region22: #{han_forward.7} parent=11 // pred_check_branch
          %286 = sbr.rel (%p284) target = $region24
        $region23: #{han_forward.7} parent=11 // pred_region
          _
        $region24: #{han_forward.7} parent=11 // pred_fallthru
          _
      $region12: #{han_forward.7} parent=5 // pred_fallthru
        _
      %p287 = scmp.lt.s32.totalorder %s15, 12
      // Predicated region
      $region25: #{han_forward.7} parent=5 // pred_check
        %p288 = pneg %p287
      $region26: #{han_forward.7} parent=5 // pred_check_branch
        %290 = sbr.rel (%p288) target = $region28
      $region27: #{han_forward.7} parent=5 // pred_region
        // Predicated region
        $region29: #{han_forward.7} parent=27 // pred_check
          %p291 = pneg %p58
        $region30: #{han_forward.7} parent=27 // pred_check_branch
          %293 = sbr.rel (%p291) target = $region32
        $region31: #{han_forward.7} parent=27 // pred_region
          %s294 = sand.u32 %s48, 1
          %s295 = sand.u32 %s48, 1
          %s296 = smul.addr %s295, 64
          %s297 = scalar_lea.vmem [#allocation6], %s296
          %s298 = smul.u32 16, %s23
          %s299 = smul.addr %s298, 2
          %s300 = sadd.s32 %s24, %s299
          %s301 = smul.addr %s22, 64
          %s302 = sadd.s32 %s300, %s301
          %s303 = smul.addr %s302, 4
          %s304 = scalar_lea.vmem %s0, %s303
          // Predicated region
          $region33: #{han_forward.7} parent=31 // pred_check
            _
          $region34: #{han_forward.7} parent=31 // pred_check_branch
            %306 = sbr.rel (0) target = $region36
          $region35: #{han_forward.7} parent=31 // pred_region
            // Predicated region
            $region37: #{han_forward.7} parent=35 // pred_check
              _
            $region38: #{han_forward.7} parent=35 // pred_check_branch
              %308 = sbr.rel target = $region40
            $region39: #{han_forward.7} parent=35 // pred_region
              // Predicated region
              $region52: #{han_forward.7} parent=39 // pred_check
                _
              $region53: #{han_forward.7} parent=39 // pred_check_branch
                %353 = sbr.rel (0) target = $region55
              $region54: #{han_forward.7} parent=39 // pred_region
                loop: start=0, step=1, limit=1
                $region56: #{han_forward.7} parent=54 // loop_pre_header
                  _
                $region57: #{han_forward.7} parent=54 // loop_header
                  %s355 = sphi 0, %s359
                  %p356 = scmp.ge.s32.totalorder %s355, 1
                  %s360 = sphi %s304, %s304
                  %s361 = sphi %s297, %s297
                $region58: #{han_forward.7} parent=54 // loop_header_branch
                  %358 = sbr.rel (%p356) target = $region62
                $region59: #{han_forward.7} parent=54 // loop_body
                  _
                $region60: #{han_forward.7} parent=54 // loop_footer
                  %s359 = sadd.s32 1, %s355
                $region61: #{han_forward.7} parent=54 // loop_footer_branch
                  %354 = sbr.rel target = $region57
                $region62: #{han_forward.7} parent=54 // loop_exit
                  _
                loop: start=0, step=1, limit=1
                $region63: #{han_forward.7} parent=54 // loop_pre_header
                  _
                $region64: #{han_forward.7} parent=54 // loop_header
                  %s364 = sphi 0, %s368
                  %p365 = scmp.ge.s32.totalorder %s364, 1
                  %s369 = sphi %s304, %s304
                  %s370 = sphi %s297, %s297
                $region65: #{han_forward.7} parent=54 // loop_header_branch
                  %367 = sbr.rel (%p365) target = $region69
                $region66: #{han_forward.7} parent=54 // loop_body
                  %v371 = vld [vmem:[%s369] sm:$0xf]
                  %372 = vst [vmem:[%s370] sm:$0xf] %v371
                  %v373 = vld [vmem:[%s369 + $0x8] sm:$0xf]
                  %374 = vst [vmem:[%s370 + $0x4] sm:$0xf] %v373
                  %v375 = vld [vmem:[%s369 + $0x10] sm:$0xf]
                  %376 = vst [vmem:[%s370 + $0x8] sm:$0xf] %v375
                  %v377 = vld [vmem:[%s369 + $0x18] sm:$0xf]
                  %378 = vst [vmem:[%s370 + $0xc] sm:$0xf] %v377
                  %v379 = vld [vmem:[%s369 + $0x20] sm:$0xf]
                  %380 = vst [vmem:[%s370 + $0x10] sm:$0xf] %v379
                  %v381 = vld [vmem:[%s369 + $0x28] sm:$0xf]
                  %382 = vst [vmem:[%s370 + $0x14] sm:$0xf] %v381
                  %v383 = vld [vmem:[%s369 + $0x30] sm:$0xf]
                  %384 = vst [vmem:[%s370 + $0x18] sm:$0xf] %v383
                  %v385 = vld [vmem:[%s369 + $0x38] sm:$0xf]
                  %386 = vst [vmem:[%s370 + $0x1c] sm:$0xf] %v385
                  %v387 = vld [vmem:[%s369 + $0x40] sm:$0xf]
                  %388 = vst [vmem:[%s370 + $0x20] sm:$0xf] %v387
                  %v389 = vld [vmem:[%s369 + $0x48] sm:$0xf]
                  %390 = vst [vmem:[%s370 + $0x24] sm:$0xf] %v389
                  %v391 = vld [vmem:[%s369 + $0x50] sm:$0xf]
                  %392 = vst [vmem:[%s370 + $0x28] sm:$0xf] %v391
                  %v393 = vld [vmem:[%s369 + $0x58] sm:$0xf]
                  %394 = vst [vmem:[%s370 + $0x2c] sm:$0xf] %v393
                  %v395 = vld [vmem:[%s369 + $0x60] sm:$0xf]
                  %396 = vst [vmem:[%s370 + $0x30] sm:$0xf] %v395
                  %v397 = vld [vmem:[%s369 + $0x68] sm:$0xf]
                  %398 = vst [vmem:[%s370 + $0x34] sm:$0xf] %v397
                  %v399 = vld [vmem:[%s369 + $0x70] sm:$0xf]
                  %400 = vst [vmem:[%s370 + $0x38] sm:$0xf] %v399
                  %v401 = vld [vmem:[%s369 + $0x78] sm:$0xf]
                  %402 = vst [vmem:[%s370 + $0x3c] sm:$0xf] %v401
                $region67: #{han_forward.7} parent=54 // loop_footer
                  %s368 = sadd.s32 1, %s364
                $region68: #{han_forward.7} parent=54 // loop_footer_branch
                  %363 = sbr.rel target = $region64
                $region69: #{han_forward.7} parent=54 // loop_exit
                  _
              $region55: #{han_forward.7} parent=39 // pred_fallthru
                _
            $region40: #{han_forward.7} parent=35 // pred_fallthru
              _
            // Predicated region
            $region41: #{han_forward.7} parent=35 // pred_check
              _
            $region42: #{han_forward.7} parent=35 // pred_check_branch
              %310 = sbr.rel (0) target = $region44
            $region43: #{han_forward.7} parent=35 // pred_region
              loop: start=0, step=1, limit=1
              $region45: #{han_forward.7} parent=43 // loop_pre_header
                _
              $region46: #{han_forward.7} parent=43 // loop_header
                %s313 = sphi 0, %s317
                %p314 = scmp.ge.s32.totalorder %s313, 1
                %s318 = sphi %s304, %s304
                %s319 = sphi %s297, %s297
              $region47: #{han_forward.7} parent=43 // loop_header_branch
                %316 = sbr.rel (%p314) target = $region51
              $region48: #{han_forward.7} parent=43 // loop_body
                %v320 = vld [vmem:[%s318] sm:$0xf]
                %321 = vst [vmem:[%s319] sm:$0xf] %v320
                %v322 = vld [vmem:[%s318 + $0x8] sm:$0xf]
                %323 = vst [vmem:[%s319 + $0x4] sm:$0xf] %v322
                %v324 = vld [vmem:[%s318 + $0x10] sm:$0xf]
                %325 = vst [vmem:[%s319 + $0x8] sm:$0xf] %v324
                %v326 = vld [vmem:[%s318 + $0x18] sm:$0xf]
                %327 = vst [vmem:[%s319 + $0xc] sm:$0xf] %v326
                %v328 = vld [vmem:[%s318 + $0x20] sm:$0xf]
                %329 = vst [vmem:[%s319 + $0x10] sm:$0xf] %v328
                %v330 = vld [vmem:[%s318 + $0x28] sm:$0xf]
                %331 = vst [vmem:[%s319 + $0x14] sm:$0xf] %v330
                %v332 = vld [vmem:[%s318 + $0x30] sm:$0xf]
                %333 = vst [vmem:[%s319 + $0x18] sm:$0xf] %v332
                %v334 = vld [vmem:[%s318 + $0x38] sm:$0xf]
                %335 = vst [vmem:[%s319 + $0x1c] sm:$0xf] %v334
                %v336 = vld [vmem:[%s318 + $0x40] sm:$0xf]
                %337 = vst [vmem:[%s319 + $0x20] sm:$0xf] %v336
                %v338 = vld [vmem:[%s318 + $0x48] sm:$0xf]
                %339 = vst [vmem:[%s319 + $0x24] sm:$0xf] %v338
                %v340 = vld [vmem:[%s318 + $0x50] sm:$0xf]
                %341 = vst [vmem:[%s319 + $0x28] sm:$0xf] %v340
                %v342 = vld [vmem:[%s318 + $0x58] sm:$0xf]
                %343 = vst [vmem:[%s319 + $0x2c] sm:$0xf] %v342
                %v344 = vld [vmem:[%s318 + $0x60] sm:$0xf]
                %345 = vst [vmem:[%s319 + $0x30] sm:$0xf] %v344
                %v346 = vld [vmem:[%s318 + $0x68] sm:$0xf]
                %347 = vst [vmem:[%s319 + $0x34] sm:$0xf] %v346
                %v348 = vld [vmem:[%s318 + $0x70] sm:$0xf]
                %349 = vst [vmem:[%s319 + $0x38] sm:$0xf] %v348
                %v350 = vld [vmem:[%s318 + $0x78] sm:$0xf]
                %351 = vst [vmem:[%s319 + $0x3c] sm:$0xf] %v350
              $region49: #{han_forward.7} parent=43 // loop_footer
                %s317 = sadd.s32 1, %s313
              $region50: #{han_forward.7} parent=43 // loop_footer_branch
                %312 = sbr.rel target = $region46
              $region51: #{han_forward.7} parent=43 // loop_exit
                _
            $region44: #{han_forward.7} parent=35 // pred_fallthru
              _
          $region36: #{han_forward.7} parent=31 // pred_fallthru
            _
          %403 = vnop
        $region32: #{han_forward.7} parent=27 // pred_fallthru
          _
        // Predicated region
        $region70: #{han_forward.7} parent=27 // pred_check
          %p404 = pneg %p86
        $region71: #{han_forward.7} parent=27 // pred_check_branch
          %406 = sbr.rel (%p404) target = $region73
        $region72: #{han_forward.7} parent=27 // pred_region
          %s407 = smul.u32 16, %s23
          %p408 = scmp.lt.s32.totalorder %s22, 2
          %s409 = scalar_select %p408, %s22, 2
          %p410 = scmp.lt.s32.totalorder %s407, 31
          %s411 = scalar_select %p410, %s407, 31
          %s412 = smul.addr %s409, 32
          %s413 = sadd.s32 %s411, %s412
          %s414 = smul.addr %s413, 4
          %s415 = scalar_lea.vmem %s1, %s414
          %s416 = smul.u32 16, %s23
        $region73: #{han_forward.7} parent=27 // pred_fallthru
          _
        // Predicated region
        $region74: #{han_forward.7} parent=27 // pred_check
          %p417 = pneg %p114
        $region75: #{han_forward.7} parent=27 // pred_check_branch
          %419 = sbr.rel (%p417) target = $region77
        $region76: #{han_forward.7} parent=27 // pred_region
          %s420 = smul.u32 16, %s24
          %p421 = scmp.lt.s32.totalorder %s22, 2
          %s422 = scalar_select %p421, %s22, 2
          %p423 = scmp.lt.s32.totalorder %s420, 31
          %s424 = scalar_select %p423, %s420, 31
          %s425 = smul.addr %s422, 32
          %s426 = sadd.s32 %s424, %s425
          %s427 = smul.addr %s426, 4
          %s428 = scalar_lea.vmem %s2, %s427
          %s429 = smul.u32 16, %s24
        $region77: #{han_forward.7} parent=27 // pred_fallthru
          _
        // Predicated region
        $region78: #{han_forward.7} parent=27 // pred_check
          %p430 = pneg %p140
        $region79: #{han_forward.7} parent=27 // pred_check_branch
          %432 = sbr.rel (%p430) target = $region81
        $region80: #{han_forward.7} parent=27 // pred_region
          %p433 = scmp.lt.s32.totalorder %s22, 2
          %s434 = scalar_select %p433, %s22, 2
          %s435 = scalar_lea.vmem %s3, %s434
        $region81: #{han_forward.7} parent=27 // pred_fallthru
          _
      $region28: #{han_forward.7} parent=5 // pred_fallthru
        _
      %p436 = scmp.le.s32.totalorder 1, %s15
      %p437 = scmp.lt.s32.totalorder %s15, 13
      %p438 = pnand %p436, %p437
      %p439 = pneg %p438
      // Predicated region
      $region82: #{han_forward.7} parent=5 // pred_check
        _
      $region83: #{han_forward.7} parent=5 // pred_check_branch
        %441 = sbr.rel (%p438) target = $region85
      $region84: #{han_forward.7} parent=5 // pred_region
        %s442 = ssub.s32 %s15, 1
        %s443 = sand.u32 %s51, 1
        %s444 = sand.u32 %s51, 1
        %s445 = smul.addr %s444, 64
        %s446 = scalar_lea.vmem [#allocation6], %s445
        // Predicated region
        $region86: #{han_forward.7} parent=84 // pred_check
          %p447 = pneg %p64
        $region87: #{han_forward.7} parent=84 // pred_check_branch
          %449 = sbr.rel (%p447) target = $region89
        $region88: #{han_forward.7} parent=84 // pred_region
          _
        $region89: #{han_forward.7} parent=84 // pred_fallthru
          _
        %s450 = sand.u32 %s51, 1
        %s451 = sand.u32 %s51, 1
        %s452 = smul.addr %s451, 64
        %s453 = scalar_lea.vmem [#allocation6], %s452
        %p454 = pneg %p64
        %p455 = pneg %p61
        %s456 = smul.u32 16, %s26
        %p457 = scmp.lt.s32.totalorder %s25, 2
        %s458 = scalar_select %p457, %s25, 2
        %p459 = scmp.lt.s32.totalorder %s456, 31
        %s460 = scalar_select %p459, %s456, 31
        %s461 = smul.addr %s458, 32
        %s462 = sadd.s32 %s460, %s461
        %s463 = smul.addr %s462, 4
        %s464 = scalar_lea.vmem %s1, %s463
        %p465 = pneg %p92
        %p466 = pneg %p89
        %s467 = smul.u32 16, %s27
        %p468 = scmp.lt.s32.totalorder %s25, 2
        %s469 = scalar_select %p468, %s25, 2
        %p470 = scmp.lt.s32.totalorder %s467, 31
        %s471 = scalar_select %p470, %s467, 31
        %s472 = smul.addr %s469, 32
        %s473 = sadd.s32 %s471, %s472
        %s474 = smul.addr %s473, 4
        %s475 = scalar_lea.vmem %s2, %s474
        %p476 = pneg %p120
        %p477 = pneg %p117
        %p478 = scmp.lt.s32.totalorder %s25, 2
        %s479 = scalar_select %p478, %s25, 2
        %s480 = scalar_lea.vmem %s3, %s479
        %p481 = pneg %p146
        %p482 = pneg %p143
        %p483 = pneg %p167
        %p484 = pneg %p164
        %p485 = pneg %p188
        %p486 = pneg %p185
        %p487 = pneg %p209
        %p488 = pneg %p206
        %p489 = pneg %p237
        %p490 = pneg %p234
        %s491 = smul.u32 16, %s26
        %p492 = scmp.lt.s32.totalorder %s25, 2
        %s493 = scalar_select %p492, %s25, 2
        %p494 = scmp.lt.s32.totalorder %s491, 31
        %s495 = scalar_select %p494, %s491, 31
        %s496 = smul.addr %s493, 32
        %s497 = sadd.s32 %s495, %s496
        %s498 = smul.addr %s497, 8
        %s499 = scalar_lea.vmem %s7, %s498
        %p500 = pneg %p263
        %p501 = pneg %p260
        %p502 = scmp.lt.s32.totalorder %s25, 2
        %s503 = scalar_select %p502, %s25, 2
        %s504 = scalar_lea.vmem %s8, %s503
        %s505 = smul.u32 16, %s26
        %s506 = smul.u32 16, %s26
        %p507 = scmp.lt.s32.totalorder %s25, 2
        %s508 = scalar_select %p507, %s25, 2
        %p509 = scmp.lt.s32.totalorder %s506, 31
        %s510 = scalar_select %p509, %s506, 31
        %s511 = smul.addr %s508, 32
        %s512 = sadd.s32 %s510, %s511
        %s513 = smul.addr %s512, 4
        %s514 = scalar_lea.vmem %s1, %s513
        %s515 = smul.u32 16, %s26
        %s516 = smul.u32 16, %s27
        %p517 = scmp.lt.s32.totalorder %s25, 2
        %s518 = scalar_select %p517, %s25, 2
        %p519 = scmp.lt.s32.totalorder %s516, 31
        %s520 = scalar_select %p519, %s516, 31
        %s521 = smul.addr %s518, 32
        %s522 = sadd.s32 %s520, %s521
        %s523 = smul.addr %s522, 4
        %s524 = scalar_lea.vmem %s2, %s523
        %s525 = smul.u32 16, %s27
        %p526 = scmp.lt.s32.totalorder %s25, 2
        %s527 = scalar_select %p526, %s25, 2
        %s528 = scalar_lea.vmem %s3, %s527
        %s529 = smul.u32 16, %s26
        %p530 = scmp.lt.s32.totalorder %s25, 2
        %s531 = scalar_select %p530, %s25, 2
        %p532 = scmp.lt.s32.totalorder %s529, 31
        %s533 = scalar_select %p532, %s529, 31
        %s534 = smul.addr %s531, 32
        %s535 = sadd.s32 %s533, %s534
        %s536 = smul.addr %s535, 8
        %s537 = scalar_lea.vmem %s7, %s536
        %s538 = smul.u32 16, %s26
        %p539 = scmp.lt.s32.totalorder %s25, 2
        %s540 = scalar_select %p539, %s25, 2
        %s541 = scalar_lea.vmem %s8, %s540
        %p543 = scmp.eq.s32.totalorder %s27, 0
        // Predicated region
        $region90: #{han_forward.7} parent=84 // pred_check
          %p544 = pneg %p543
        $region91: #{han_forward.7} parent=84 // pred_check_branch
          %546 = sbr.rel (%p544) target = $region93
        $region92: #{han_forward.7} parent=84 // pred_region
          %vm547 = vcmask 15360
          %548 = vst.msk [vmem:[#allocation2] sm:$0xff] %vm547, -inf
          %549 = vst.msk [vmem:[#allocation2 + $0x8] sm:$0xff] %vm547, -inf
          %550 = vst.msk [vmem:[#allocation2 + $0x10] sm:$0xff] %vm547, -inf
          %551 = vst.msk [vmem:[#allocation2 + $0x18] sm:$0xff] %vm547, -inf
          %552 = vst.msk [vmem:[#allocation2 + $0x20] sm:$0xff] %vm547, -inf
          %553 = vst.msk [vmem:[#allocation2 + $0x28] sm:$0xff] %vm547, -inf
          %554 = vst.msk [vmem:[#allocation2 + $0x30] sm:$0xff] %vm547, -inf
          %555 = vst.msk [vmem:[#allocation2 + $0x38] sm:$0xff] %vm547, -inf
          %556 = vst.msk [vmem:[#allocation2 + $0x40] sm:$0xff] %vm547, -inf
          %557 = vst.msk [vmem:[#allocation2 + $0x48] sm:$0xff] %vm547, -inf
          %558 = vst.msk [vmem:[#allocation2 + $0x50] sm:$0xff] %vm547, -inf
          %559 = vst.msk [vmem:[#allocation2 + $0x58] sm:$0xff] %vm547, -inf
          %560 = vst.msk [vmem:[#allocation2 + $0x60] sm:$0xff] %vm547, -inf
          %561 = vst.msk [vmem:[#allocation2 + $0x68] sm:$0xff] %vm547, -inf
          %562 = vst.msk [vmem:[#allocation2 + $0x70] sm:$0xff] %vm547, -inf
          %563 = vst.msk [vmem:[#allocation2 + $0x78] sm:$0xff] %vm547, -inf
          %564 = vst.msk [vmem:[#allocation3] sm:$0xff] %vm547, 0.0
          %565 = vst.msk [vmem:[#allocation3 + $0x8] sm:$0xff] %vm547, 0.0
          %566 = vst.msk [vmem:[#allocation3 + $0x10] sm:$0xff] %vm547, 0.0
          %567 = vst.msk [vmem:[#allocation3 + $0x18] sm:$0xff] %vm547, 0.0
          %568 = vst.msk [vmem:[#allocation3 + $0x20] sm:$0xff] %vm547, 0.0
          %569 = vst.msk [vmem:[#allocation3 + $0x28] sm:$0xff] %vm547, 0.0
          %570 = vst.msk [vmem:[#allocation3 + $0x30] sm:$0xff] %vm547, 0.0
          %571 = vst.msk [vmem:[#allocation3 + $0x38] sm:$0xff] %vm547, 0.0
          %572 = vst.msk [vmem:[#allocation3 + $0x40] sm:$0xff] %vm547, 0.0
          %573 = vst.msk [vmem:[#allocation3 + $0x48] sm:$0xff] %vm547, 0.0
          %574 = vst.msk [vmem:[#allocation3 + $0x50] sm:$0xff] %vm547, 0.0
          %575 = vst.msk [vmem:[#allocation3 + $0x58] sm:$0xff] %vm547, 0.0
          %576 = vst.msk [vmem:[#allocation3 + $0x60] sm:$0xff] %vm547, 0.0
          %577 = vst.msk [vmem:[#allocation3 + $0x68] sm:$0xff] %vm547, 0.0
          %578 = vst.msk [vmem:[#allocation3 + $0x70] sm:$0xff] %vm547, 0.0
          %579 = vst.msk [vmem:[#allocation3 + $0x78] sm:$0xff] %vm547, 0.0
          %vm580 = vcmask 130048
          %581 = vst.msk [vmem:[#allocation4] sm:$0xff] %vm580, 0.0
          %582 = vst.msk [vmem:[#allocation4 + $0x8] sm:$0xff] %vm580, 0.0
          %583 = vst.msk [vmem:[#allocation4 + $0x10] sm:$0xff] %vm580, 0.0
          %584 = vst.msk [vmem:[#allocation4 + $0x18] sm:$0xff] %vm580, 0.0
          %585 = vst.msk [vmem:[#allocation4 + $0x20] sm:$0xff] %vm580, 0.0
          %586 = vst.msk [vmem:[#allocation4 + $0x28] sm:$0xff] %vm580, 0.0
          %587 = vst.msk [vmem:[#allocation4 + $0x30] sm:$0xff] %vm580, 0.0
          %588 = vst.msk [vmem:[#allocation4 + $0x38] sm:$0xff] %vm580, 0.0
          %589 = vst.msk [vmem:[#allocation4 + $0x40] sm:$0xff] %vm580, 0.0
          %590 = vst.msk [vmem:[#allocation4 + $0x48] sm:$0xff] %vm580, 0.0
          %591 = vst.msk [vmem:[#allocation4 + $0x50] sm:$0xff] %vm580, 0.0
          %592 = vst.msk [vmem:[#allocation4 + $0x58] sm:$0xff] %vm580, 0.0
          %593 = vst.msk [vmem:[#allocation4 + $0x60] sm:$0xff] %vm580, 0.0
          %594 = vst.msk [vmem:[#allocation4 + $0x68] sm:$0xff] %vm580, 0.0
          %595 = vst.msk [vmem:[#allocation4 + $0x70] sm:$0xff] %vm580, 0.0
          %596 = vst.msk [vmem:[#allocation4 + $0x78] sm:$0xff] %vm580, 0.0
        $region93: #{han_forward.7} parent=84 // pred_fallthru
          _
        %p597 = scmp.eq.s32.totalorder %s26, 0
        %p598 = pnand %p597, %p543
        %p599 = pneg %p598
        // Predicated region
        $region94: #{han_forward.7} parent=84 // pred_check
          _
        $region95: #{han_forward.7} parent=84 // pred_check_branch
          %601 = sbr.rel (%p598) target = $region97
        $region96: #{han_forward.7} parent=84 // pred_region
          %602 = vst [vmem:[#allocation5] sm:$0x1] 0.0
        $region97: #{han_forward.7} parent=84 // pred_fallthru
          _
        %v603 = vld [vmem:[%s446] sm:$0xf]
        %v604 = vld [vmem:[%s446 + $0x4] sm:$0xf]
        %v605 = vld [vmem:[%s446 + $0x8] sm:$0xf]
        %v606 = vld [vmem:[%s446 + $0xc] sm:$0xf]
        %v607 = vld [vmem:[%s446 + $0x10] sm:$0xf]
        %v608 = vld [vmem:[%s446 + $0x14] sm:$0xf]
        %v609 = vld [vmem:[%s446 + $0x18] sm:$0xf]
        %v610 = vld [vmem:[%s446 + $0x1c] sm:$0xf]
        %v611 = vld [vmem:[%s446 + $0x20] sm:$0xf]
        %v612 = vld [vmem:[%s446 + $0x24] sm:$0xf]
        %v613 = vld [vmem:[%s446 + $0x28] sm:$0xf]
        %v614 = vld [vmem:[%s446 + $0x2c] sm:$0xf]
        %v615 = vld [vmem:[%s446 + $0x30] sm:$0xf]
        %v616 = vld [vmem:[%s446 + $0x34] sm:$0xf]
        %v617 = vld [vmem:[%s446 + $0x38] sm:$0xf]
        %v618 = vld [vmem:[%s446 + $0x3c] sm:$0xf]
        %v619 = vunpack.c.l.bf16 %v603
        %v620 = vunpack.c.l.bf16 %v604
        %v621 = vunpack.c.l.bf16 %v605
        %v622 = vunpack.c.l.bf16 %v606
        %v623 = vunpack.c.l.bf16 %v607
        %v624 = vunpack.c.l.bf16 %v608
        %v625 = vunpack.c.l.bf16 %v609
        %v626 = vunpack.c.l.bf16 %v610
        %v627 = vunpack.c.l.bf16 %v611
        %v628 = vunpack.c.l.bf16 %v612
        %v629 = vunpack.c.l.bf16 %v613
        %v630 = vunpack.c.l.bf16 %v614
        %v631 = vunpack.c.l.bf16 %v615
        %v632 = vunpack.c.l.bf16 %v616
        %v633 = vunpack.c.l.bf16 %v617
        %v634 = vunpack.c.l.bf16 %v618
        %v635 = vsub.f32 %v619, 1.0
        %v636 = vsub.f32 %v620, 1.0
        %v637 = vsub.f32 %v621, 1.0
        %v638 = vsub.f32 %v622, 1.0
        %v639 = vsub.f32 %v623, 1.0
        %v640 = vsub.f32 %v624, 1.0
        %v641 = vsub.f32 %v625, 1.0
        %v642 = vsub.f32 %v626, 1.0
        %v643 = vsub.f32 %v627, 1.0
        %v644 = vsub.f32 %v628, 1.0
        %v645 = vsub.f32 %v629, 1.0
        %v646 = vsub.f32 %v630, 1.0
        %v647 = vsub.f32 %v631, 1.0
        %v648 = vsub.f32 %v632, 1.0
        %v649 = vsub.f32 %v633, 1.0
        %v650 = vsub.f32 %v634, 1.0
        %v651 = vmul.f32 %v635, 1e+30
        %v652 = vmul.f32 %v636, 1e+30
        %v653 = vmul.f32 %v637, 1e+30
        %v654 = vmul.f32 %v638, 1e+30
        %v655 = vmul.f32 %v639, 1e+30
        %v656 = vmul.f32 %v640, 1e+30
        %v657 = vmul.f32 %v641, 1e+30
        %v658 = vmul.f32 %v642, 1e+30
        %v659 = vmul.f32 %v643, 1e+30
        %v660 = vmul.f32 %v644, 1e+30
        %v661 = vmul.f32 %v645, 1e+30
        %v662 = vmul.f32 %v646, 1e+30
        %v663 = vmul.f32 %v647, 1e+30
        %v664 = vmul.f32 %v648, 1e+30
        %v665 = vmul.f32 %v649, 1e+30
        %v666 = vmul.f32 %v650, 1e+30
        %v667 = vld [vmem:[%s514] sm:$0xf]
        %v668 = vld [vmem:[%s514 + $0x4] sm:$0xf]
        %v669 = vld [vmem:[%s514 + $0x8] sm:$0xf]
        %v670 = vld [vmem:[%s514 + $0xc] sm:$0xf]
        %v671 = vld [vmem:[%s514 + $0x10] sm:$0xf]
        %v672 = vld [vmem:[%s514 + $0x14] sm:$0xf]
        %v673 = vld [vmem:[%s514 + $0x18] sm:$0xf]
        %v674 = vld [vmem:[%s514 + $0x1c] sm:$0xf]
        %v675 = vld [vmem:[%s514 + $0x20] sm:$0xf]
        %v676 = vld [vmem:[%s514 + $0x24] sm:$0xf]
        %v677 = vld [vmem:[%s514 + $0x28] sm:$0xf]
        %v678 = vld [vmem:[%s514 + $0x2c] sm:$0xf]
        %v679 = vld [vmem:[%s514 + $0x30] sm:$0xf]
        %v680 = vld [vmem:[%s514 + $0x34] sm:$0xf]
        %v681 = vld [vmem:[%s514 + $0x38] sm:$0xf]
        %v682 = vld [vmem:[%s514 + $0x3c] sm:$0xf]
        %v683 = vunpack.c.l.bf16 %v667
        %v684 = vunpack.c.l.bf16 %v668
        %v685 = vunpack.c.l.bf16 %v669
        %v686 = vunpack.c.l.bf16 %v670
        %v687 = vunpack.c.l.bf16 %v671
        %v688 = vunpack.c.l.bf16 %v672
        %v689 = vunpack.c.l.bf16 %v673
        %v690 = vunpack.c.l.bf16 %v674
        %v691 = vunpack.c.l.bf16 %v675
        %v692 = vunpack.c.l.bf16 %v676
        %v693 = vunpack.c.l.bf16 %v677
        %v694 = vunpack.c.l.bf16 %v678
        %v695 = vunpack.c.l.bf16 %v679
        %v696 = vunpack.c.l.bf16 %v680
        %v697 = vunpack.c.l.bf16 %v681
        %v698 = vunpack.c.l.bf16 %v682
        %v699 = vld [vmem:[%s524] sm:$0xf]
        %v700 = vld [vmem:[%s524 + $0x4] sm:$0xf]
        %v701 = vld [vmem:[%s524 + $0x8] sm:$0xf]
        %v702 = vld [vmem:[%s524 + $0xc] sm:$0xf]
        %v703 = vld [vmem:[%s524 + $0x10] sm:$0xf]
        %v704 = vld [vmem:[%s524 + $0x14] sm:$0xf]
        %v705 = vld [vmem:[%s524 + $0x18] sm:$0xf]
        %v706 = vld [vmem:[%s524 + $0x1c] sm:$0xf]
        %v707 = vld [vmem:[%s524 + $0x20] sm:$0xf]
        %v708 = vld [vmem:[%s524 + $0x24] sm:$0xf]
        %v709 = vld [vmem:[%s524 + $0x28] sm:$0xf]
        %v710 = vld [vmem:[%s524 + $0x2c] sm:$0xf]
        %v711 = vld [vmem:[%s524 + $0x30] sm:$0xf]
        %v712 = vld [vmem:[%s524 + $0x34] sm:$0xf]
        %v713 = vld [vmem:[%s524 + $0x38] sm:$0xf]
        %v714 = vld [vmem:[%s524 + $0x3c] sm:$0xf]
        %v715 = vunpack.c.l.bf16 %v699
        %v716 = vunpack.c.l.bf16 %v700
        %v717 = vunpack.c.l.bf16 %v701
        %v718 = vunpack.c.l.bf16 %v702
        %v719 = vunpack.c.l.bf16 %v703
        %v720 = vunpack.c.l.bf16 %v704
        %v721 = vunpack.c.l.bf16 %v705
        %v722 = vunpack.c.l.bf16 %v706
        %v723 = vunpack.c.l.bf16 %v707
        %v724 = vunpack.c.l.bf16 %v708
        %v725 = vunpack.c.l.bf16 %v709
        %v726 = vunpack.c.l.bf16 %v710
        %v727 = vunpack.c.l.bf16 %v711
        %v728 = vunpack.c.l.bf16 %v712
        %v729 = vunpack.c.l.bf16 %v713
        %v730 = vunpack.c.l.bf16 %v714
        %747 = vrot.lane.b32.xlu0 %v715, 112
        %v748 = vpop.permute.xlu0 %747
        %749 = vrot.lane.b32.xlu0 %v716, 112
        %v750 = vpop.permute.xlu0 %749
        %751 = vrot.lane.b32.xlu0 %v717, 112
        %v752 = vpop.permute.xlu0 %751
        %753 = vrot.lane.b32.xlu0 %v718, 112
        %v754 = vpop.permute.xlu0 %753
        %755 = vrot.lane.b32.xlu0 %v719, 112
        %v756 = vpop.permute.xlu0 %755
        %757 = vrot.lane.b32.xlu0 %v720, 112
        %v758 = vpop.permute.xlu0 %757
        %759 = vrot.lane.b32.xlu0 %v721, 112
        %v760 = vpop.permute.xlu0 %759
        %761 = vrot.lane.b32.xlu0 %v722, 112
        %v762 = vpop.permute.xlu0 %761
        %763 = vrot.lane.b32.xlu0 %v723, 112
        %v764 = vpop.permute.xlu0 %763
        %765 = vrot.lane.b32.xlu0 %v724, 112
        %v766 = vpop.permute.xlu0 %765
        %767 = vrot.lane.b32.xlu0 %v725, 112
        %v768 = vpop.permute.xlu0 %767
        %769 = vrot.lane.b32.xlu0 %v726, 112
        %v770 = vpop.permute.xlu0 %769
        %771 = vrot.lane.b32.xlu0 %v727, 112
        %v772 = vpop.permute.xlu0 %771
        %773 = vrot.lane.b32.xlu0 %v728, 112
        %v774 = vpop.permute.xlu0 %773
        %775 = vrot.lane.b32.xlu0 %v729, 112
        %v776 = vpop.permute.xlu0 %775
        %777 = vrot.lane.b32.xlu0 %v730, 112
        %v778 = vpop.permute.xlu0 %777
        %795 = vxpose.xlu0.b32.start [1/16] %v748, 128
        %796 = vxpose.xlu0.b32.cont [2/16] %v750, 128
        %797 = vxpose.xlu0.b32.cont [3/16] %v752, 128
        %798 = vxpose.xlu0.b32.cont [4/16] %v754, 128
        %799 = vxpose.xlu0.b32.cont [5/16] %v756, 128
        %800 = vxpose.xlu0.b32.cont [6/16] %v758, 128
        %801 = vxpose.xlu0.b32.cont [7/16] %v760, 128
        %802 = vxpose.xlu0.b32.cont [8/16] %v762, 128
        %803 = vxpose.xlu0.b32.cont [9/16] %v764, 128
        %804 = vxpose.xlu0.b32.cont [10/16] %v766, 128
        %805 = vxpose.xlu0.b32.cont [11/16] %v768, 128
        %806 = vxpose.xlu0.b32.cont [12/16] %v770, 128
        %807 = vxpose.xlu0.b32.cont [13/16] %v772, 128
        %808 = vxpose.xlu0.b32.cont [14/16] %v774, 128
        %809 = vxpose.xlu0.b32.cont [15/16] %v776, 128
        %810 = vxpose.xlu0.b32.end [16/16] %v778, 128
        %v811 = vpop.trf.xlu0
        %v812 = vpop.trf.xlu0
        %v813 = vpop.trf.xlu0
        %v814 = vpop.trf.xlu0
        %v815 = vpop.trf.xlu0
        %v816 = vpop.trf.xlu0
        %v817 = vpop.trf.xlu0
        %v818 = vpop.trf.xlu0
        %v819 = vpop.trf.xlu0
        %v820 = vpop.trf.xlu0
        %v821 = vpop.trf.xlu0
        %v822 = vpop.trf.xlu0
        %v823 = vpop.trf.xlu0
        %v824 = vpop.trf.xlu0
        %v825 = vpop.trf.xlu0
        %v826 = vpop.trf.xlu0
        %828 = vset.pattern.permute.xlu0 18
        %829 = vperm.xlu0 %828, %v683
        %v830 = vpop.permute.xlu0 %829
        %833 = vset.pattern.permute.xlu0 18
        %834 = vperm.xlu0 %833, %v684
        %v835 = vpop.permute.xlu0 %834
        %838 = vset.pattern.permute.xlu0 18
        %839 = vperm.xlu0 %838, %v685
        %v840 = vpop.permute.xlu0 %839
        %843 = vset.pattern.permute.xlu0 18
        %844 = vperm.xlu0 %843, %v686
        %v845 = vpop.permute.xlu0 %844
        %848 = vset.pattern.permute.xlu0 18
        %849 = vperm.xlu0 %848, %v687
        %v850 = vpop.permute.xlu0 %849
        %853 = vset.pattern.permute.xlu0 18
        %854 = vperm.xlu0 %853, %v688
        %v855 = vpop.permute.xlu0 %854
        %858 = vset.pattern.permute.xlu0 18
        %859 = vperm.xlu0 %858, %v689
        %v860 = vpop.permute.xlu0 %859
        %863 = vset.pattern.permute.xlu0 18
        %864 = vperm.xlu0 %863, %v690
        %v865 = vpop.permute.xlu0 %864
        %868 = vset.pattern.permute.xlu0 18
        %869 = vperm.xlu0 %868, %v691
        %v870 = vpop.permute.xlu0 %869
        %873 = vset.pattern.permute.xlu0 18
        %874 = vperm.xlu0 %873, %v692
        %v875 = vpop.permute.xlu0 %874
        %878 = vset.pattern.permute.xlu0 18
        %879 = vperm.xlu0 %878, %v693
        %v880 = vpop.permute.xlu0 %879
        %883 = vset.pattern.permute.xlu0 18
        %884 = vperm.xlu0 %883, %v694
        %v885 = vpop.permute.xlu0 %884
        %888 = vset.pattern.permute.xlu0 18
        %889 = vperm.xlu0 %888, %v695
        %v890 = vpop.permute.xlu0 %889
        %893 = vset.pattern.permute.xlu0 18
        %894 = vperm.xlu0 %893, %v696
        %v895 = vpop.permute.xlu0 %894
        %898 = vset.pattern.permute.xlu0 18
        %899 = vperm.xlu0 %898, %v697
        %v900 = vpop.permute.xlu0 %899
        %903 = vset.pattern.permute.xlu0 18
        %904 = vperm.xlu0 %903, %v698
        %v905 = vpop.permute.xlu0 %904
        %v907 = vlaneseq
        %v908 = vshrl.u32 %v907, 7
        %v909 = vsub.s32 0, %v908
        %v910 = vrot.slane %v811, %v909
        %v911 = vadd.f32 %v830, %v910
        %v912 = vadd.f32 %v835, %v910
        %v913 = vadd.f32 %v840, %v910
        %v914 = vadd.f32 %v845, %v910
        %v915 = vadd.f32 %v850, %v910
        %v916 = vadd.f32 %v855, %v910
        %v917 = vadd.f32 %v860, %v910
        %v918 = vadd.f32 %v865, %v910
        %v919 = vadd.f32 %v870, %v910
        %v920 = vadd.f32 %v875, %v910
        %v921 = vadd.f32 %v880, %v910
        %v922 = vadd.f32 %v885, %v910
        %v923 = vadd.f32 %v890, %v910
        %v924 = vadd.f32 %v895, %v910
        %v925 = vadd.f32 %v900, %v910
        %v926 = vadd.f32 %v905, %v910
        %vm927 = vcmp.gt.f32.partialorder %v911, 0.0
        %vm928 = vcmp.gt.f32.partialorder %v912, 0.0
        %vm929 = vcmp.gt.f32.partialorder %v913, 0.0
        %vm930 = vcmp.gt.f32.partialorder %v914, 0.0
        %vm931 = vcmp.gt.f32.partialorder %v915, 0.0
        %vm932 = vcmp.gt.f32.partialorder %v916, 0.0
        %vm933 = vcmp.gt.f32.partialorder %v917, 0.0
        %vm934 = vcmp.gt.f32.partialorder %v918, 0.0
        %vm935 = vcmp.gt.f32.partialorder %v919, 0.0
        %vm936 = vcmp.gt.f32.partialorder %v920, 0.0
        %vm937 = vcmp.gt.f32.partialorder %v921, 0.0
        %vm938 = vcmp.gt.f32.partialorder %v922, 0.0
        %vm939 = vcmp.gt.f32.partialorder %v923, 0.0
        %vm940 = vcmp.gt.f32.partialorder %v924, 0.0
        %vm941 = vcmp.gt.f32.partialorder %v925, 0.0
        %vm942 = vcmp.gt.f32.partialorder %v926, 0.0
        %v943 = vmul.f32 %v911, 0.2
        %v944 = vmul.f32 %v912, 0.2
        %v945 = vmul.f32 %v913, 0.2
        %v946 = vmul.f32 %v914, 0.2
        %v947 = vmul.f32 %v915, 0.2
        %v948 = vmul.f32 %v916, 0.2
        %v949 = vmul.f32 %v917, 0.2
        %v950 = vmul.f32 %v918, 0.2
        %v951 = vmul.f32 %v919, 0.2
        %v952 = vmul.f32 %v920, 0.2
        %v953 = vmul.f32 %v921, 0.2
        %v954 = vmul.f32 %v922, 0.2
        %v955 = vmul.f32 %v923, 0.2
        %v956 = vmul.f32 %v924, 0.2
        %v957 = vmul.f32 %v925, 0.2
        %v958 = vmul.f32 %v926, 0.2
        %v959 = vsel %vm927, %v911, %v943
        %v960 = vsel %vm928, %v912, %v944
        %v961 = vsel %vm929, %v913, %v945
        %v962 = vsel %vm930, %v914, %v946
        %v963 = vsel %vm931, %v915, %v947
        %v964 = vsel %vm932, %v916, %v948
        %v965 = vsel %vm933, %v917, %v949
        %v966 = vsel %vm934, %v918, %v950
        %v967 = vsel %vm935, %v919, %v951
        %v968 = vsel %vm936, %v920, %v952
        %v969 = vsel %vm937, %v921, %v953
        %v970 = vsel %vm938, %v922, %v954
        %v971 = vsel %vm939, %v923, %v955
        %v972 = vsel %vm940, %v924, %v956
        %v973 = vsel %vm941, %v925, %v957
        %v974 = vsel %vm942, %v926, %v958
        %v975 = vadd.f32 %v959, %v651
        %v976 = vadd.f32 %v960, %v652
        %v977 = vadd.f32 %v961, %v653
        %v978 = vadd.f32 %v962, %v654
        %v979 = vadd.f32 %v963, %v655
        %v980 = vadd.f32 %v964, %v656
        %v981 = vadd.f32 %v965, %v657
        %v982 = vadd.f32 %v966, %v658
        %v983 = vadd.f32 %v967, %v659
        %v984 = vadd.f32 %v968, %v660
        %v985 = vadd.f32 %v969, %v661
        %v986 = vadd.f32 %v970, %v662
        %v987 = vadd.f32 %v971, %v663
        %v988 = vadd.f32 %v972, %v664
        %v989 = vadd.f32 %v973, %v665
        %v990 = vadd.f32 %v974, %v666
        %v991 = vld [vmem:[#allocation2] sm:$0xff]
        %v992 = vld [vmem:[#allocation2 + $0x8] sm:$0xff]
        %v993 = vld [vmem:[#allocation2 + $0x10] sm:$0xff]
        %v994 = vld [vmem:[#allocation2 + $0x18] sm:$0xff]
        %v995 = vld [vmem:[#allocation2 + $0x20] sm:$0xff]
        %v996 = vld [vmem:[#allocation2 + $0x28] sm:$0xff]
        %v997 = vld [vmem:[#allocation2 + $0x30] sm:$0xff]
        %v998 = vld [vmem:[#allocation2 + $0x38] sm:$0xff]
        %v999 = vld [vmem:[#allocation2 + $0x40] sm:$0xff]
        %v1000 = vld [vmem:[#allocation2 + $0x48] sm:$0xff]
        %v1001 = vld [vmem:[#allocation2 + $0x50] sm:$0xff]
        %v1002 = vld [vmem:[#allocation2 + $0x58] sm:$0xff]
        %v1003 = vld [vmem:[#allocation2 + $0x60] sm:$0xff]
        %v1004 = vld [vmem:[#allocation2 + $0x68] sm:$0xff]
        %v1005 = vld [vmem:[#allocation2 + $0x70] sm:$0xff]
        %v1006 = vld [vmem:[#allocation2 + $0x78] sm:$0xff]
        %1007 = vmax.xlane.f32.xlu0 %v975
        %v1008 = vpop.xlane.xlu0 %1007
        %1009 = vmax.xlane.f32.xlu0 %v976
        %v1010 = vpop.xlane.xlu0 %1009
        %1011 = vmax.xlane.f32.xlu0 %v977
        %v1012 = vpop.xlane.xlu0 %1011
        %1013 = vmax.xlane.f32.xlu0 %v978
        %v1014 = vpop.xlane.xlu0 %1013
        %1015 = vmax.xlane.f32.xlu0 %v979
        %v1016 = vpop.xlane.xlu0 %1015
        %1017 = vmax.xlane.f32.xlu0 %v980
        %v1018 = vpop.xlane.xlu0 %1017
        %1019 = vmax.xlane.f32.xlu0 %v981
        %v1020 = vpop.xlane.xlu0 %1019
        %1021 = vmax.xlane.f32.xlu0 %v982
        %v1022 = vpop.xlane.xlu0 %1021
        %1023 = vmax.xlane.f32.xlu0 %v983
        %v1024 = vpop.xlane.xlu0 %1023
        %1025 = vmax.xlane.f32.xlu0 %v984
        %v1026 = vpop.xlane.xlu0 %1025
        %1027 = vmax.xlane.f32.xlu0 %v985
        %v1028 = vpop.xlane.xlu0 %1027
        %1029 = vmax.xlane.f32.xlu0 %v986
        %v1030 = vpop.xlane.xlu0 %1029
        %1031 = vmax.xlane.f32.xlu0 %v987
        %v1032 = vpop.xlane.xlu0 %1031
        %1033 = vmax.xlane.f32.xlu0 %v988
        %v1034 = vpop.xlane.xlu0 %1033
        %1035 = vmax.xlane.f32.xlu0 %v989
        %v1036 = vpop.xlane.xlu0 %1035
        %1037 = vmax.xlane.f32.xlu0 %v990
        %v1038 = vpop.xlane.xlu0 %1037
        %v1039 = vmax.f32 %v991, %v1008
        %v1040 = vmax.f32 %v992, %v1010
        %v1041 = vmax.f32 %v993, %v1012
        %v1042 = vmax.f32 %v994, %v1014
        %v1043 = vmax.f32 %v995, %v1016
        %v1044 = vmax.f32 %v996, %v1018
        %v1045 = vmax.f32 %v997, %v1020
        %v1046 = vmax.f32 %v998, %v1022
        %v1047 = vmax.f32 %v999, %v1024
        %v1048 = vmax.f32 %v1000, %v1026
        %v1049 = vmax.f32 %v1001, %v1028
        %v1050 = vmax.f32 %v1002, %v1030
        %v1051 = vmax.f32 %v1003, %v1032
        %v1052 = vmax.f32 %v1004, %v1034
        %v1053 = vmax.f32 %v1005, %v1036
        %v1054 = vmax.f32 %v1006, %v1038
        %v1055 = vsub.f32 %v991, %v1039
        %v1056 = vsub.f32 %v992, %v1040
        %v1057 = vsub.f32 %v993, %v1041
        %v1058 = vsub.f32 %v994, %v1042
        %v1059 = vsub.f32 %v995, %v1043
        %v1060 = vsub.f32 %v996, %v1044
        %v1061 = vsub.f32 %v997, %v1045
        %v1062 = vsub.f32 %v998, %v1046
        %v1063 = vsub.f32 %v999, %v1047
        %v1064 = vsub.f32 %v1000, %v1048
        %v1065 = vsub.f32 %v1001, %v1049
        %v1066 = vsub.f32 %v1002, %v1050
        %v1067 = vsub.f32 %v1003, %v1051
        %v1068 = vsub.f32 %v1004, %v1052
        %v1069 = vsub.f32 %v1005, %v1053
        %v1070 = vsub.f32 %v1006, %v1054
        %v1071 = vmul.f32 %v1055, 1.442695
        %v1072 = vpow.pop %v1071
        %v1073 = vmul.f32 %v1056, 1.442695
        %v1074 = vpow.pop %v1073
        %v1075 = vmul.f32 %v1057, 1.442695
        %v1076 = vpow.pop %v1075
        %v1077 = vmul.f32 %v1058, 1.442695
        %v1078 = vpow.pop %v1077
        %v1079 = vmul.f32 %v1059, 1.442695
        %v1080 = vpow.pop %v1079
        %v1081 = vmul.f32 %v1060, 1.442695
        %v1082 = vpow.pop %v1081
        %v1083 = vmul.f32 %v1061, 1.442695
        %v1084 = vpow.pop %v1083
        %v1085 = vmul.f32 %v1062, 1.442695
        %v1086 = vpow.pop %v1085
        %v1087 = vmul.f32 %v1063, 1.442695
        %v1088 = vpow.pop %v1087
        %v1089 = vmul.f32 %v1064, 1.442695
        %v1090 = vpow.pop %v1089
        %v1091 = vmul.f32 %v1065, 1.442695
        %v1092 = vpow.pop %v1091
        %v1093 = vmul.f32 %v1066, 1.442695
        %v1094 = vpow.pop %v1093
        %v1095 = vmul.f32 %v1067, 1.442695
        %v1096 = vpow.pop %v1095
        %v1097 = vmul.f32 %v1068, 1.442695
        %v1098 = vpow.pop %v1097
        %v1099 = vmul.f32 %v1069, 1.442695
        %v1100 = vpow.pop %v1099
        %v1101 = vmul.f32 %v1070, 1.442695
        %v1102 = vpow.pop %v1101
        %1104 = vset.pattern.permute.xlu0 0
        %1105 = vperm.xlu0 %1104, %v1039
        %v1106 = vpop.permute.xlu0 %1105
        %1109 = vset.pattern.permute.xlu0 0
        %1110 = vperm.xlu0 %1109, %v1040
        %v1111 = vpop.permute.xlu0 %1110
        %1114 = vset.pattern.permute.xlu0 0
        %1115 = vperm.xlu0 %1114, %v1041
        %v1116 = vpop.permute.xlu0 %1115
        %1119 = vset.pattern.permute.xlu0 0
        %1120 = vperm.xlu0 %1119, %v1042
        %v1121 = vpop.permute.xlu0 %1120
        %1124 = vset.pattern.permute.xlu0 0
        %1125 = vperm.xlu0 %1124, %v1043
        %v1126 = vpop.permute.xlu0 %1125
        %1129 = vset.pattern.permute.xlu0 0
        %1130 = vperm.xlu0 %1129, %v1044
        %v1131 = vpop.permute.xlu0 %1130
        %1134 = vset.pattern.permute.xlu0 0
        %1135 = vperm.xlu0 %1134, %v1045
        %v1136 = vpop.permute.xlu0 %1135
        %1139 = vset.pattern.permute.xlu0 0
        %1140 = vperm.xlu0 %1139, %v1046
        %v1141 = vpop.permute.xlu0 %1140
        %1144 = vset.pattern.permute.xlu0 0
        %1145 = vperm.xlu0 %1144, %v1047
        %v1146 = vpop.permute.xlu0 %1145
        %1149 = vset.pattern.permute.xlu0 0
        %1150 = vperm.xlu0 %1149, %v1048
        %v1151 = vpop.permute.xlu0 %1150
        %1154 = vset.pattern.permute.xlu0 0
        %1155 = vperm.xlu0 %1154, %v1049
        %v1156 = vpop.permute.xlu0 %1155
        %1159 = vset.pattern.permute.xlu0 0
        %1160 = vperm.xlu0 %1159, %v1050
        %v1161 = vpop.permute.xlu0 %1160
        %1164 = vset.pattern.permute.xlu0 0
        %1165 = vperm.xlu0 %1164, %v1051
        %v1166 = vpop.permute.xlu0 %1165
        %1169 = vset.pattern.permute.xlu0 0
        %1170 = vperm.xlu0 %1169, %v1052
        %v1171 = vpop.permute.xlu0 %1170
        %1174 = vset.pattern.permute.xlu0 0
        %1175 = vperm.xlu0 %1174, %v1053
        %v1176 = vpop.permute.xlu0 %1175
        %1179 = vset.pattern.permute.xlu0 0
        %1180 = vperm.xlu0 %1179, %v1054
        %v1181 = vpop.permute.xlu0 %1180
        %v1183 = vsub.f32 %v975, %v1106
        %v1184 = vsub.f32 %v976, %v1111
        %v1185 = vsub.f32 %v977, %v1116
        %v1186 = vsub.f32 %v978, %v1121
        %v1187 = vsub.f32 %v979, %v1126
        %v1188 = vsub.f32 %v980, %v1131
        %v1189 = vsub.f32 %v981, %v1136
        %v1190 = vsub.f32 %v982, %v1141
        %v1191 = vsub.f32 %v983, %v1146
        %v1192 = vsub.f32 %v984, %v1151
        %v1193 = vsub.f32 %v985, %v1156
        %v1194 = vsub.f32 %v986, %v1161
        %v1195 = vsub.f32 %v987, %v1166
        %v1196 = vsub.f32 %v988, %v1171
        %v1197 = vsub.f32 %v989, %v1176
        %v1198 = vsub.f32 %v990, %v1181
        %v1199 = vmul.f32 %v1183, 1.442695
        %v1200 = vpow.pop %v1199
        %v1201 = vmul.f32 %v1184, 1.442695
        %v1202 = vpow.pop %v1201
        %v1203 = vmul.f32 %v1185, 1.442695
        %v1204 = vpow.pop %v1203
        %v1205 = vmul.f32 %v1186, 1.442695
        %v1206 = vpow.pop %v1205
        %v1207 = vmul.f32 %v1187, 1.442695
        %v1208 = vpow.pop %v1207
        %v1209 = vmul.f32 %v1188, 1.442695
        %v1210 = vpow.pop %v1209
        %v1211 = vmul.f32 %v1189, 1.442695
        %v1212 = vpow.pop %v1211
        %v1213 = vmul.f32 %v1190, 1.442695
        %v1214 = vpow.pop %v1213
        %v1215 = vmul.f32 %v1191, 1.442695
        %v1216 = vpow.pop %v1215
        %v1217 = vmul.f32 %v1192, 1.442695
        %v1218 = vpow.pop %v1217
        %v1219 = vmul.f32 %v1193, 1.442695
        %v1220 = vpow.pop %v1219
        %v1221 = vmul.f32 %v1194, 1.442695
        %v1222 = vpow.pop %v1221
        %v1223 = vmul.f32 %v1195, 1.442695
        %v1224 = vpow.pop %v1223
        %v1225 = vmul.f32 %v1196, 1.442695
        %v1226 = vpow.pop %v1225
        %v1227 = vmul.f32 %v1197, 1.442695
        %v1228 = vpow.pop %v1227
        %v1229 = vmul.f32 %v1198, 1.442695
        %v1230 = vpow.pop %v1229
        %v1231 = vld [vmem:[#allocation3] sm:$0xff]
        %v1232 = vld [vmem:[#allocation3 + $0x8] sm:$0xff]
        %v1233 = vld [vmem:[#allocation3 + $0x10] sm:$0xff]
        %v1234 = vld [vmem:[#allocation3 + $0x18] sm:$0xff]
        %v1235 = vld [vmem:[#allocation3 + $0x20] sm:$0xff]
        %v1236 = vld [vmem:[#allocation3 + $0x28] sm:$0xff]
        %v1237 = vld [vmem:[#allocation3 + $0x30] sm:$0xff]
        %v1238 = vld [vmem:[#allocation3 + $0x38] sm:$0xff]
        %v1239 = vld [vmem:[#allocation3 + $0x40] sm:$0xff]
        %v1240 = vld [vmem:[#allocation3 + $0x48] sm:$0xff]
        %v1241 = vld [vmem:[#allocation3 + $0x50] sm:$0xff]
        %v1242 = vld [vmem:[#allocation3 + $0x58] sm:$0xff]
        %v1243 = vld [vmem:[#allocation3 + $0x60] sm:$0xff]
        %v1244 = vld [vmem:[#allocation3 + $0x68] sm:$0xff]
        %v1245 = vld [vmem:[#allocation3 + $0x70] sm:$0xff]
        %v1246 = vld [vmem:[#allocation3 + $0x78] sm:$0xff]
        %v1247 = vmul.f32 %v1072, %v1231
        %v1248 = vmul.f32 %v1074, %v1232
        %v1249 = vmul.f32 %v1076, %v1233
        %v1250 = vmul.f32 %v1078, %v1234
        %v1251 = vmul.f32 %v1080, %v1235
        %v1252 = vmul.f32 %v1082, %v1236
        %v1253 = vmul.f32 %v1084, %v1237
        %v1254 = vmul.f32 %v1086, %v1238
        %v1255 = vmul.f32 %v1088, %v1239
        %v1256 = vmul.f32 %v1090, %v1240
        %v1257 = vmul.f32 %v1092, %v1241
        %v1258 = vmul.f32 %v1094, %v1242
        %v1259 = vmul.f32 %v1096, %v1243
        %v1260 = vmul.f32 %v1098, %v1244
        %v1261 = vmul.f32 %v1100, %v1245
        %v1262 = vmul.f32 %v1102, %v1246
        %1263 = vadd.xlane.f32.xlu0 %v1200
        %v1264 = vpop.xlane.xlu0 %1263
        %1265 = vadd.xlane.f32.xlu0 %v1202
        %v1266 = vpop.xlane.xlu0 %1265
        %1267 = vadd.xlane.f32.xlu0 %v1204
        %v1268 = vpop.xlane.xlu0 %1267
        %1269 = vadd.xlane.f32.xlu0 %v1206
        %v1270 = vpop.xlane.xlu0 %1269
        %1271 = vadd.xlane.f32.xlu0 %v1208
        %v1272 = vpop.xlane.xlu0 %1271
        %1273 = vadd.xlane.f32.xlu0 %v1210
        %v1274 = vpop.xlane.xlu0 %1273
        %1275 = vadd.xlane.f32.xlu0 %v1212
        %v1276 = vpop.xlane.xlu0 %1275
        %1277 = vadd.xlane.f32.xlu0 %v1214
        %v1278 = vpop.xlane.xlu0 %1277
        %1279 = vadd.xlane.f32.xlu0 %v1216
        %v1280 = vpop.xlane.xlu0 %1279
        %1281 = vadd.xlane.f32.xlu0 %v1218
        %v1282 = vpop.xlane.xlu0 %1281
        %1283 = vadd.xlane.f32.xlu0 %v1220
        %v1284 = vpop.xlane.xlu0 %1283
        %1285 = vadd.xlane.f32.xlu0 %v1222
        %v1286 = vpop.xlane.xlu0 %1285
        %1287 = vadd.xlane.f32.xlu0 %v1224
        %v1288 = vpop.xlane.xlu0 %1287
        %1289 = vadd.xlane.f32.xlu0 %v1226
        %v1290 = vpop.xlane.xlu0 %1289
        %1291 = vadd.xlane.f32.xlu0 %v1228
        %v1292 = vpop.xlane.xlu0 %1291
        %1293 = vadd.xlane.f32.xlu0 %v1230
        %v1294 = vpop.xlane.xlu0 %1293
        %v1295 = vadd.f32 %v1247, %v1264
        %v1296 = vadd.f32 %v1248, %v1266
        %v1297 = vadd.f32 %v1249, %v1268
        %v1298 = vadd.f32 %v1250, %v1270
        %v1299 = vadd.f32 %v1251, %v1272
        %v1300 = vadd.f32 %v1252, %v1274
        %v1301 = vadd.f32 %v1253, %v1276
        %v1302 = vadd.f32 %v1254, %v1278
        %v1303 = vadd.f32 %v1255, %v1280
        %v1304 = vadd.f32 %v1256, %v1282
        %v1305 = vadd.f32 %v1257, %v1284
        %v1306 = vadd.f32 %v1258, %v1286
        %v1307 = vadd.f32 %v1259, %v1288
        %v1308 = vadd.f32 %v1260, %v1290
        %v1309 = vadd.f32 %v1261, %v1292
        %v1310 = vadd.f32 %v1262, %v1294
        %vm1311 = vcmask 7168
        %1312 = vst.msk [vmem:[#allocation3] sm:$0xff] %vm1311, %v1295
        %1313 = vst.msk [vmem:[#allocation3 + $0x8] sm:$0xff] %vm1311, %v1296
        %1314 = vst.msk [vmem:[#allocation3 + $0x10] sm:$0xff] %vm1311, %v1297
        %1315 = vst.msk [vmem:[#allocation3 + $0x18] sm:$0xff] %vm1311, %v1298
        %1316 = vst.msk [vmem:[#allocation3 + $0x20] sm:$0xff] %vm1311, %v1299
        %1317 = vst.msk [vmem:[#allocation3 + $0x28] sm:$0xff] %vm1311, %v1300
        %1318 = vst.msk [vmem:[#allocation3 + $0x30] sm:$0xff] %vm1311, %v1301
        %1319 = vst.msk [vmem:[#allocation3 + $0x38] sm:$0xff] %vm1311, %v1302
        %1320 = vst.msk [vmem:[#allocation3 + $0x40] sm:$0xff] %vm1311, %v1303
        %1321 = vst.msk [vmem:[#allocation3 + $0x48] sm:$0xff] %vm1311, %v1304
        %1322 = vst.msk [vmem:[#allocation3 + $0x50] sm:$0xff] %vm1311, %v1305
        %1323 = vst.msk [vmem:[#allocation3 + $0x58] sm:$0xff] %vm1311, %v1306
        %1324 = vst.msk [vmem:[#allocation3 + $0x60] sm:$0xff] %vm1311, %v1307
        %1325 = vst.msk [vmem:[#allocation3 + $0x68] sm:$0xff] %vm1311, %v1308
        %1326 = vst.msk [vmem:[#allocation3 + $0x70] sm:$0xff] %vm1311, %v1309
        %1327 = vst.msk [vmem:[#allocation3 + $0x78] sm:$0xff] %vm1311, %v1310
        %v1328 = vld [vmem:[%s524] sm:$0xf]
        %v1329 = vld [vmem:[%s524 + $0x4] sm:$0xf]
        %v1330 = vld [vmem:[%s524 + $0x8] sm:$0xf]
        %v1331 = vld [vmem:[%s524 + $0xc] sm:$0xf]
        %v1332 = vld [vmem:[%s524 + $0x10] sm:$0xf]
        %v1333 = vld [vmem:[%s524 + $0x14] sm:$0xf]
        %v1334 = vld [vmem:[%s524 + $0x18] sm:$0xf]
        %v1335 = vld [vmem:[%s524 + $0x1c] sm:$0xf]
        %v1336 = vld [vmem:[%s524 + $0x20] sm:$0xf]
        %v1337 = vld [vmem:[%s524 + $0x24] sm:$0xf]
        %v1338 = vld [vmem:[%s524 + $0x28] sm:$0xf]
        %v1339 = vld [vmem:[%s524 + $0x2c] sm:$0xf]
        %v1340 = vld [vmem:[%s524 + $0x30] sm:$0xf]
        %v1341 = vld [vmem:[%s524 + $0x34] sm:$0xf]
        %v1342 = vld [vmem:[%s524 + $0x38] sm:$0xf]
        %v1343 = vld [vmem:[%s524 + $0x3c] sm:$0xf]
        %v1344 = vld [vmem:[#allocation4] sm:$0xff]
        %v1345 = vld [vmem:[#allocation4 + $0x8] sm:$0xff]
        %v1346 = vld [vmem:[#allocation4 + $0x10] sm:$0xff]
        %v1347 = vld [vmem:[#allocation4 + $0x18] sm:$0xff]
        %v1348 = vld [vmem:[#allocation4 + $0x20] sm:$0xff]
        %v1349 = vld [vmem:[#allocation4 + $0x28] sm:$0xff]
        %v1350 = vld [vmem:[#allocation4 + $0x30] sm:$0xff]
        %v1351 = vld [vmem:[#allocation4 + $0x38] sm:$0xff]
        %v1352 = vld [vmem:[#allocation4 + $0x40] sm:$0xff]
        %v1353 = vld [vmem:[#allocation4 + $0x48] sm:$0xff]
        %v1354 = vld [vmem:[#allocation4 + $0x50] sm:$0xff]
        %v1355 = vld [vmem:[#allocation4 + $0x58] sm:$0xff]
        %v1356 = vld [vmem:[#allocation4 + $0x60] sm:$0xff]
        %v1357 = vld [vmem:[#allocation4 + $0x68] sm:$0xff]
        %v1358 = vld [vmem:[#allocation4 + $0x70] sm:$0xff]
        %v1359 = vld [vmem:[#allocation4 + $0x78] sm:$0xff]
        %1361 = vset.pattern.permute.xlu0 0
        %1362 = vperm.xlu0 %1361, %v1072
        %v1363 = vpop.permute.xlu0 %1362
        %1366 = vset.pattern.permute.xlu0 0
        %1367 = vperm.xlu0 %1366, %v1074
        %v1368 = vpop.permute.xlu0 %1367
        %1371 = vset.pattern.permute.xlu0 0
        %1372 = vperm.xlu0 %1371, %v1076
        %v1373 = vpop.permute.xlu0 %1372
        %1376 = vset.pattern.permute.xlu0 0
        %1377 = vperm.xlu0 %1376, %v1078
        %v1378 = vpop.permute.xlu0 %1377
        %1381 = vset.pattern.permute.xlu0 0
        %1382 = vperm.xlu0 %1381, %v1080
        %v1383 = vpop.permute.xlu0 %1382
        %1386 = vset.pattern.permute.xlu0 0
        %1387 = vperm.xlu0 %1386, %v1082
        %v1388 = vpop.permute.xlu0 %1387
        %1391 = vset.pattern.permute.xlu0 0
        %1392 = vperm.xlu0 %1391, %v1084
        %v1393 = vpop.permute.xlu0 %1392
        %1396 = vset.pattern.permute.xlu0 0
        %1397 = vperm.xlu0 %1396, %v1086
        %v1398 = vpop.permute.xlu0 %1397
        %1401 = vset.pattern.permute.xlu0 0
        %1402 = vperm.xlu0 %1401, %v1088
        %v1403 = vpop.permute.xlu0 %1402
        %1406 = vset.pattern.permute.xlu0 0
        %1407 = vperm.xlu0 %1406, %v1090
        %v1408 = vpop.permute.xlu0 %1407
        %1411 = vset.pattern.permute.xlu0 0
        %1412 = vperm.xlu0 %1411, %v1092
        %v1413 = vpop.permute.xlu0 %1412
        %1416 = vset.pattern.permute.xlu0 0
        %1417 = vperm.xlu0 %1416, %v1094
        %v1418 = vpop.permute.xlu0 %1417
        %1421 = vset.pattern.permute.xlu0 0
        %1422 = vperm.xlu0 %1421, %v1096
        %v1423 = vpop.permute.xlu0 %1422
        %1426 = vset.pattern.permute.xlu0 0
        %1427 = vperm.xlu0 %1426, %v1098
        %v1428 = vpop.permute.xlu0 %1427
        %1431 = vset.pattern.permute.xlu0 0
        %1432 = vperm.xlu0 %1431, %v1100
        %v1433 = vpop.permute.xlu0 %1432
        %1436 = vset.pattern.permute.xlu0 0
        %1437 = vperm.xlu0 %1436, %v1102
        %v1438 = vpop.permute.xlu0 %1437
        %v1440 = vmul.f32 %v1363, %v1344
        %v1441 = vmul.f32 %v1368, %v1345
        %v1442 = vmul.f32 %v1373, %v1346
        %v1443 = vmul.f32 %v1378, %v1347
        %v1444 = vmul.f32 %v1383, %v1348
        %v1445 = vmul.f32 %v1388, %v1349
        %v1446 = vmul.f32 %v1393, %v1350
        %v1447 = vmul.f32 %v1398, %v1351
        %v1448 = vmul.f32 %v1403, %v1352
        %v1449 = vmul.f32 %v1408, %v1353
        %v1450 = vmul.f32 %v1413, %v1354
        %v1451 = vmul.f32 %v1418, %v1355
        %v1452 = vmul.f32 %v1423, %v1356
        %v1453 = vmul.f32 %v1428, %v1357
        %v1454 = vmul.f32 %v1433, %v1358
        %v1455 = vmul.f32 %v1438, %v1359
        %v1456 = vpack.c.bf16 %v1202, %v1200
        %v1457 = vpack.c.bf16 %v1206, %v1204
        %v1458 = vpack.c.bf16 %v1210, %v1208
        %v1459 = vpack.c.bf16 %v1214, %v1212
        %v1460 = vpack.c.bf16 %v1218, %v1216
        %v1461 = vpack.c.bf16 %v1222, %v1220
        %v1462 = vpack.c.bf16 %v1226, %v1224
        %v1463 = vpack.c.bf16 %v1230, %v1228
        %v1480 = vunpack.c.l.b16 %v1328
        %v1481 = vunpack.c.l.b16 %v1329
        %v1482 = vunpack.c.l.b16 %v1330
        %v1483 = vunpack.c.l.b16 %v1331
        %v1484 = vunpack.c.l.b16 %v1332
        %v1485 = vunpack.c.l.b16 %v1333
        %v1486 = vunpack.c.l.b16 %v1334
        %v1487 = vunpack.c.l.b16 %v1335
        %v1488 = vunpack.c.l.b16 %v1336
        %v1489 = vunpack.c.l.b16 %v1337
        %v1490 = vunpack.c.l.b16 %v1338
        %v1491 = vunpack.c.l.b16 %v1339
        %v1492 = vunpack.c.l.b16 %v1340
        %v1493 = vunpack.c.l.b16 %v1341
        %v1494 = vunpack.c.l.b16 %v1342
        %v1495 = vunpack.c.l.b16 %v1343
        %v1496 = vpack.c.b16 %v1481, %v1480
        %v1497 = vpack.c.b16 %v1483, %v1482
        %v1498 = vpack.c.b16 %v1485, %v1484
        %v1499 = vpack.c.b16 %v1487, %v1486
        %v1500 = vpack.c.b16 %v1489, %v1488
        %v1501 = vpack.c.b16 %v1491, %v1490
        %v1502 = vpack.c.b16 %v1493, %v1492
        %v1503 = vpack.c.b16 %v1495, %v1494
        %1512 = vmatprep.subr.bf16.mxu0 0
        %1513 = vmatpush1.bf16.msra.mxu0 %v1496
        %1514 = vmatprep.subr.bf16.mxu0 0
        %1515 = vmatpush1.bf16.msra.mxu0 %v1497
        %1516 = vmatprep.subr.bf16.mxu0 0
        %1517 = vmatpush1.bf16.msra.mxu0 %v1498
        %1518 = vmatprep.subr.bf16.mxu0 0
        %1519 = vmatpush1.bf16.msra.mxu0 %v1499
        %1520 = vmatprep.subr.bf16.mxu0 0
        %1521 = vmatpush1.bf16.msra.mxu0 %v1500
        %1522 = vmatprep.subr.bf16.mxu0 0
        %1523 = vmatpush1.bf16.msra.mxu0 %v1501
        %1524 = vmatprep.subr.bf16.mxu0 0
        %1525 = vmatpush1.bf16.msra.mxu0 %v1502
        %1526 = vmatprep.subr.bf16.mxu0 0
        %1527 = vmatpush1.bf16.msra.mxu0 %v1503
        %1528 = vmatprep.subr.bf16.mxu0 0
        %1529 = vmatpush1.bf16.msra.mxu0 0
        %1530 = vmatprep.subr.bf16.mxu0 0
        %1531 = vmatpush1.bf16.msra.mxu0 0
        %1532 = vmatprep.subr.bf16.mxu0 0
        %1533 = vmatpush1.bf16.msra.mxu0 0
        %1534 = vmatprep.subr.bf16.mxu0 0
        %1535 = vmatpush1.bf16.msra.mxu0 0
        %1536 = vmatprep.subr.bf16.mxu0 0
        %1537 = vmatpush1.bf16.msra.mxu0 0
        %1538 = vmatprep.subr.bf16.mxu0 0
        %1539 = vmatpush1.bf16.msra.mxu0 0
        %1540 = vmatprep.subr.bf16.mxu0 0
        %1541 = vmatpush1.bf16.msra.mxu0 0
        %1542 = vmatprep.subr.bf16.mxu0 0
        %1543 = vmatpush1.bf16.msra.mxu0 0
        %1544 = vmatprep.mubr.bf16.mxu0 0
        %1545 = vmatmul.mubr.bf16.gmra.mrb[0].mxu0 %v1456
        %v1546 = vpop.f32.mrb[0].mxu0
        %v1547 = vadd.f32 0.0, %v1546
        %v1548 = vpop.f32.mrb[0].mxu0
        %v1549 = vpop.f32.mrb[0].mxu0
        %v1550 = vadd.f32 0.0, %v1549
        %v1551 = vpop.f32.mrb[0].mxu0
        %1552 = vmatprep.mubr.bf16.mxu0 0
        %1553 = vmatmul.mubr.bf16.gmra.mrb[0].mxu0 %v1457
        %v1554 = vpop.f32.mrb[0].mxu0
        %v1555 = vadd.f32 0.0, %v1554
        %v1556 = vpop.f32.mrb[0].mxu0
        %v1557 = vpop.f32.mrb[0].mxu0
        %v1558 = vadd.f32 0.0, %v1557
        %v1559 = vpop.f32.mrb[0].mxu0
        %1560 = vmatprep.mubr.bf16.mxu0 0
        %1561 = vmatmul.mubr.bf16.gmra.mrb[0].mxu0 %v1458
        %v1562 = vpop.f32.mrb[0].mxu0
        %v1563 = vadd.f32 0.0, %v1562
        %v1564 = vpop.f32.mrb[0].mxu0
        %v1565 = vpop.f32.mrb[0].mxu0
        %v1566 = vadd.f32 0.0, %v1565
        %v1567 = vpop.f32.mrb[0].mxu0
        %1568 = vmatprep.mubr.bf16.mxu0 0
        %1569 = vmatmul.mubr.bf16.gmra.mrb[0].mxu0 %v1459
        %v1570 = vpop.f32.mrb[0].mxu0
        %v1571 = vadd.f32 0.0, %v1570
        %v1572 = vpop.f32.mrb[0].mxu0
        %v1573 = vpop.f32.mrb[0].mxu0
        %v1574 = vadd.f32 0.0, %v1573
        %v1575 = vpop.f32.mrb[0].mxu0
        %1576 = vmatprep.mubr.bf16.mxu0 0
        %1577 = vmatmul.mubr.bf16.gmra.mrb[0].mxu0 %v1460
        %v1578 = vpop.f32.mrb[0].mxu0
        %v1579 = vadd.f32 0.0, %v1578
        %v1580 = vpop.f32.mrb[0].mxu0
        %v1581 = vpop.f32.mrb[0].mxu0
        %v1582 = vadd.f32 0.0, %v1581
        %v1583 = vpop.f32.mrb[0].mxu0
        %1584 = vmatprep.mubr.bf16.mxu0 0
        %1585 = vmatmul.mubr.bf16.gmra.mrb[0].mxu0 %v1461
        %v1586 = vpop.f32.mrb[0].mxu0
        %v1587 = vadd.f32 0.0, %v1586
        %v1588 = vpop.f32.mrb[0].mxu0
        %v1589 = vpop.f32.mrb[0].mxu0
        %v1590 = vadd.f32 0.0, %v1589
        %v1591 = vpop.f32.mrb[0].mxu0
        %1592 = vmatprep.mubr.bf16.mxu0 0
        %1593 = vmatmul.mubr.bf16.gmra.mrb[0].mxu0 %v1462
        %v1594 = vpop.f32.mrb[0].mxu0
        %v1595 = vadd.f32 0.0, %v1594
        %v1596 = vpop.f32.mrb[0].mxu0
        %v1597 = vpop.f32.mrb[0].mxu0
        %v1598 = vadd.f32 0.0, %v1597
        %v1599 = vpop.f32.mrb[0].mxu0
        %1600 = vmatprep.mubr.bf16.mxu0 0
        %1601 = vmatmul.mubr.bf16.gmra.mrb[0].mxu0 %v1463
        %v1602 = vpop.f32.mrb[0].mxu0
        %v1603 = vadd.f32 0.0, %v1602
        %v1604 = vpop.f32.mrb[0].mxu0
        %v1605 = vpop.f32.mrb[0].mxu0
        %v1606 = vadd.f32 0.0, %v1605
        %v1607 = vpop.f32.mrb[0].mxu0
        %1608 = vdwg.mxu0
        %v1609 = vadd.f32 %v1440, %v1547
        %v1610 = vadd.f32 %v1441, %v1550
        %v1611 = vadd.f32 %v1442, %v1555
        %v1612 = vadd.f32 %v1443, %v1558
        %v1613 = vadd.f32 %v1444, %v1563
        %v1614 = vadd.f32 %v1445, %v1566
        %v1615 = vadd.f32 %v1446, %v1571
        %v1616 = vadd.f32 %v1447, %v1574
        %v1617 = vadd.f32 %v1448, %v1579
        %v1618 = vadd.f32 %v1449, %v1582
        %v1619 = vadd.f32 %v1450, %v1587
        %v1620 = vadd.f32 %v1451, %v1590
        %v1621 = vadd.f32 %v1452, %v1595
        %v1622 = vadd.f32 %v1453, %v1598
        %v1623 = vadd.f32 %v1454, %v1603
        %v1624 = vadd.f32 %v1455, %v1606
        %vm1625 = vcmask 64512
        %1626 = vst.msk [vmem:[#allocation4] sm:$0xff] %vm1625, %v1609
        %1627 = vst.msk [vmem:[#allocation4 + $0x8] sm:$0xff] %vm1625, %v1610
        %1628 = vst.msk [vmem:[#allocation4 + $0x10] sm:$0xff] %vm1625, %v1611
        %1629 = vst.msk [vmem:[#allocation4 + $0x18] sm:$0xff] %vm1625, %v1612
        %1630 = vst.msk [vmem:[#allocation4 + $0x20] sm:$0xff] %vm1625, %v1613
        %1631 = vst.msk [vmem:[#allocation4 + $0x28] sm:$0xff] %vm1625, %v1614
        %1632 = vst.msk [vmem:[#allocation4 + $0x30] sm:$0xff] %vm1625, %v1615
        %1633 = vst.msk [vmem:[#allocation4 + $0x38] sm:$0xff] %vm1625, %v1616
        %1634 = vst.msk [vmem:[#allocation4 + $0x40] sm:$0xff] %vm1625, %v1617
        %1635 = vst.msk [vmem:[#allocation4 + $0x48] sm:$0xff] %vm1625, %v1618
        %1636 = vst.msk [vmem:[#allocation4 + $0x50] sm:$0xff] %vm1625, %v1619
        %1637 = vst.msk [vmem:[#allocation4 + $0x58] sm:$0xff] %vm1625, %v1620
        %1638 = vst.msk [vmem:[#allocation4 + $0x60] sm:$0xff] %vm1625, %v1621
        %1639 = vst.msk [vmem:[#allocation4 + $0x68] sm:$0xff] %vm1625, %v1622
        %1640 = vst.msk [vmem:[#allocation4 + $0x70] sm:$0xff] %vm1625, %v1623
        %1641 = vst.msk [vmem:[#allocation4 + $0x78] sm:$0xff] %vm1625, %v1624
        %1642 = vst.msk [vmem:[#allocation2] sm:$0xff] %vm1311, %v1039
        %1643 = vst.msk [vmem:[#allocation2 + $0x8] sm:$0xff] %vm1311, %v1040
        %1644 = vst.msk [vmem:[#allocation2 + $0x10] sm:$0xff] %vm1311, %v1041
        %1645 = vst.msk [vmem:[#allocation2 + $0x18] sm:$0xff] %vm1311, %v1042
        %1646 = vst.msk [vmem:[#allocation2 + $0x20] sm:$0xff] %vm1311, %v1043
        %1647 = vst.msk [vmem:[#allocation2 + $0x28] sm:$0xff] %vm1311, %v1044
        %1648 = vst.msk [vmem:[#allocation2 + $0x30] sm:$0xff] %vm1311, %v1045
        %1649 = vst.msk [vmem:[#allocation2 + $0x38] sm:$0xff] %vm1311, %v1046
        %1650 = vst.msk [vmem:[#allocation2 + $0x40] sm:$0xff] %vm1311, %v1047
        %1651 = vst.msk [vmem:[#allocation2 + $0x48] sm:$0xff] %vm1311, %v1048
        %1652 = vst.msk [vmem:[#allocation2 + $0x50] sm:$0xff] %vm1311, %v1049
        %1653 = vst.msk [vmem:[#allocation2 + $0x58] sm:$0xff] %vm1311, %v1050
        %1654 = vst.msk [vmem:[#allocation2 + $0x60] sm:$0xff] %vm1311, %v1051
        %1655 = vst.msk [vmem:[#allocation2 + $0x68] sm:$0xff] %vm1311, %v1052
        %1656 = vst.msk [vmem:[#allocation2 + $0x70] sm:$0xff] %vm1311, %v1053
        %1657 = vst.msk [vmem:[#allocation2 + $0x78] sm:$0xff] %vm1311, %v1054
        %1658 = vset.pattern.permute.xlu0 19
        %1659 = vperm.xlu0 %1658, %v683
        %v1660 = vpop.permute.xlu0 %1659
        %1662 = vset.pattern.permute.xlu0 19
        %1663 = vperm.xlu0 %1662, %v684
        %v1664 = vpop.permute.xlu0 %1663
        %1666 = vset.pattern.permute.xlu0 19
        %1667 = vperm.xlu0 %1666, %v685
        %v1668 = vpop.permute.xlu0 %1667
        %1670 = vset.pattern.permute.xlu0 19
        %1671 = vperm.xlu0 %1670, %v686
        %v1672 = vpop.permute.xlu0 %1671
        %1674 = vset.pattern.permute.xlu0 19
        %1675 = vperm.xlu0 %1674, %v687
        %v1676 = vpop.permute.xlu0 %1675
        %1678 = vset.pattern.permute.xlu0 19
        %1679 = vperm.xlu0 %1678, %v688
        %v1680 = vpop.permute.xlu0 %1679
        %1682 = vset.pattern.permute.xlu0 19
        %1683 = vperm.xlu0 %1682, %v689
        %v1684 = vpop.permute.xlu0 %1683
        %1686 = vset.pattern.permute.xlu0 19
        %1687 = vperm.xlu0 %1686, %v690
        %v1688 = vpop.permute.xlu0 %1687
        %1690 = vset.pattern.permute.xlu0 19
        %1691 = vperm.xlu0 %1690, %v691
        %v1692 = vpop.permute.xlu0 %1691
        %1694 = vset.pattern.permute.xlu0 19
        %1695 = vperm.xlu0 %1694, %v692
        %v1696 = vpop.permute.xlu0 %1695
        %1698 = vset.pattern.permute.xlu0 19
        %1699 = vperm.xlu0 %1698, %v693
        %v1700 = vpop.permute.xlu0 %1699
        %1702 = vset.pattern.permute.xlu0 19
        %1703 = vperm.xlu0 %1702, %v694
        %v1704 = vpop.permute.xlu0 %1703
        %1706 = vset.pattern.permute.xlu0 19
        %1707 = vperm.xlu0 %1706, %v695
        %v1708 = vpop.permute.xlu0 %1707
        %1710 = vset.pattern.permute.xlu0 19
        %1711 = vperm.xlu0 %1710, %v696
        %v1712 = vpop.permute.xlu0 %1711
        %1714 = vset.pattern.permute.xlu0 19
        %1715 = vperm.xlu0 %1714, %v697
        %v1716 = vpop.permute.xlu0 %1715
        %1718 = vset.pattern.permute.xlu0 19
        %1719 = vperm.xlu0 %1718, %v698
        %v1720 = vpop.permute.xlu0 %1719
        %v1722 = vlaneseq
        %v1723 = vshrl.u32 %v1722, 7
        %v1724 = vsub.s32 1, %v1723
        %v1725 = vrot.slane %v811, %v1724
        %v1726 = vadd.f32 %v1660, %v1725
        %v1727 = vadd.f32 %v1664, %v1725
        %v1728 = vadd.f32 %v1668, %v1725
        %v1729 = vadd.f32 %v1672, %v1725
        %v1730 = vadd.f32 %v1676, %v1725
        %v1731 = vadd.f32 %v1680, %v1725
        %v1732 = vadd.f32 %v1684, %v1725
        %v1733 = vadd.f32 %v1688, %v1725
        %v1734 = vadd.f32 %v1692, %v1725
        %v1735 = vadd.f32 %v1696, %v1725
        %v1736 = vadd.f32 %v1700, %v1725
        %v1737 = vadd.f32 %v1704, %v1725
        %v1738 = vadd.f32 %v1708, %v1725
        %v1739 = vadd.f32 %v1712, %v1725
        %v1740 = vadd.f32 %v1716, %v1725
        %v1741 = vadd.f32 %v1720, %v1725
        %vm1742 = vcmp.gt.f32.partialorder %v1726, 0.0
        %vm1743 = vcmp.gt.f32.partialorder %v1727, 0.0
        %vm1744 = vcmp.gt.f32.partialorder %v1728, 0.0
        %vm1745 = vcmp.gt.f32.partialorder %v1729, 0.0
        %vm1746 = vcmp.gt.f32.partialorder %v1730, 0.0
        %vm1747 = vcmp.gt.f32.partialorder %v1731, 0.0
        %vm1748 = vcmp.gt.f32.partialorder %v1732, 0.0
        %vm1749 = vcmp.gt.f32.partialorder %v1733, 0.0
        %vm1750 = vcmp.gt.f32.partialorder %v1734, 0.0
        %vm1751 = vcmp.gt.f32.partialorder %v1735, 0.0
        %vm1752 = vcmp.gt.f32.partialorder %v1736, 0.0
        %vm1753 = vcmp.gt.f32.partialorder %v1737, 0.0
        %vm1754 = vcmp.gt.f32.partialorder %v1738, 0.0
        %vm1755 = vcmp.gt.f32.partialorder %v1739, 0.0
        %vm1756 = vcmp.gt.f32.partialorder %v1740, 0.0
        %vm1757 = vcmp.gt.f32.partialorder %v1741, 0.0
        %v1758 = vmul.f32 %v1726, 0.2
        %v1759 = vmul.f32 %v1727, 0.2
        %v1760 = vmul.f32 %v1728, 0.2
        %v1761 = vmul.f32 %v1729, 0.2
        %v1762 = vmul.f32 %v1730, 0.2
        %v1763 = vmul.f32 %v1731, 0.2
        %v1764 = vmul.f32 %v1732, 0.2
        %v1765 = vmul.f32 %v1733, 0.2
        %v1766 = vmul.f32 %v1734, 0.2
        %v1767 = vmul.f32 %v1735, 0.2
        %v1768 = vmul.f32 %v1736, 0.2
        %v1769 = vmul.f32 %v1737, 0.2
        %v1770 = vmul.f32 %v1738, 0.2
        %v1771 = vmul.f32 %v1739, 0.2
        %v1772 = vmul.f32 %v1740, 0.2
        %v1773 = vmul.f32 %v1741, 0.2
        %v1774 = vsel %vm1742, %v1726, %v1758
        %v1775 = vsel %vm1743, %v1727, %v1759
        %v1776 = vsel %vm1744, %v1728, %v1760
        %v1777 = vsel %vm1745, %v1729, %v1761
        %v1778 = vsel %vm1746, %v1730, %v1762
        %v1779 = vsel %vm1747, %v1731, %v1763
        %v1780 = vsel %vm1748, %v1732, %v1764
        %v1781 = vsel %vm1749, %v1733, %v1765
        %v1782 = vsel %vm1750, %v1734, %v1766
        %v1783 = vsel %vm1751, %v1735, %v1767
        %v1784 = vsel %vm1752, %v1736, %v1768
        %v1785 = vsel %vm1753, %v1737, %v1769
        %v1786 = vsel %vm1754, %v1738, %v1770
        %v1787 = vsel %vm1755, %v1739, %v1771
        %v1788 = vsel %vm1756, %v1740, %v1772
        %v1789 = vsel %vm1757, %v1741, %v1773
        %v1790 = vadd.f32 %v1774, %v651
        %v1791 = vadd.f32 %v1775, %v652
        %v1792 = vadd.f32 %v1776, %v653
        %v1793 = vadd.f32 %v1777, %v654
        %v1794 = vadd.f32 %v1778, %v655
        %v1795 = vadd.f32 %v1779, %v656
        %v1796 = vadd.f32 %v1780, %v657
        %v1797 = vadd.f32 %v1781, %v658
        %v1798 = vadd.f32 %v1782, %v659
        %v1799 = vadd.f32 %v1783, %v660
        %v1800 = vadd.f32 %v1784, %v661
        %v1801 = vadd.f32 %v1785, %v662
        %v1802 = vadd.f32 %v1786, %v663
        %v1803 = vadd.f32 %v1787, %v664
        %v1804 = vadd.f32 %v1788, %v665
        %v1805 = vadd.f32 %v1789, %v666
        %v1806 = vld [vmem:[#allocation2] sm:$0xff]
        %v1807 = vld [vmem:[#allocation2 + $0x8] sm:$0xff]
        %v1808 = vld [vmem:[#allocation2 + $0x10] sm:$0xff]
        %v1809 = vld [vmem:[#allocation2 + $0x18] sm:$0xff]
        %v1810 = vld [vmem:[#allocation2 + $0x20] sm:$0xff]
        %v1811 = vld [vmem:[#allocation2 + $0x28] sm:$0xff]
        %v1812 = vld [vmem:[#allocation2 + $0x30] sm:$0xff]
        %v1813 = vld [vmem:[#allocation2 + $0x38] sm:$0xff]
        %v1814 = vld [vmem:[#allocation2 + $0x40] sm:$0xff]
        %v1815 = vld [vmem:[#allocation2 + $0x48] sm:$0xff]
        %v1816 = vld [vmem:[#allocation2 + $0x50] sm:$0xff]
        %v1817 = vld [vmem:[#allocation2 + $0x58] sm:$0xff]
        %v1818 = vld [vmem:[#allocation2 + $0x60] sm:$0xff]
        %v1819 = vld [vmem:[#allocation2 + $0x68] sm:$0xff]
        %v1820 = vld [vmem:[#allocation2 + $0x70] sm:$0xff]
        %v1821 = vld [vmem:[#allocation2 + $0x78] sm:$0xff]
        %1822 = vmax.xlane.f32.xlu0 %v1790
        %v1823 = vpop.xlane.xlu0 %1822
        %1824 = vmax.xlane.f32.xlu0 %v1791
        %v1825 = vpop.xlane.xlu0 %1824
        %1826 = vmax.xlane.f32.xlu0 %v1792
        %v1827 = vpop.xlane.xlu0 %1826
        %1828 = vmax.xlane.f32.xlu0 %v1793
        %v1829 = vpop.xlane.xlu0 %1828
        %1830 = vmax.xlane.f32.xlu0 %v1794
        %v1831 = vpop.xlane.xlu0 %1830
        %1832 = vmax.xlane.f32.xlu0 %v1795
        %v1833 = vpop.xlane.xlu0 %1832
        %1834 = vmax.xlane.f32.xlu0 %v1796
        %v1835 = vpop.xlane.xlu0 %1834
        %1836 = vmax.xlane.f32.xlu0 %v1797
        %v1837 = vpop.xlane.xlu0 %1836
        %1838 = vmax.xlane.f32.xlu0 %v1798
        %v1839 = vpop.xlane.xlu0 %1838
        %1840 = vmax.xlane.f32.xlu0 %v1799
        %v1841 = vpop.xlane.xlu0 %1840
        %1842 = vmax.xlane.f32.xlu0 %v1800
        %v1843 = vpop.xlane.xlu0 %1842
        %1844 = vmax.xlane.f32.xlu0 %v1801
        %v1845 = vpop.xlane.xlu0 %1844
        %1846 = vmax.xlane.f32.xlu0 %v1802
        %v1847 = vpop.xlane.xlu0 %1846
        %1848 = vmax.xlane.f32.xlu0 %v1803
        %v1849 = vpop.xlane.xlu0 %1848
        %1850 = vmax.xlane.f32.xlu0 %v1804
        %v1851 = vpop.xlane.xlu0 %1850
        %1852 = vmax.xlane.f32.xlu0 %v1805
        %v1853 = vpop.xlane.xlu0 %1852
        %v1854 = vmax.f32 %v1806, %v1823
        %v1855 = vmax.f32 %v1807, %v1825
        %v1856 = vmax.f32 %v1808, %v1827
        %v1857 = vmax.f32 %v1809, %v1829
        %v1858 = vmax.f32 %v1810, %v1831
        %v1859 = vmax.f32 %v1811, %v1833
        %v1860 = vmax.f32 %v1812, %v1835
        %v1861 = vmax.f32 %v1813, %v1837
        %v1862 = vmax.f32 %v1814, %v1839
        %v1863 = vmax.f32 %v1815, %v1841
        %v1864 = vmax.f32 %v1816, %v1843
        %v1865 = vmax.f32 %v1817, %v1845
        %v1866 = vmax.f32 %v1818, %v1847
        %v1867 = vmax.f32 %v1819, %v1849
        %v1868 = vmax.f32 %v1820, %v1851
        %v1869 = vmax.f32 %v1821, %v1853
        %v1870 = vsub.f32 %v1806, %v1854
        %v1871 = vsub.f32 %v1807, %v1855
        %v1872 = vsub.f32 %v1808, %v1856
        %v1873 = vsub.f32 %v1809, %v1857
        %v1874 = vsub.f32 %v1810, %v1858
        %v1875 = vsub.f32 %v1811, %v1859
        %v1876 = vsub.f32 %v1812, %v1860
        %v1877 = vsub.f32 %v1813, %v1861
        %v1878 = vsub.f32 %v1814, %v1862
        %v1879 = vsub.f32 %v1815, %v1863
        %v1880 = vsub.f32 %v1816, %v1864
        %v1881 = vsub.f32 %v1817, %v1865
        %v1882 = vsub.f32 %v1818, %v1866
        %v1883 = vsub.f32 %v1819, %v1867
        %v1884 = vsub.f32 %v1820, %v1868
        %v1885 = vsub.f32 %v1821, %v1869
        %v1886 = vmul.f32 %v1870, 1.442695
        %v1887 = vpow.pop %v1886
        %v1888 = vmul.f32 %v1871, 1.442695
        %v1889 = vpow.pop %v1888
        %v1890 = vmul.f32 %v1872, 1.442695
        %v1891 = vpow.pop %v1890
        %v1892 = vmul.f32 %v1873, 1.442695
        %v1893 = vpow.pop %v1892
        %v1894 = vmul.f32 %v1874, 1.442695
        %v1895 = vpow.pop %v1894
        %v1896 = vmul.f32 %v1875, 1.442695
        %v1897 = vpow.pop %v1896
        %v1898 = vmul.f32 %v1876, 1.442695
        %v1899 = vpow.pop %v1898
        %v1900 = vmul.f32 %v1877, 1.442695
        %v1901 = vpow.pop %v1900
        %v1902 = vmul.f32 %v1878, 1.442695
        %v1903 = vpow.pop %v1902
        %v1904 = vmul.f32 %v1879, 1.442695
        %v1905 = vpow.pop %v1904
        %v1906 = vmul.f32 %v1880, 1.442695
        %v1907 = vpow.pop %v1906
        %v1908 = vmul.f32 %v1881, 1.442695
        %v1909 = vpow.pop %v1908
        %v1910 = vmul.f32 %v1882, 1.442695
        %v1911 = vpow.pop %v1910
        %v1912 = vmul.f32 %v1883, 1.442695
        %v1913 = vpow.pop %v1912
        %v1914 = vmul.f32 %v1884, 1.442695
        %v1915 = vpow.pop %v1914
        %v1916 = vmul.f32 %v1885, 1.442695
        %v1917 = vpow.pop %v1916
        %1919 = vset.pattern.permute.xlu0 1
        %1920 = vperm.xlu0 %1919, %v1854
        %v1921 = vpop.permute.xlu0 %1920
        %1924 = vset.pattern.permute.xlu0 1
        %1925 = vperm.xlu0 %1924, %v1855
        %v1926 = vpop.permute.xlu0 %1925
        %1929 = vset.pattern.permute.xlu0 1
        %1930 = vperm.xlu0 %1929, %v1856
        %v1931 = vpop.permute.xlu0 %1930
        %1934 = vset.pattern.permute.xlu0 1
        %1935 = vperm.xlu0 %1934, %v1857
        %v1936 = vpop.permute.xlu0 %1935
        %1939 = vset.pattern.permute.xlu0 1
        %1940 = vperm.xlu0 %1939, %v1858
        %v1941 = vpop.permute.xlu0 %1940
        %1944 = vset.pattern.permute.xlu0 1
        %1945 = vperm.xlu0 %1944, %v1859
        %v1946 = vpop.permute.xlu0 %1945
        %1949 = vset.pattern.permute.xlu0 1
        %1950 = vperm.xlu0 %1949, %v1860
        %v1951 = vpop.permute.xlu0 %1950
        %1954 = vset.pattern.permute.xlu0 1
        %1955 = vperm.xlu0 %1954, %v1861
        %v1956 = vpop.permute.xlu0 %1955
        %1959 = vset.pattern.permute.xlu0 1
        %1960 = vperm.xlu0 %1959, %v1862
        %v1961 = vpop.permute.xlu0 %1960
        %1964 = vset.pattern.permute.xlu0 1
        %1965 = vperm.xlu0 %1964, %v1863
        %v1966 = vpop.permute.xlu0 %1965
        %1969 = vset.pattern.permute.xlu0 1
        %1970 = vperm.xlu0 %1969, %v1864
        %v1971 = vpop.permute.xlu0 %1970
        %1974 = vset.pattern.permute.xlu0 1
        %1975 = vperm.xlu0 %1974, %v1865
        %v1976 = vpop.permute.xlu0 %1975
        %1979 = vset.pattern.permute.xlu0 1
        %1980 = vperm.xlu0 %1979, %v1866
        %v1981 = vpop.permute.xlu0 %1980
        %1984 = vset.pattern.permute.xlu0 1
        %1985 = vperm.xlu0 %1984, %v1867
        %v1986 = vpop.permute.xlu0 %1985
        %1989 = vset.pattern.permute.xlu0 1
        %1990 = vperm.xlu0 %1989, %v1868
        %v1991 = vpop.permute.xlu0 %1990
        %1994 = vset.pattern.permute.xlu0 1
        %1995 = vperm.xlu0 %1994, %v1869
        %v1996 = vpop.permute.xlu0 %1995
        %v1998 = vsub.f32 %v1790, %v1921
        %v1999 = vsub.f32 %v1791, %v1926
        %v2000 = vsub.f32 %v1792, %v1931
        %v2001 = vsub.f32 %v1793, %v1936
        %v2002 = vsub.f32 %v1794, %v1941
        %v2003 = vsub.f32 %v1795, %v1946
        %v2004 = vsub.f32 %v1796, %v1951
        %v2005 = vsub.f32 %v1797, %v1956
        %v2006 = vsub.f32 %v1798, %v1961
        %v2007 = vsub.f32 %v1799, %v1966
        %v2008 = vsub.f32 %v1800, %v1971
        %v2009 = vsub.f32 %v1801, %v1976
        %v2010 = vsub.f32 %v1802, %v1981
        %v2011 = vsub.f32 %v1803, %v1986
        %v2012 = vsub.f32 %v1804, %v1991
        %v2013 = vsub.f32 %v1805, %v1996
        %v2014 = vmul.f32 %v1998, 1.442695
        %v2015 = vpow.pop %v2014
        %v2016 = vmul.f32 %v1999, 1.442695
        %v2017 = vpow.pop %v2016
        %v2018 = vmul.f32 %v2000, 1.442695
        %v2019 = vpow.pop %v2018
        %v2020 = vmul.f32 %v2001, 1.442695
        %v2021 = vpow.pop %v2020
        %v2022 = vmul.f32 %v2002, 1.442695
        %v2023 = vpow.pop %v2022
        %v2024 = vmul.f32 %v2003, 1.442695
        %v2025 = vpow.pop %v2024
        %v2026 = vmul.f32 %v2004, 1.442695
        %v2027 = vpow.pop %v2026
        %v2028 = vmul.f32 %v2005, 1.442695
        %v2029 = vpow.pop %v2028
        %v2030 = vmul.f32 %v2006, 1.442695
        %v2031 = vpow.pop %v2030
        %v2032 = vmul.f32 %v2007, 1.442695
        %v2033 = vpow.pop %v2032
        %v2034 = vmul.f32 %v2008, 1.442695
        %v2035 = vpow.pop %v2034
        %v2036 = vmul.f32 %v2009, 1.442695
        %v2037 = vpow.pop %v2036
        %v2038 = vmul.f32 %v2010, 1.442695
        %v2039 = vpow.pop %v2038
        %v2040 = vmul.f32 %v2011, 1.442695
        %v2041 = vpow.pop %v2040
        %v2042 = vmul.f32 %v2012, 1.442695
        %v2043 = vpow.pop %v2042
        %v2044 = vmul.f32 %v2013, 1.442695
        %v2045 = vpow.pop %v2044
        %v2046 = vld [vmem:[#allocation3] sm:$0xff]
        %v2047 = vld [vmem:[#allocation3 + $0x8] sm:$0xff]
        %v2048 = vld [vmem:[#allocation3 + $0x10] sm:$0xff]
        %v2049 = vld [vmem:[#allocation3 + $0x18] sm:$0xff]
        %v2050 = vld [vmem:[#allocation3 + $0x20] sm:$0xff]
        %v2051 = vld [vmem:[#allocation3 + $0x28] sm:$0xff]
        %v2052 = vld [vmem:[#allocation3 + $0x30] sm:$0xff]
        %v2053 = vld [vmem:[#allocation3 + $0x38] sm:$0xff]
        %v2054 = vld [vmem:[#allocation3 + $0x40] sm:$0xff]
        %v2055 = vld [vmem:[#allocation3 + $0x48] sm:$0xff]
        %v2056 = vld [vmem:[#allocation3 + $0x50] sm:$0xff]
        %v2057 = vld [vmem:[#allocation3 + $0x58] sm:$0xff]
        %v2058 = vld [vmem:[#allocation3 + $0x60] sm:$0xff]
        %v2059 = vld [vmem:[#allocation3 + $0x68] sm:$0xff]
        %v2060 = vld [vmem:[#allocation3 + $0x70] sm:$0xff]
        %v2061 = vld [vmem:[#allocation3 + $0x78] sm:$0xff]
        %v2062 = vmul.f32 %v1887, %v2046
        %v2063 = vmul.f32 %v1889, %v2047
        %v2064 = vmul.f32 %v1891, %v2048
        %v2065 = vmul.f32 %v1893, %v2049
        %v2066 = vmul.f32 %v1895, %v2050
        %v2067 = vmul.f32 %v1897, %v2051
        %v2068 = vmul.f32 %v1899, %v2052
        %v2069 = vmul.f32 %v1901, %v2053
        %v2070 = vmul.f32 %v1903, %v2054
        %v2071 = vmul.f32 %v1905, %v2055
        %v2072 = vmul.f32 %v1907, %v2056
        %v2073 = vmul.f32 %v1909, %v2057
        %v2074 = vmul.f32 %v1911, %v2058
        %v2075 = vmul.f32 %v1913, %v2059
        %v2076 = vmul.f32 %v1915, %v2060
        %v2077 = vmul.f32 %v1917, %v2061
        %2078 = vadd.xlane.f32.xlu0 %v2015
        %v2079 = vpop.xlane.xlu0 %2078
        %2080 = vadd.xlane.f32.xlu0 %v2017
        %v2081 = vpop.xlane.xlu0 %2080
        %2082 = vadd.xlane.f32.xlu0 %v2019
        %v2083 = vpop.xlane.xlu0 %2082
        %2084 = vadd.xlane.f32.xlu0 %v2021
        %v2085 = vpop.xlane.xlu0 %2084
        %2086 = vadd.xlane.f32.xlu0 %v2023
        %v2087 = vpop.xlane.xlu0 %2086
        %2088 = vadd.xlane.f32.xlu0 %v2025
        %v2089 = vpop.xlane.xlu0 %2088
        %2090 = vadd.xlane.f32.xlu0 %v2027
        %v2091 = vpop.xlane.xlu0 %2090
        %2092 = vadd.xlane.f32.xlu0 %v2029
        %v2093 = vpop.xlane.xlu0 %2092
        %2094 = vadd.xlane.f32.xlu0 %v2031
        %v2095 = vpop.xlane.xlu0 %2094
        %2096 = vadd.xlane.f32.xlu0 %v2033
        %v2097 = vpop.xlane.xlu0 %2096
        %2098 = vadd.xlane.f32.xlu0 %v2035
        %v2099 = vpop.xlane.xlu0 %2098
        %2100 = vadd.xlane.f32.xlu0 %v2037
        %v2101 = vpop.xlane.xlu0 %2100
        %2102 = vadd.xlane.f32.xlu0 %v2039
        %v2103 = vpop.xlane.xlu0 %2102
        %2104 = vadd.xlane.f32.xlu0 %v2041
        %v2105 = vpop.xlane.xlu0 %2104
        %2106 = vadd.xlane.f32.xlu0 %v2043
        %v2107 = vpop.xlane.xlu0 %2106
        %2108 = vadd.xlane.f32.xlu0 %v2045
        %v2109 = vpop.xlane.xlu0 %2108
        %v2110 = vadd.f32 %v2062, %v2079
        %v2111 = vadd.f32 %v2063, %v2081
        %v2112 = vadd.f32 %v2064, %v2083
        %v2113 = vadd.f32 %v2065, %v2085
        %v2114 = vadd.f32 %v2066, %v2087
        %v2115 = vadd.f32 %v2067, %v2089
        %v2116 = vadd.f32 %v2068, %v2091
        %v2117 = vadd.f32 %v2069, %v2093
        %v2118 = vadd.f32 %v2070, %v2095
        %v2119 = vadd.f32 %v2071, %v2097
        %v2120 = vadd.f32 %v2072, %v2099
        %v2121 = vadd.f32 %v2073, %v2101
        %v2122 = vadd.f32 %v2074, %v2103
        %v2123 = vadd.f32 %v2075, %v2105
        %v2124 = vadd.f32 %v2076, %v2107
        %v2125 = vadd.f32 %v2077, %v2109
        %vm2126 = vcmask 15368
        %2127 = vst.msk [vmem:[#allocation3] sm:$0xff] %vm2126, %v2110
        %2128 = vst.msk [vmem:[#allocation3 + $0x8] sm:$0xff] %vm2126, %v2111
        %2129 = vst.msk [vmem:[#allocation3 + $0x10] sm:$0xff] %vm2126, %v2112
        %2130 = vst.msk [vmem:[#allocation3 + $0x18] sm:$0xff] %vm2126, %v2113
        %2131 = vst.msk [vmem:[#allocation3 + $0x20] sm:$0xff] %vm2126, %v2114
        %2132 = vst.msk [vmem:[#allocation3 + $0x28] sm:$0xff] %vm2126, %v2115
        %2133 = vst.msk [vmem:[#allocation3 + $0x30] sm:$0xff] %vm2126, %v2116
        %2134 = vst.msk [vmem:[#allocation3 + $0x38] sm:$0xff] %vm2126, %v2117
        %2135 = vst.msk [vmem:[#allocation3 + $0x40] sm:$0xff] %vm2126, %v2118
        %2136 = vst.msk [vmem:[#allocation3 + $0x48] sm:$0xff] %vm2126, %v2119
        %2137 = vst.msk [vmem:[#allocation3 + $0x50] sm:$0xff] %vm2126, %v2120
        %2138 = vst.msk [vmem:[#allocation3 + $0x58] sm:$0xff] %vm2126, %v2121
        %2139 = vst.msk [vmem:[#allocation3 + $0x60] sm:$0xff] %vm2126, %v2122
        %2140 = vst.msk [vmem:[#allocation3 + $0x68] sm:$0xff] %vm2126, %v2123
        %2141 = vst.msk [vmem:[#allocation3 + $0x70] sm:$0xff] %vm2126, %v2124
        %2142 = vst.msk [vmem:[#allocation3 + $0x78] sm:$0xff] %vm2126, %v2125
        %v2143 = vld [vmem:[%s524] sm:$0xf]
        %v2144 = vld [vmem:[%s524 + $0x4] sm:$0xf]
        %v2145 = vld [vmem:[%s524 + $0x8] sm:$0xf]
        %v2146 = vld [vmem:[%s524 + $0xc] sm:$0xf]
        %v2147 = vld [vmem:[%s524 + $0x10] sm:$0xf]
        %v2148 = vld [vmem:[%s524 + $0x14] sm:$0xf]
        %v2149 = vld [vmem:[%s524 + $0x18] sm:$0xf]
        %v2150 = vld [vmem:[%s524 + $0x1c] sm:$0xf]
        %v2151 = vld [vmem:[%s524 + $0x20] sm:$0xf]
        %v2152 = vld [vmem:[%s524 + $0x24] sm:$0xf]
        %v2153 = vld [vmem:[%s524 + $0x28] sm:$0xf]
        %v2154 = vld [vmem:[%s524 + $0x2c] sm:$0xf]
        %v2155 = vld [vmem:[%s524 + $0x30] sm:$0xf]
        %v2156 = vld [vmem:[%s524 + $0x34] sm:$0xf]
        %v2157 = vld [vmem:[%s524 + $0x38] sm:$0xf]
        %v2158 = vld [vmem:[%s524 + $0x3c] sm:$0xf]
        %v2159 = vld [vmem:[#allocation4] sm:$0xff]
        %v2160 = vld [vmem:[#allocation4 + $0x8] sm:$0xff]
        %v2161 = vld [vmem:[#allocation4 + $0x10] sm:$0xff]
        %v2162 = vld [vmem:[#allocation4 + $0x18] sm:$0xff]
        %v2163 = vld [vmem:[#allocation4 + $0x20] sm:$0xff]
        %v2164 = vld [vmem:[#allocation4 + $0x28] sm:$0xff]
        %v2165 = vld [vmem:[#allocation4 + $0x30] sm:$0xff]
        %v2166 = vld [vmem:[#allocation4 + $0x38] sm:$0xff]
        %v2167 = vld [vmem:[#allocation4 + $0x40] sm:$0xff]
        %v2168 = vld [vmem:[#allocation4 + $0x48] sm:$0xff]
        %v2169 = vld [vmem:[#allocation4 + $0x50] sm:$0xff]
        %v2170 = vld [vmem:[#allocation4 + $0x58] sm:$0xff]
        %v2171 = vld [vmem:[#allocation4 + $0x60] sm:$0xff]
        %v2172 = vld [vmem:[#allocation4 + $0x68] sm:$0xff]
        %v2173 = vld [vmem:[#allocation4 + $0x70] sm:$0xff]
        %v2174 = vld [vmem:[#allocation4 + $0x78] sm:$0xff]
        %2176 = vset.pattern.permute.xlu0 1
        %2177 = vperm.xlu0 %2176, %v1887
        %v2178 = vpop.permute.xlu0 %2177
        %2181 = vset.pattern.permute.xlu0 1
        %2182 = vperm.xlu0 %2181, %v1889
        %v2183 = vpop.permute.xlu0 %2182
        %2186 = vset.pattern.permute.xlu0 1
        %2187 = vperm.xlu0 %2186, %v1891
        %v2188 = vpop.permute.xlu0 %2187
        %2191 = vset.pattern.permute.xlu0 1
        %2192 = vperm.xlu0 %2191, %v1893
        %v2193 = vpop.permute.xlu0 %2192
        %2196 = vset.pattern.permute.xlu0 1
        %2197 = vperm.xlu0 %2196, %v1895
        %v2198 = vpop.permute.xlu0 %2197
        %2201 = vset.pattern.permute.xlu0 1
        %2202 = vperm.xlu0 %2201, %v1897
        %v2203 = vpop.permute.xlu0 %2202
        %2206 = vset.pattern.permute.xlu0 1
        %2207 = vperm.xlu0 %2206, %v1899
        %v2208 = vpop.permute.xlu0 %2207
        %2211 = vset.pattern.permute.xlu0 1
        %2212 = vperm.xlu0 %2211, %v1901
        %v2213 = vpop.permute.xlu0 %2212
        %2216 = vset.pattern.permute.xlu0 1
        %2217 = vperm.xlu0 %2216, %v1903
        %v2218 = vpop.permute.xlu0 %2217
        %2221 = vset.pattern.permute.xlu0 1
        %2222 = vperm.xlu0 %2221, %v1905
        %v2223 = vpop.permute.xlu0 %2222
        %2226 = vset.pattern.permute.xlu0 1
        %2227 = vperm.xlu0 %2226, %v1907
        %v2228 = vpop.permute.xlu0 %2227
        %2231 = vset.pattern.permute.xlu0 1
        %2232 = vperm.xlu0 %2231, %v1909
        %v2233 = vpop.permute.xlu0 %2232
        %2236 = vset.pattern.permute.xlu0 1
        %2237 = vperm.xlu0 %2236, %v1911
        %v2238 = vpop.permute.xlu0 %2237
        %2241 = vset.pattern.permute.xlu0 1
        %2242 = vperm.xlu0 %2241, %v1913
        %v2243 = vpop.permute.xlu0 %2242
        %2246 = vset.pattern.permute.xlu0 1
        %2247 = vperm.xlu0 %2246, %v1915
        %v2248 = vpop.permute.xlu0 %2247
        %2251 = vset.pattern.permute.xlu0 1
        %2252 = vperm.xlu0 %2251, %v1917
        %v2253 = vpop.permute.xlu0 %2252
        %v2255 = vmul.f32 %v2178, %v2159
        %v2256 = vmul.f32 %v2183, %v2160
        %v2257 = vmul.f32 %v2188, %v2161
        %v2258 = vmul.f32 %v2193, %v2162
        %v2259 = vmul.f32 %v2198, %v2163
        %v2260 = vmul.f32 %v2203, %v2164
        %v2261 = vmul.f32 %v2208, %v2165
        %v2262 = vmul.f32 %v2213, %v2166
        %v2263 = vmul.f32 %v2218, %v2167
        %v2264 = vmul.f32 %v2223, %v2168
        %v2265 = vmul.f32 %v2228, %v2169
        %v2266 = vmul.f32 %v2233, %v2170
        %v2267 = vmul.f32 %v2238, %v2171
        %v2268 = vmul.f32 %v2243, %v2172
        %v2269 = vmul.f32 %v2248, %v2173
        %v2270 = vmul.f32 %v2253, %v2174
        %v2271 = vpack.c.bf16 %v2017, %v2015
        %v2272 = vpack.c.bf16 %v2021, %v2019
        %v2273 = vpack.c.bf16 %v2025, %v2023
        %v2274 = vpack.c.bf16 %v2029, %v2027
        %v2275 = vpack.c.bf16 %v2033, %v2031
        %v2276 = vpack.c.bf16 %v2037, %v2035
        %v2277 = vpack.c.bf16 %v2041, %v2039
        %v2278 = vpack.c.bf16 %v2045, %v2043
        %v2295 = vunpack.c.l.b16 %v2143
        %v2296 = vunpack.c.l.b16 %v2144
        %v2297 = vunpack.c.l.b16 %v2145
        %v2298 = vunpack.c.l.b16 %v2146
        %v2299 = vunpack.c.l.b16 %v2147
        %v2300 = vunpack.c.l.b16 %v2148
        %v2301 = vunpack.c.l.b16 %v2149
        %v2302 = vunpack.c.l.b16 %v2150
        %v2303 = vunpack.c.l.b16 %v2151
        %v2304 = vunpack.c.l.b16 %v2152
        %v2305 = vunpack.c.l.b16 %v2153
        %v2306 = vunpack.c.l.b16 %v2154
        %v2307 = vunpack.c.l.b16 %v2155
        %v2308 = vunpack.c.l.b16 %v2156
        %v2309 = vunpack.c.l.b16 %v2157
        %v2310 = vunpack.c.l.b16 %v2158
        %v2311 = vpack.c.b16 %v2296, %v2295
        %v2312 = vpack.c.b16 %v2298, %v2297
        %v2313 = vpack.c.b16 %v2300, %v2299
        %v2314 = vpack.c.b16 %v2302, %v2301
        %v2315 = vpack.c.b16 %v2304, %v2303
        %v2316 = vpack.c.b16 %v2306, %v2305
        %v2317 = vpack.c.b16 %v2308, %v2307
        %v2318 = vpack.c.b16 %v2310, %v2309
        %2319 = vrot.lane.b32.xlu0 %v2311, 120
        %v2320 = vpop.permute.xlu0 %2319
        %2321 = vrot.lane.b32.xlu0 %v2312, 120
        %v2322 = vpop.permute.xlu0 %2321
        %2323 = vrot.lane.b32.xlu0 %v2313, 120
        %v2324 = vpop.permute.xlu0 %2323
        %2325 = vrot.lane.b32.xlu0 %v2314, 120
        %v2326 = vpop.permute.xlu0 %2325
        %2327 = vrot.lane.b32.xlu0 %v2315, 120
        %v2328 = vpop.permute.xlu0 %2327
        %2329 = vrot.lane.b32.xlu0 %v2316, 120
        %v2330 = vpop.permute.xlu0 %2329
        %2331 = vrot.lane.b32.xlu0 %v2317, 120
        %v2332 = vpop.permute.xlu0 %2331
        %2333 = vrot.lane.b32.xlu0 %v2318, 120
        %v2334 = vpop.permute.xlu0 %2333
        %2343 = vmatprep.subr.bf16.mxu0 0
        %2344 = vmatpush1.bf16.msra.mxu0 %v2320
        %2345 = vmatprep.subr.bf16.mxu0 0
        %2346 = vmatpush1.bf16.msra.mxu0 %v2322
        %2347 = vmatprep.subr.bf16.mxu0 0
        %2348 = vmatpush1.bf16.msra.mxu0 %v2324
        %2349 = vmatprep.subr.bf16.mxu0 0
        %2350 = vmatpush1.bf16.msra.mxu0 %v2326
        %2351 = vmatprep.subr.bf16.mxu0 0
        %2352 = vmatpush1.bf16.msra.mxu0 %v2328
        %2353 = vmatprep.subr.bf16.mxu0 0
        %2354 = vmatpush1.bf16.msra.mxu0 %v2330
        %2355 = vmatprep.subr.bf16.mxu0 0
        %2356 = vmatpush1.bf16.msra.mxu0 %v2332
        %2357 = vmatprep.subr.bf16.mxu0 0
        %2358 = vmatpush1.bf16.msra.mxu0 %v2334
        %2359 = vmatprep.subr.bf16.mxu0 0
        %2360 = vmatpush1.bf16.msra.mxu0 0
        %2361 = vmatprep.subr.bf16.mxu0 0
        %2362 = vmatpush1.bf16.msra.mxu0 0
        %2363 = vmatprep.subr.bf16.mxu0 0
        %2364 = vmatpush1.bf16.msra.mxu0 0
        %2365 = vmatprep.subr.bf16.mxu0 0
        %2366 = vmatpush1.bf16.msra.mxu0 0
        %2367 = vmatprep.subr.bf16.mxu0 0
        %2368 = vmatpush1.bf16.msra.mxu0 0
        %2369 = vmatprep.subr.bf16.mxu0 0
        %2370 = vmatpush1.bf16.msra.mxu0 0
        %2371 = vmatprep.subr.bf16.mxu0 0
        %2372 = vmatpush1.bf16.msra.mxu0 0
        %2373 = vmatprep.subr.bf16.mxu0 0
        %2374 = vmatpush1.bf16.msra.mxu0 0
        %2375 = vmatprep.mubr.bf16.mxu0 0
        %2376 = vmatmul.mubr.bf16.gmra.mrb[0].mxu0 %v2271
        %v2377 = vpop.f32.mrb[0].mxu0
        %v2378 = vadd.f32 0.0, %v2377
        %v2379 = vpop.f32.mrb[0].mxu0
        %v2380 = vpop.f32.mrb[0].mxu0
        %v2381 = vadd.f32 0.0, %v2380
        %v2382 = vpop.f32.mrb[0].mxu0
        %2383 = vmatprep.mubr.bf16.mxu0 0
        %2384 = vmatmul.mubr.bf16.gmra.mrb[0].mxu0 %v2272
        %v2385 = vpop.f32.mrb[0].mxu0
        %v2386 = vadd.f32 0.0, %v2385
        %v2387 = vpop.f32.mrb[0].mxu0
        %v2388 = vpop.f32.mrb[0].mxu0
        %v2389 = vadd.f32 0.0, %v2388
        %v2390 = vpop.f32.mrb[0].mxu0
        %2391 = vmatprep.mubr.bf16.mxu0 0
        %2392 = vmatmul.mubr.bf16.gmra.mrb[0].mxu0 %v2273
        %v2393 = vpop.f32.mrb[0].mxu0
        %v2394 = vadd.f32 0.0, %v2393
        %v2395 = vpop.f32.mrb[0].mxu0
        %v2396 = vpop.f32.mrb[0].mxu0
        %v2397 = vadd.f32 0.0, %v2396
        %v2398 = vpop.f32.mrb[0].mxu0
        %2399 = vmatprep.mubr.bf16.mxu0 0
        %2400 = vmatmul.mubr.bf16.gmra.mrb[0].mxu0 %v2274
        %v2401 = vpop.f32.mrb[0].mxu0
        %v2402 = vadd.f32 0.0, %v2401
        %v2403 = vpop.f32.mrb[0].mxu0
        %v2404 = vpop.f32.mrb[0].mxu0
        %v2405 = vadd.f32 0.0, %v2404
        %v2406 = vpop.f32.mrb[0].mxu0
        %2407 = vmatprep.mubr.bf16.mxu0 0
        %2408 = vmatmul.mubr.bf16.gmra.mrb[0].mxu0 %v2275
        %v2409 = vpop.f32.mrb[0].mxu0
        %v2410 = vadd.f32 0.0, %v2409
        %v2411 = vpop.f32.mrb[0].mxu0
        %v2412 = vpop.f32.mrb[0].mxu0
        %v2413 = vadd.f32 0.0, %v2412
        %v2414 = vpop.f32.mrb[0].mxu0
        %2415 = vmatprep.mubr.bf16.mxu0 0
        %2416 = vmatmul.mubr.bf16.gmra.mrb[0].mxu0 %v2276
        %v2417 = vpop.f32.mrb[0].mxu0
        %v2418 = vadd.f32 0.0, %v2417
        %v2419 = vpop.f32.mrb[0].mxu0
        %v2420 = vpop.f32.mrb[0].mxu0
        %v2421 = vadd.f32 0.0, %v2420
        %v2422 = vpop.f32.mrb[0].mxu0
        %2423 = vmatprep.mubr.bf16.mxu0 0
        %2424 = vmatmul.mubr.bf16.gmra.mrb[0].mxu0 %v2277
        %v2425 = vpop.f32.mrb[0].mxu0
        %v2426 = vadd.f32 0.0, %v2425
        %v2427 = vpop.f32.mrb[0].mxu0
        %v2428 = vpop.f32.mrb[0].mxu0
        %v2429 = vadd.f32 0.0, %v2428
        %v2430 = vpop.f32.mrb[0].mxu0
        %2431 = vmatprep.mubr.bf16.mxu0 0
        %2432 = vmatmul.mubr.bf16.gmra.mrb[0].mxu0 %v2278
        %v2433 = vpop.f32.mrb[0].mxu0
        %v2434 = vadd.f32 0.0, %v2433
        %v2435 = vpop.f32.mrb[0].mxu0
        %v2436 = vpop.f32.mrb[0].mxu0
        %v2437 = vadd.f32 0.0, %v2436
        %v2438 = vpop.f32.mrb[0].mxu0
        %2439 = vdwg.mxu0
        %2456 = vrot.lane.b32.xlu0 %v2378, 8
        %v2457 = vpop.permute.xlu0 %2456
        %2458 = vrot.lane.b32.xlu0 %v2381, 8
        %v2459 = vpop.permute.xlu0 %2458
        %2460 = vrot.lane.b32.xlu0 %v2386, 8
        %v2461 = vpop.permute.xlu0 %2460
        %2462 = vrot.lane.b32.xlu0 %v2389, 8
        %v2463 = vpop.permute.xlu0 %2462
        %2464 = vrot.lane.b32.xlu0 %v2394, 8
        %v2465 = vpop.permute.xlu0 %2464
        %2466 = vrot.lane.b32.xlu0 %v2397, 8
        %v2467 = vpop.permute.xlu0 %2466
        %2468 = vrot.lane.b32.xlu0 %v2402, 8
        %v2469 = vpop.permute.xlu0 %2468
        %2470 = vrot.lane.b32.xlu0 %v2405, 8
        %v2471 = vpop.permute.xlu0 %2470
        %2472 = vrot.lane.b32.xlu0 %v2410, 8
        %v2473 = vpop.permute.xlu0 %2472
        %2474 = vrot.lane.b32.xlu0 %v2413, 8
        %v2475 = vpop.permute.xlu0 %2474
        %2476 = vrot.lane.b32.xlu0 %v2418, 8
        %v2477 = vpop.permute.xlu0 %2476
        %2478 = vrot.lane.b32.xlu0 %v2421, 8
        %v2479 = vpop.permute.xlu0 %2478
        %2480 = vrot.lane.b32.xlu0 %v2426, 8
        %v2481 = vpop.permute.xlu0 %2480
        %2482 = vrot.lane.b32.xlu0 %v2429, 8
        %v2483 = vpop.permute.xlu0 %2482
        %2484 = vrot.lane.b32.xlu0 %v2434, 8
        %v2485 = vpop.permute.xlu0 %2484
        %2486 = vrot.lane.b32.xlu0 %v2437, 8
        %v2487 = vpop.permute.xlu0 %2486
        %v2504 = vadd.f32 %v2255, %v2457
        %v2505 = vadd.f32 %v2256, %v2459
        %v2506 = vadd.f32 %v2257, %v2461
        %v2507 = vadd.f32 %v2258, %v2463
        %v2508 = vadd.f32 %v2259, %v2465
        %v2509 = vadd.f32 %v2260, %v2467
        %v2510 = vadd.f32 %v2261, %v2469
        %v2511 = vadd.f32 %v2262, %v2471
        %v2512 = vadd.f32 %v2263, %v2473
        %v2513 = vadd.f32 %v2264, %v2475
        %v2514 = vadd.f32 %v2265, %v2477
        %v2515 = vadd.f32 %v2266, %v2479
        %v2516 = vadd.f32 %v2267, %v2481
        %v2517 = vadd.f32 %v2268, %v2483
        %v2518 = vadd.f32 %v2269, %v2485
        %v2519 = vadd.f32 %v2270, %v2487
        %vm2520 = vcmask 130112
        %2521 = vst.msk [vmem:[#allocation4] sm:$0xff] %vm2520, %v2504
        %2522 = vst.msk [vmem:[#allocation4 + $0x8] sm:$0xff] %vm2520, %v2505
        %2523 = vst.msk [vmem:[#allocation4 + $0x10] sm:$0xff] %vm2520, %v2506
        %2524 = vst.msk [vmem:[#allocation4 + $0x18] sm:$0xff] %vm2520, %v2507
        %2525 = vst.msk [vmem:[#allocation4 + $0x20] sm:$0xff] %vm2520, %v2508
        %2526 = vst.msk [vmem:[#allocation4 + $0x28] sm:$0xff] %vm2520, %v2509
        %2527 = vst.msk [vmem:[#allocation4 + $0x30] sm:$0xff] %vm2520, %v2510
        %2528 = vst.msk [vmem:[#allocation4 + $0x38] sm:$0xff] %vm2520, %v2511
        %2529 = vst.msk [vmem:[#allocation4 + $0x40] sm:$0xff] %vm2520, %v2512
        %2530 = vst.msk [vmem:[#allocation4 + $0x48] sm:$0xff] %vm2520, %v2513
        %2531 = vst.msk [vmem:[#allocation4 + $0x50] sm:$0xff] %vm2520, %v2514
        %2532 = vst.msk [vmem:[#allocation4 + $0x58] sm:$0xff] %vm2520, %v2515
        %2533 = vst.msk [vmem:[#allocation4 + $0x60] sm:$0xff] %vm2520, %v2516
        %2534 = vst.msk [vmem:[#allocation4 + $0x68] sm:$0xff] %vm2520, %v2517
        %2535 = vst.msk [vmem:[#allocation4 + $0x70] sm:$0xff] %vm2520, %v2518
        %2536 = vst.msk [vmem:[#allocation4 + $0x78] sm:$0xff] %vm2520, %v2519
        %2537 = vst.msk [vmem:[#allocation2] sm:$0xff] %vm2126, %v1854
        %2538 = vst.msk [vmem:[#allocation2 + $0x8] sm:$0xff] %vm2126, %v1855
        %2539 = vst.msk [vmem:[#allocation2 + $0x10] sm:$0xff] %vm2126, %v1856
        %2540 = vst.msk [vmem:[#allocation2 + $0x18] sm:$0xff] %vm2126, %v1857
        %2541 = vst.msk [vmem:[#allocation2 + $0x20] sm:$0xff] %vm2126, %v1858
        %2542 = vst.msk [vmem:[#allocation2 + $0x28] sm:$0xff] %vm2126, %v1859
        %2543 = vst.msk [vmem:[#allocation2 + $0x30] sm:$0xff] %vm2126, %v1860
        %2544 = vst.msk [vmem:[#allocation2 + $0x38] sm:$0xff] %vm2126, %v1861
        %2545 = vst.msk [vmem:[#allocation2 + $0x40] sm:$0xff] %vm2126, %v1862
        %2546 = vst.msk [vmem:[#allocation2 + $0x48] sm:$0xff] %vm2126, %v1863
        %2547 = vst.msk [vmem:[#allocation2 + $0x50] sm:$0xff] %vm2126, %v1864
        %2548 = vst.msk [vmem:[#allocation2 + $0x58] sm:$0xff] %vm2126, %v1865
        %2549 = vst.msk [vmem:[#allocation2 + $0x60] sm:$0xff] %vm2126, %v1866
        %2550 = vst.msk [vmem:[#allocation2 + $0x68] sm:$0xff] %vm2126, %v1867
        %2551 = vst.msk [vmem:[#allocation2 + $0x70] sm:$0xff] %vm2126, %v1868
        %2552 = vst.msk [vmem:[#allocation2 + $0x78] sm:$0xff] %vm2126, %v1869
        %p2553 = scmp.eq.s32.totalorder %s27, 1
        // Predicated region
        $region98: #{han_forward.7} parent=84 // pred_check
          %p2554 = pneg %p2553
        $region99: #{han_forward.7} parent=84 // pred_check_branch
          %2556 = sbr.rel (%p2554) target = $region101
        $region100: #{han_forward.7} parent=84 // pred_region
          %v2557 = vld [vmem:[#allocation4] sm:$0xff]
          %v2558 = vld [vmem:[#allocation4 + $0x8] sm:$0xff]
          %v2559 = vld [vmem:[#allocation4 + $0x10] sm:$0xff]
          %v2560 = vld [vmem:[#allocation4 + $0x18] sm:$0xff]
          %v2561 = vld [vmem:[#allocation4 + $0x20] sm:$0xff]
          %v2562 = vld [vmem:[#allocation4 + $0x28] sm:$0xff]
          %v2563 = vld [vmem:[#allocation4 + $0x30] sm:$0xff]
          %v2564 = vld [vmem:[#allocation4 + $0x38] sm:$0xff]
          %v2565 = vld [vmem:[#allocation4 + $0x40] sm:$0xff]
          %v2566 = vld [vmem:[#allocation4 + $0x48] sm:$0xff]
          %v2567 = vld [vmem:[#allocation4 + $0x50] sm:$0xff]
          %v2568 = vld [vmem:[#allocation4 + $0x58] sm:$0xff]
          %v2569 = vld [vmem:[#allocation4 + $0x60] sm:$0xff]
          %v2570 = vld [vmem:[#allocation4 + $0x68] sm:$0xff]
          %v2571 = vld [vmem:[#allocation4 + $0x70] sm:$0xff]
          %v2572 = vld [vmem:[#allocation4 + $0x78] sm:$0xff]
          %v2573 = vld [vmem:[#allocation3] sm:$0xff]
          %v2574 = vld [vmem:[#allocation3 + $0x8] sm:$0xff]
          %v2575 = vld [vmem:[#allocation3 + $0x10] sm:$0xff]
          %v2576 = vld [vmem:[#allocation3 + $0x18] sm:$0xff]
          %v2577 = vld [vmem:[#allocation3 + $0x20] sm:$0xff]
          %v2578 = vld [vmem:[#allocation3 + $0x28] sm:$0xff]
          %v2579 = vld [vmem:[#allocation3 + $0x30] sm:$0xff]
          %v2580 = vld [vmem:[#allocation3 + $0x38] sm:$0xff]
          %v2581 = vld [vmem:[#allocation3 + $0x40] sm:$0xff]
          %v2582 = vld [vmem:[#allocation3 + $0x48] sm:$0xff]
          %v2583 = vld [vmem:[#allocation3 + $0x50] sm:$0xff]
          %v2584 = vld [vmem:[#allocation3 + $0x58] sm:$0xff]
          %v2585 = vld [vmem:[#allocation3 + $0x60] sm:$0xff]
          %v2586 = vld [vmem:[#allocation3 + $0x68] sm:$0xff]
          %v2587 = vld [vmem:[#allocation3 + $0x70] sm:$0xff]
          %v2588 = vld [vmem:[#allocation3 + $0x78] sm:$0xff]
          %v2589 = vrcp.pop %v2573
          %v2590 = vrcp.pop %v2574
          %v2591 = vrcp.pop %v2575
          %v2592 = vrcp.pop %v2576
          %v2593 = vrcp.pop %v2577
          %v2594 = vrcp.pop %v2578
          %v2595 = vrcp.pop %v2579
          %v2596 = vrcp.pop %v2580
          %v2597 = vrcp.pop %v2581
          %v2598 = vrcp.pop %v2582
          %v2599 = vrcp.pop %v2583
          %v2600 = vrcp.pop %v2584
          %v2601 = vrcp.pop %v2585
          %v2602 = vrcp.pop %v2586
          %v2603 = vrcp.pop %v2587
          %v2604 = vrcp.pop %v2588
          %2606 = vset.pattern.permute.xlu0 0
          %2607 = vperm.xlu0 %2606, %v2589
          %v2608 = vpop.permute.xlu0 %2607
          %2611 = vset.pattern.permute.xlu0 0
          %2612 = vperm.xlu0 %2611, %v2590
          %v2613 = vpop.permute.xlu0 %2612
          %2616 = vset.pattern.permute.xlu0 0
          %2617 = vperm.xlu0 %2616, %v2591
          %v2618 = vpop.permute.xlu0 %2617
          %2621 = vset.pattern.permute.xlu0 0
          %2622 = vperm.xlu0 %2621, %v2592
          %v2623 = vpop.permute.xlu0 %2622
          %2626 = vset.pattern.permute.xlu0 0
          %2627 = vperm.xlu0 %2626, %v2593
          %v2628 = vpop.permute.xlu0 %2627
          %2631 = vset.pattern.permute.xlu0 0
          %2632 = vperm.xlu0 %2631, %v2594
          %v2633 = vpop.permute.xlu0 %2632
          %2636 = vset.pattern.permute.xlu0 0
          %2637 = vperm.xlu0 %2636, %v2595
          %v2638 = vpop.permute.xlu0 %2637
          %2641 = vset.pattern.permute.xlu0 0
          %2642 = vperm.xlu0 %2641, %v2596
          %v2643 = vpop.permute.xlu0 %2642
          %2646 = vset.pattern.permute.xlu0 0
          %2647 = vperm.xlu0 %2646, %v2597
          %v2648 = vpop.permute.xlu0 %2647
          %2651 = vset.pattern.permute.xlu0 0
          %2652 = vperm.xlu0 %2651, %v2598
          %v2653 = vpop.permute.xlu0 %2652
          %2656 = vset.pattern.permute.xlu0 0
          %2657 = vperm.xlu0 %2656, %v2599
          %v2658 = vpop.permute.xlu0 %2657
          %2661 = vset.pattern.permute.xlu0 0
          %2662 = vperm.xlu0 %2661, %v2600
          %v2663 = vpop.permute.xlu0 %2662
          %2666 = vset.pattern.permute.xlu0 0
          %2667 = vperm.xlu0 %2666, %v2601
          %v2668 = vpop.permute.xlu0 %2667
          %2671 = vset.pattern.permute.xlu0 0
          %2672 = vperm.xlu0 %2671, %v2602
          %v2673 = vpop.permute.xlu0 %2672
          %2676 = vset.pattern.permute.xlu0 0
          %2677 = vperm.xlu0 %2676, %v2603
          %v2678 = vpop.permute.xlu0 %2677
          %2681 = vset.pattern.permute.xlu0 0
          %2682 = vperm.xlu0 %2681, %v2604
          %v2683 = vpop.permute.xlu0 %2682
          %v2685 = vmul.f32 %v2557, %v2608
          %v2686 = vmul.f32 %v2558, %v2613
          %v2687 = vmul.f32 %v2559, %v2618
          %v2688 = vmul.f32 %v2560, %v2623
          %v2689 = vmul.f32 %v2561, %v2628
          %v2690 = vmul.f32 %v2562, %v2633
          %v2691 = vmul.f32 %v2563, %v2638
          %v2692 = vmul.f32 %v2564, %v2643
          %v2693 = vmul.f32 %v2565, %v2648
          %v2694 = vmul.f32 %v2566, %v2653
          %v2695 = vmul.f32 %v2567, %v2658
          %v2696 = vmul.f32 %v2568, %v2663
          %v2697 = vmul.f32 %v2569, %v2668
          %v2698 = vmul.f32 %v2570, %v2673
          %v2699 = vmul.f32 %v2571, %v2678
          %v2700 = vmul.f32 %v2572, %v2683
          %2701 = vset.pattern.permute.xlu0 1
          %2702 = vperm.xlu0 %2701, %v2589
          %v2703 = vpop.permute.xlu0 %2702
          %2705 = vset.pattern.permute.xlu0 1
          %2706 = vperm.xlu0 %2705, %v2590
          %v2707 = vpop.permute.xlu0 %2706
          %2709 = vset.pattern.permute.xlu0 1
          %2710 = vperm.xlu0 %2709, %v2591
          %v2711 = vpop.permute.xlu0 %2710
          %2713 = vset.pattern.permute.xlu0 1
          %2714 = vperm.xlu0 %2713, %v2592
          %v2715 = vpop.permute.xlu0 %2714
          %2717 = vset.pattern.permute.xlu0 1
          %2718 = vperm.xlu0 %2717, %v2593
          %v2719 = vpop.permute.xlu0 %2718
          %2721 = vset.pattern.permute.xlu0 1
          %2722 = vperm.xlu0 %2721, %v2594
          %v2723 = vpop.permute.xlu0 %2722
          %2725 = vset.pattern.permute.xlu0 1
          %2726 = vperm.xlu0 %2725, %v2595
          %v2727 = vpop.permute.xlu0 %2726
          %2729 = vset.pattern.permute.xlu0 1
          %2730 = vperm.xlu0 %2729, %v2596
          %v2731 = vpop.permute.xlu0 %2730
          %2733 = vset.pattern.permute.xlu0 1
          %2734 = vperm.xlu0 %2733, %v2597
          %v2735 = vpop.permute.xlu0 %2734
          %2737 = vset.pattern.permute.xlu0 1
          %2738 = vperm.xlu0 %2737, %v2598
          %v2739 = vpop.permute.xlu0 %2738
          %2741 = vset.pattern.permute.xlu0 1
          %2742 = vperm.xlu0 %2741, %v2599
          %v2743 = vpop.permute.xlu0 %2742
          %2745 = vset.pattern.permute.xlu0 1
          %2746 = vperm.xlu0 %2745, %v2600
          %v2747 = vpop.permute.xlu0 %2746
          %2749 = vset.pattern.permute.xlu0 1
          %2750 = vperm.xlu0 %2749, %v2601
          %v2751 = vpop.permute.xlu0 %2750
          %2753 = vset.pattern.permute.xlu0 1
          %2754 = vperm.xlu0 %2753, %v2602
          %v2755 = vpop.permute.xlu0 %2754
          %2757 = vset.pattern.permute.xlu0 1
          %2758 = vperm.xlu0 %2757, %v2603
          %v2759 = vpop.permute.xlu0 %2758
          %2761 = vset.pattern.permute.xlu0 1
          %2762 = vperm.xlu0 %2761, %v2604
          %v2763 = vpop.permute.xlu0 %2762
          %v2765 = vmul.f32 %v2557, %v2703
          %v2766 = vmul.f32 %v2558, %v2707
          %v2767 = vmul.f32 %v2559, %v2711
          %v2768 = vmul.f32 %v2560, %v2715
          %v2769 = vmul.f32 %v2561, %v2719
          %v2770 = vmul.f32 %v2562, %v2723
          %v2771 = vmul.f32 %v2563, %v2727
          %v2772 = vmul.f32 %v2564, %v2731
          %v2773 = vmul.f32 %v2565, %v2735
          %v2774 = vmul.f32 %v2566, %v2739
          %v2775 = vmul.f32 %v2567, %v2743
          %v2776 = vmul.f32 %v2568, %v2747
          %v2777 = vmul.f32 %v2569, %v2751
          %v2778 = vmul.f32 %v2570, %v2755
          %v2779 = vmul.f32 %v2571, %v2759
          %v2780 = vmul.f32 %v2572, %v2763
          %v2781 = vsel %vm1625, %v2685, %v2765
          %v2782 = vsel %vm1625, %v2686, %v2766
          %v2783 = vsel %vm1625, %v2687, %v2767
          %v2784 = vsel %vm1625, %v2688, %v2768
          %v2785 = vsel %vm1625, %v2689, %v2769
          %v2786 = vsel %vm1625, %v2690, %v2770
          %v2787 = vsel %vm1625, %v2691, %v2771
          %v2788 = vsel %vm1625, %v2692, %v2772
          %v2789 = vsel %vm1625, %v2693, %v2773
          %v2790 = vsel %vm1625, %v2694, %v2774
          %v2791 = vsel %vm1625, %v2695, %v2775
          %v2792 = vsel %vm1625, %v2696, %v2776
          %v2793 = vsel %vm1625, %v2697, %v2777
          %v2794 = vsel %vm1625, %v2698, %v2778
          %v2795 = vsel %vm1625, %v2699, %v2779
          %v2796 = vsel %vm1625, %v2700, %v2780
          %vm2797 = vcmask 130048
          %v2798 = vsel %vm2797, %v2781, 0.0
          %v2799 = vsel %vm2797, %v2782, 0.0
          %v2800 = vsel %vm2797, %v2783, 0.0
          %v2801 = vsel %vm2797, %v2784, 0.0
          %v2802 = vsel %vm2797, %v2785, 0.0
          %v2803 = vsel %vm2797, %v2786, 0.0
          %v2804 = vsel %vm2797, %v2787, 0.0
          %v2805 = vsel %vm2797, %v2788, 0.0
          %v2806 = vsel %vm2797, %v2789, 0.0
          %v2807 = vsel %vm2797, %v2790, 0.0
          %v2808 = vsel %vm2797, %v2791, 0.0
          %v2809 = vsel %vm2797, %v2792, 0.0
          %v2810 = vsel %vm2797, %v2793, 0.0
          %v2811 = vsel %vm2797, %v2794, 0.0
          %v2812 = vsel %vm2797, %v2795, 0.0
          %v2813 = vsel %vm2797, %v2796, 0.0
          %v2814 = vld [vmem:[%s528] sm:$0x1]
          %v2816 = vlaneseq
          %v2817 = vshrl.u32 %v2816, 7
          %v2818 = vsub.s32 0, %v2817
          %v2819 = vrot.slane %v2814, %v2818
          %v2821 = vadd.f32 %v2798, %v2819
          %v2822 = vadd.f32 %v2799, %v2819
          %v2823 = vadd.f32 %v2800, %v2819
          %v2824 = vadd.f32 %v2801, %v2819
          %v2825 = vadd.f32 %v2802, %v2819
          %v2826 = vadd.f32 %v2803, %v2819
          %v2827 = vadd.f32 %v2804, %v2819
          %v2828 = vadd.f32 %v2805, %v2819
          %v2829 = vadd.f32 %v2806, %v2819
          %v2830 = vadd.f32 %v2807, %v2819
          %v2831 = vadd.f32 %v2808, %v2819
          %v2832 = vadd.f32 %v2809, %v2819
          %v2833 = vadd.f32 %v2810, %v2819
          %v2834 = vadd.f32 %v2811, %v2819
          %v2835 = vadd.f32 %v2812, %v2819
          %v2836 = vadd.f32 %v2813, %v2819
          %vm2837 = vcmp.gt.f32.partialorder %v2821, 0.0
          %vm2838 = vcmp.gt.f32.partialorder %v2822, 0.0
          %vm2839 = vcmp.gt.f32.partialorder %v2823, 0.0
          %vm2840 = vcmp.gt.f32.partialorder %v2824, 0.0
          %vm2841 = vcmp.gt.f32.partialorder %v2825, 0.0
          %vm2842 = vcmp.gt.f32.partialorder %v2826, 0.0
          %vm2843 = vcmp.gt.f32.partialorder %v2827, 0.0
          %vm2844 = vcmp.gt.f32.partialorder %v2828, 0.0
          %vm2845 = vcmp.gt.f32.partialorder %v2829, 0.0
          %vm2846 = vcmp.gt.f32.partialorder %v2830, 0.0
          %vm2847 = vcmp.gt.f32.partialorder %v2831, 0.0
          %vm2848 = vcmp.gt.f32.partialorder %v2832, 0.0
          %vm2849 = vcmp.gt.f32.partialorder %v2833, 0.0
          %vm2850 = vcmp.gt.f32.partialorder %v2834, 0.0
          %vm2851 = vcmp.gt.f32.partialorder %v2835, 0.0
          %vm2852 = vcmp.gt.f32.partialorder %v2836, 0.0
          %v2853 = vmul.f32 %v2821, 1.442695
          %v2854 = vpow.pop %v2853
          %v2855 = vmul.f32 %v2822, 1.442695
          %v2856 = vpow.pop %v2855
          %v2857 = vmul.f32 %v2823, 1.442695
          %v2858 = vpow.pop %v2857
          %v2859 = vmul.f32 %v2824, 1.442695
          %v2860 = vpow.pop %v2859
          %v2861 = vmul.f32 %v2825, 1.442695
          %v2862 = vpow.pop %v2861
          %v2863 = vmul.f32 %v2826, 1.442695
          %v2864 = vpow.pop %v2863
          %v2865 = vmul.f32 %v2827, 1.442695
          %v2866 = vpow.pop %v2865
          %v2867 = vmul.f32 %v2828, 1.442695
          %v2868 = vpow.pop %v2867
          %v2869 = vmul.f32 %v2829, 1.442695
          %v2870 = vpow.pop %v2869
          %v2871 = vmul.f32 %v2830, 1.442695
          %v2872 = vpow.pop %v2871
          %v2873 = vmul.f32 %v2831, 1.442695
          %v2874 = vpow.pop %v2873
          %v2875 = vmul.f32 %v2832, 1.442695
          %v2876 = vpow.pop %v2875
          %v2877 = vmul.f32 %v2833, 1.442695
          %v2878 = vpow.pop %v2877
          %v2879 = vmul.f32 %v2834, 1.442695
          %v2880 = vpow.pop %v2879
          %v2881 = vmul.f32 %v2835, 1.442695
          %v2882 = vpow.pop %v2881
          %v2883 = vmul.f32 %v2836, 1.442695
          %v2884 = vpow.pop %v2883
          %v2885 = vsub.f32 %v2854, 1.0
          %v2886 = vsub.f32 %v2856, 1.0
          %v2887 = vsub.f32 %v2858, 1.0
          %v2888 = vsub.f32 %v2860, 1.0
          %v2889 = vsub.f32 %v2862, 1.0
          %v2890 = vsub.f32 %v2864, 1.0
          %v2891 = vsub.f32 %v2866, 1.0
          %v2892 = vsub.f32 %v2868, 1.0
          %v2893 = vsub.f32 %v2870, 1.0
          %v2894 = vsub.f32 %v2872, 1.0
          %v2895 = vsub.f32 %v2874, 1.0
          %v2896 = vsub.f32 %v2876, 1.0
          %v2897 = vsub.f32 %v2878, 1.0
          %v2898 = vsub.f32 %v2880, 1.0
          %v2899 = vsub.f32 %v2882, 1.0
          %v2900 = vsub.f32 %v2884, 1.0
          %v2901 = vsel %vm2837, %v2821, %v2885
          %v2902 = vsel %vm2838, %v2822, %v2886
          %v2903 = vsel %vm2839, %v2823, %v2887
          %v2904 = vsel %vm2840, %v2824, %v2888
          %v2905 = vsel %vm2841, %v2825, %v2889
          %v2906 = vsel %vm2842, %v2826, %v2890
          %v2907 = vsel %vm2843, %v2827, %v2891
          %v2908 = vsel %vm2844, %v2828, %v2892
          %v2909 = vsel %vm2845, %v2829, %v2893
          %v2910 = vsel %vm2846, %v2830, %v2894
          %v2911 = vsel %vm2847, %v2831, %v2895
          %v2912 = vsel %vm2848, %v2832, %v2896
          %v2913 = vsel %vm2849, %v2833, %v2897
          %v2914 = vsel %vm2850, %v2834, %v2898
          %v2915 = vsel %vm2851, %v2835, %v2899
          %v2916 = vsel %vm2852, %v2836, %v2900
          %2917 = vst [vmem:[%s537] sm:$0xff] %v2901
          %2918 = vst [vmem:[%s537 + $0x8] sm:$0xff] %v2902
          %2919 = vst [vmem:[%s537 + $0x10] sm:$0xff] %v2903
          %2920 = vst [vmem:[%s537 + $0x18] sm:$0xff] %v2904
          %2921 = vst [vmem:[%s537 + $0x20] sm:$0xff] %v2905
          %2922 = vst [vmem:[%s537 + $0x28] sm:$0xff] %v2906
          %2923 = vst [vmem:[%s537 + $0x30] sm:$0xff] %v2907
          %2924 = vst [vmem:[%s537 + $0x38] sm:$0xff] %v2908
          %2925 = vst [vmem:[%s537 + $0x40] sm:$0xff] %v2909
          %2926 = vst [vmem:[%s537 + $0x48] sm:$0xff] %v2910
          %2927 = vst [vmem:[%s537 + $0x50] sm:$0xff] %v2911
          %2928 = vst [vmem:[%s537 + $0x58] sm:$0xff] %v2912
          %2929 = vst [vmem:[%s537 + $0x60] sm:$0xff] %v2913
          %2930 = vst [vmem:[%s537 + $0x68] sm:$0xff] %v2914
          %2931 = vst [vmem:[%s537 + $0x70] sm:$0xff] %v2915
          %2932 = vst [vmem:[%s537 + $0x78] sm:$0xff] %v2916
          %v2933 = vpack.c.bf16 %v2902, %v2901
          %v2934 = vpack.c.bf16 %v2904, %v2903
          %v2935 = vpack.c.bf16 %v2906, %v2905
          %v2936 = vpack.c.bf16 %v2908, %v2907
          %v2937 = vpack.c.bf16 %v2910, %v2909
          %v2938 = vpack.c.bf16 %v2912, %v2911
          %v2939 = vpack.c.bf16 %v2914, %v2913
          %v2940 = vpack.c.bf16 %v2916, %v2915
          %v2941 = vld [vmem:[%s4] sm:$0xf]
          %v2942 = vld [vmem:[%s4 + $0x4] sm:$0xf]
          %v2943 = vld [vmem:[%s4 + $0x8] sm:$0xf]
          %v2944 = vld [vmem:[%s4 + $0xc] sm:$0xf]
          %v2945 = vld [vmem:[%s4 + $0x10] sm:$0xf]
          %v2946 = vld [vmem:[%s4 + $0x14] sm:$0xf]
          %v2947 = vld [vmem:[%s4 + $0x18] sm:$0xf]
          %v2948 = vld [vmem:[%s4 + $0x1c] sm:$0xf]
          %v2949 = vld [vmem:[%s4 + $0x20] sm:$0xf]
          %v2950 = vld [vmem:[%s4 + $0x24] sm:$0xf]
          %v2951 = vld [vmem:[%s4 + $0x28] sm:$0xf]
          %v2952 = vld [vmem:[%s4 + $0x2c] sm:$0xf]
          %v2953 = vld [vmem:[%s4 + $0x30] sm:$0xf]
          %v2954 = vld [vmem:[%s4 + $0x34] sm:$0xf]
          %v2955 = vld [vmem:[%s4 + $0x38] sm:$0xf]
          %v2956 = vld [vmem:[%s4 + $0x3c] sm:$0xf]
          %v2957 = vld [vmem:[%s5] sm:$0x1]
          %v2959 = vlaneseq
          %v2960 = vshrl.u32 %v2959, 7
          %v2961 = vsub.s32 0, %v2960
          %v2962 = vrot.slane %v2957, %v2961
          %v2980 = vunpack.c.l.b16 %v2941
          %v2981 = vunpack.c.l.b16 %v2942
          %v2982 = vunpack.c.l.b16 %v2943
          %v2983 = vunpack.c.l.b16 %v2944
          %v2984 = vunpack.c.l.b16 %v2945
          %v2985 = vunpack.c.l.b16 %v2946
          %v2986 = vunpack.c.l.b16 %v2947
          %v2987 = vunpack.c.l.b16 %v2948
          %v2988 = vunpack.c.l.b16 %v2949
          %v2989 = vunpack.c.l.b16 %v2950
          %v2990 = vunpack.c.l.b16 %v2951
          %v2991 = vunpack.c.l.b16 %v2952
          %v2992 = vunpack.c.l.b16 %v2953
          %v2993 = vunpack.c.l.b16 %v2954
          %v2994 = vunpack.c.l.b16 %v2955
          %v2995 = vunpack.c.l.b16 %v2956
          %v2996 = vpack.c.b16 %v2981, %v2980
          %v2997 = vpack.c.b16 %v2983, %v2982
          %v2998 = vpack.c.b16 %v2985, %v2984
          %v2999 = vpack.c.b16 %v2987, %v2986
          %v3000 = vpack.c.b16 %v2989, %v2988
          %v3001 = vpack.c.b16 %v2991, %v2990
          %v3002 = vpack.c.b16 %v2993, %v2992
          %v3003 = vpack.c.b16 %v2995, %v2994
          %3012 = vmatprep.subr.bf16.mxu0 0
          %3013 = vmatpush1.bf16.msra.mxu0 %v2996
          %3014 = vmatprep.subr.bf16.mxu0 0
          %3015 = vmatpush1.bf16.msra.mxu0 %v2997
          %3016 = vmatprep.subr.bf16.mxu0 0
          %3017 = vmatpush1.bf16.msra.mxu0 %v2998
          %3018 = vmatprep.subr.bf16.mxu0 0
          %3019 = vmatpush1.bf16.msra.mxu0 %v2999
          %3020 = vmatprep.subr.bf16.mxu0 0
          %3021 = vmatpush1.bf16.msra.mxu0 %v3000
          %3022 = vmatprep.subr.bf16.mxu0 0
          %3023 = vmatpush1.bf16.msra.mxu0 %v3001
          %3024 = vmatprep.subr.bf16.mxu0 0
          %3025 = vmatpush1.bf16.msra.mxu0 %v3002
          %3026 = vmatprep.subr.bf16.mxu0 0
          %3027 = vmatpush1.bf16.msra.mxu0 %v3003
          %3028 = vmatprep.subr.bf16.mxu0 0
          %3029 = vmatpush1.bf16.msra.mxu0 0
          %3030 = vmatprep.subr.bf16.mxu0 0
          %3031 = vmatpush1.bf16.msra.mxu0 0
          %3032 = vmatprep.subr.bf16.mxu0 0
          %3033 = vmatpush1.bf16.msra.mxu0 0
          %3034 = vmatprep.subr.bf16.mxu0 0
          %3035 = vmatpush1.bf16.msra.mxu0 0
          %3036 = vmatprep.subr.bf16.mxu0 0
          %3037 = vmatpush1.bf16.msra.mxu0 0
          %3038 = vmatprep.subr.bf16.mxu0 0
          %3039 = vmatpush1.bf16.msra.mxu0 0
          %3040 = vmatprep.subr.bf16.mxu0 0
          %3041 = vmatpush1.bf16.msra.mxu0 0
          %3042 = vmatprep.subr.bf16.mxu0 0
          %3043 = vmatpush1.bf16.msra.mxu0 0
          %3044 = vmatprep.mubr.bf16.mxu0 0
          %3045 = vmatmul.mubr.bf16.gmra.mrb[0].mxu0 %v2933
          %v3046 = vpop.f32.mrb[0].mxu0
          %v3047 = vadd.f32 %v2962, %v3046
          %v3048 = vpop.f32.mrb[0].mxu0
          %v3049 = vpop.f32.mrb[0].mxu0
          %v3050 = vadd.f32 %v2962, %v3049
          %v3051 = vpop.f32.mrb[0].mxu0
          %3052 = vmatprep.mubr.bf16.mxu0 0
          %3053 = vmatmul.mubr.bf16.gmra.mrb[0].mxu0 %v2934
          %v3054 = vpop.f32.mrb[0].mxu0
          %v3055 = vadd.f32 %v2962, %v3054
          %v3056 = vpop.f32.mrb[0].mxu0
          %v3057 = vpop.f32.mrb[0].mxu0
          %v3058 = vadd.f32 %v2962, %v3057
          %v3059 = vpop.f32.mrb[0].mxu0
          %3060 = vmatprep.mubr.bf16.mxu0 0
          %3061 = vmatmul.mubr.bf16.gmra.mrb[0].mxu0 %v2935
          %v3062 = vpop.f32.mrb[0].mxu0
          %v3063 = vadd.f32 %v2962, %v3062
          %v3064 = vpop.f32.mrb[0].mxu0
          %v3065 = vpop.f32.mrb[0].mxu0
          %v3066 = vadd.f32 %v2962, %v3065
          %v3067 = vpop.f32.mrb[0].mxu0
          %3068 = vmatprep.mubr.bf16.mxu0 0
          %3069 = vmatmul.mubr.bf16.gmra.mrb[0].mxu0 %v2936
          %v3070 = vpop.f32.mrb[0].mxu0
          %v3071 = vadd.f32 %v2962, %v3070
          %v3072 = vpop.f32.mrb[0].mxu0
          %v3073 = vpop.f32.mrb[0].mxu0
          %v3074 = vadd.f32 %v2962, %v3073
          %v3075 = vpop.f32.mrb[0].mxu0
          %3076 = vmatprep.mubr.bf16.mxu0 0
          %3077 = vmatmul.mubr.bf16.gmra.mrb[0].mxu0 %v2937
          %v3078 = vpop.f32.mrb[0].mxu0
          %v3079 = vadd.f32 %v2962, %v3078
          %v3080 = vpop.f32.mrb[0].mxu0
          %v3081 = vpop.f32.mrb[0].mxu0
          %v3082 = vadd.f32 %v2962, %v3081
          %v3083 = vpop.f32.mrb[0].mxu0
          %3084 = vmatprep.mubr.bf16.mxu0 0
          %3085 = vmatmul.mubr.bf16.gmra.mrb[0].mxu0 %v2938
          %v3086 = vpop.f32.mrb[0].mxu0
          %v3087 = vadd.f32 %v2962, %v3086
          %v3088 = vpop.f32.mrb[0].mxu0
          %v3089 = vpop.f32.mrb[0].mxu0
          %v3090 = vadd.f32 %v2962, %v3089
          %v3091 = vpop.f32.mrb[0].mxu0
          %3092 = vmatprep.mubr.bf16.mxu0 0
          %3093 = vmatmul.mubr.bf16.gmra.mrb[0].mxu0 %v2939
          %v3094 = vpop.f32.mrb[0].mxu0
          %v3095 = vadd.f32 %v2962, %v3094
          %v3096 = vpop.f32.mrb[0].mxu0
          %v3097 = vpop.f32.mrb[0].mxu0
          %v3098 = vadd.f32 %v2962, %v3097
          %v3099 = vpop.f32.mrb[0].mxu0
          %3100 = vmatprep.mubr.bf16.mxu0 0
          %3101 = vmatmul.mubr.bf16.gmra.mrb[0].mxu0 %v2940
          %v3102 = vpop.f32.mrb[0].mxu0
          %v3103 = vadd.f32 %v2962, %v3102
          %v3104 = vpop.f32.mrb[0].mxu0
          %v3105 = vpop.f32.mrb[0].mxu0
          %v3106 = vadd.f32 %v2962, %v3105
          %v3107 = vpop.f32.mrb[0].mxu0
          %3108 = vdwg.mxu0
          %v3109 = vtanh.pop %v3047
          %v3110 = vtanh.pop %v3050
          %v3111 = vtanh.pop %v3055
          %v3112 = vtanh.pop %v3058
          %v3113 = vtanh.pop %v3063
          %v3114 = vtanh.pop %v3066
          %v3115 = vtanh.pop %v3071
          %v3116 = vtanh.pop %v3074
          %v3117 = vtanh.pop %v3079
          %v3118 = vtanh.pop %v3082
          %v3119 = vtanh.pop %v3087
          %v3120 = vtanh.pop %v3090
          %v3121 = vtanh.pop %v3095
          %v3122 = vtanh.pop %v3098
          %v3123 = vtanh.pop %v3103
          %v3124 = vtanh.pop %v3106
          %v3125 = vld [vmem:[%s6] sm:$0x1]
          %v3127 = vlaneseq
          %v3128 = vshrl.u32 %v3127, 7
          %v3129 = vsub.s32 0, %v3128
          %v3130 = vrot.slane %v3125, %v3129
          %v3132 = vmul.f32 %v3109, %v3130
          %v3133 = vmul.f32 %v3110, %v3130
          %v3134 = vmul.f32 %v3111, %v3130
          %v3135 = vmul.f32 %v3112, %v3130
          %v3136 = vmul.f32 %v3113, %v3130
          %v3137 = vmul.f32 %v3114, %v3130
          %v3138 = vmul.f32 %v3115, %v3130
          %v3139 = vmul.f32 %v3116, %v3130
          %v3140 = vmul.f32 %v3117, %v3130
          %v3141 = vmul.f32 %v3118, %v3130
          %v3142 = vmul.f32 %v3119, %v3130
          %v3143 = vmul.f32 %v3120, %v3130
          %v3144 = vmul.f32 %v3121, %v3130
          %v3145 = vmul.f32 %v3122, %v3130
          %v3146 = vmul.f32 %v3123, %v3130
          %v3147 = vmul.f32 %v3124, %v3130
          %v3148 = vadd.f32 %v3132, %v3133
          %v3149 = vadd.f32 %v3148, %v3134
          %v3150 = vadd.f32 %v3149, %v3135
          %v3151 = vadd.f32 %v3150, %v3136
          %v3152 = vadd.f32 %v3151, %v3137
          %v3153 = vadd.f32 %v3152, %v3138
          %v3154 = vadd.f32 %v3153, %v3139
          %v3155 = vadd.f32 %v3154, %v3140
          %v3156 = vadd.f32 %v3155, %v3141
          %v3157 = vadd.f32 %v3156, %v3142
          %v3158 = vadd.f32 %v3157, %v3143
          %v3159 = vadd.f32 %v3158, %v3144
          %v3160 = vadd.f32 %v3159, %v3145
          %v3161 = vadd.f32 %v3160, %v3146
          %v3162 = vadd.f32 %v3161, %v3147
          %v3163 = vrot.slane %v3162, 4
          %v3164 = vadd.f32 %v3162, %v3163
          %v3165 = vrot.slane %v3164, 2
          %v3166 = vadd.f32 %v3164, %v3165
          %v3167 = vrot.slane %v3166, 1
          %v3168 = vadd.f32 %v3166, %v3167
          %v3169 = vld [vmem:[#allocation5] sm:$0x1]
          %v3170 = vadd.f32 %v3169, %v3168
          %3171 = vst [vmem:[#allocation5] sm:$0x1] %v3170
          %p3172 = scmp.eq.s32.totalorder %s26, 1
          // Predicated region
          $region102: #{han_forward.7} parent=100 // pred_check
            %p3173 = pneg %p3172
          $region103: #{han_forward.7} parent=100 // pred_check_branch
            %3175 = sbr.rel (%p3173) target = $region105
          $region104: #{han_forward.7} parent=100 // pred_region
            %v3176 = vld [vmem:[#allocation5] sm:$0x1]
            %3177 = vst [vmem:[%s541] sm:$0x1] %v3176
          $region105: #{han_forward.7} parent=100 // pred_fallthru
            _
        $region101: #{han_forward.7} parent=84 // pred_fallthru
          _
        %s3178 = smul.u32 16, %s26
        %p3179 = scmp.lt.s32.totalorder %s25, 2
        %s3180 = scalar_select %p3179, %s25, 2
        %p3181 = scmp.lt.s32.totalorder %s3178, 31
        %s3182 = scalar_select %p3181, %s3178, 31
        %s3183 = smul.addr %s3180, 32
        %s3184 = sadd.s32 %s3182, %s3183
        %s3185 = smul.addr %s3184, 8
        %s3186 = scalar_lea.vmem %s7, %s3185
        %p3187 = scmp.lt.s32.totalorder %s25, 2
        %s3188 = scalar_select %p3187, %s25, 2
        %s3189 = scalar_lea.vmem %s8, %s3188
        // Predicated region
        $region106: #{han_forward.7} parent=84 // pred_check
          %p3190 = pneg %p234
        $region107: #{han_forward.7} parent=84 // pred_check_branch
          %3192 = sbr.rel (%p3190) target = $region109
        $region108: #{han_forward.7} parent=84 // pred_region
          %s3193 = smul.u32 16, %s26
        $region109: #{han_forward.7} parent=84 // pred_fallthru
          _
        // Predicated region
        $region110: #{han_forward.7} parent=84 // pred_check
          %p3194 = pneg %p260
        $region111: #{han_forward.7} parent=84 // pred_check_branch
          %3196 = sbr.rel (%p3194) target = $region113
        $region112: #{han_forward.7} parent=84 // pred_region
          _
        $region113: #{han_forward.7} parent=84 // pred_fallthru
          _
      $region85: #{han_forward.7} parent=5 // pred_fallthru
        _
      %p3197 = scmp.le.s32.totalorder 2, %s15
      // Predicated region
      $region114: #{han_forward.7} parent=5 // pred_check
        %p3198 = pneg %p3197
      $region115: #{han_forward.7} parent=5 // pred_check_branch
        %3200 = sbr.rel (%p3198) target = $region117
      $region116: #{han_forward.7} parent=5 // pred_region
        %s3201 = ssub.s32 %s15, 2
        // Predicated region
        $region118: #{han_forward.7} parent=116 // pred_check
          %p3202 = pneg %p240
        $region119: #{han_forward.7} parent=116 // pred_check_branch
          %3204 = sbr.rel (%p3202) target = $region121
        $region120: #{han_forward.7} parent=116 // pred_region
          %s3205 = smul.u32 16, %s29
          %p3206 = scmp.lt.s32.totalorder %s28, 2
          %s3207 = scalar_select %p3206, %s28, 2
          %p3208 = scmp.lt.s32.totalorder %s3205, 31
          %s3209 = scalar_select %p3208, %s3205, 31
          %s3210 = smul.addr %s3207, 32
          %s3211 = sadd.s32 %s3209, %s3210
          %s3212 = smul.addr %s3211, 8
          %s3213 = scalar_lea.vmem %s7, %s3212
        $region121: #{han_forward.7} parent=116 // pred_fallthru
          _
        // Predicated region
        $region122: #{han_forward.7} parent=116 // pred_check
          %p3214 = pneg %p266
        $region123: #{han_forward.7} parent=116 // pred_check_branch
          %3216 = sbr.rel (%p3214) target = $region125
        $region124: #{han_forward.7} parent=116 // pred_region
          %p3217 = scmp.lt.s32.totalorder %s28, 2
          %s3218 = scalar_select %p3217, %s28, 2
          %s3219 = scalar_lea.vmem %s8, %s3218
        $region125: #{han_forward.7} parent=116 // pred_fallthru
          _
      $region117: #{han_forward.7} parent=5 // pred_fallthru
        _
    $region6: #{han_forward.7} parent=1 // loop_footer
      %s19 = sadd.s32 1, %s15
    $region7: #{han_forward.7} parent=1 // loop_footer_branch
      %14 = sbr.rel target = $region3
    $region8: #{han_forward.7} parent=1 // loop_exit
      _

</llo_original>
